<compile_context>
chip_gen: v6e
topology: v6e:2x2x1
jax: 0.10.0
libtpu: 0.0.40
codegen_flags: <defaults>
</compile_context>

<pallas_src>
import numpy as np
import jax
import jax.numpy as jnp
from jax.experimental import pallas as pl
from jax.experimental.pallas import tpu as pltpu


# ----------------------------------------------------------------------------
# small shared helpers
# ----------------------------------------------------------------------------
def _layer_norm(z, g, b, eps=1e-5):
    mu = jnp.mean(z, axis=-1, keepdims=True)
    var = jnp.mean(jnp.square(z - mu), axis=-1, keepdims=True)
    return (z - mu) * jax.lax.rsqrt(var + eps) * g + b


def _linear_interp(x, tgt_len):
    """F.interpolate(mode='linear', align_corners=False) as an O(L) two-tap
    gather + lerp (no dense [tgt, src] matrix)."""
    B, L, C = x.shape
    if tgt_len == L:
        return x
    scale = L / tgt_len
    pos = (jnp.arange(tgt_len, dtype=jnp.float32) + 0.5) * scale - 0.5
    pos = jnp.maximum(pos, 0.0)
    i0 = jnp.clip(jnp.floor(pos).astype(jnp.int32), 0, L - 1)
    i1 = jnp.minimum(i0 + 1, L - 1)
    frac = pos - i0.astype(jnp.float32)
    x0 = jnp.take(x, i0, axis=1)
    x1 = jnp.take(x, i1, axis=1)
    return x0 * (1.0 - frac)[None, :, None] + x1 * frac[None, :, None]


def _pick_bt(B, Lc, target_rows=256):
    """Largest divisor Bt of B with Bt*Lc sublane-aligned and near the MXU
    height.  Falls back to the whole batch (full-dim block is always legal)."""
    divisors = [d for d in range(1, B + 1) if B % d == 0]
    aligned = [d for d in divisors if (d * Lc) % 8 == 0]
    if not aligned:
        return B
    fitting = [d for d in aligned if d * Lc <= max(target_rows, Lc)]
    return max(fitting) if fitting else min(aligned)


# ----------------------------------------------------------------------------
# fused Pallas kernel
# ----------------------------------------------------------------------------
def _build_kernel(*, M, Lc, H, E, NL, K, Dout, fuse_head, out_cols):
    f32 = jnp.float32
    bf16 = jnp.bfloat16
    half = E // 2

    # ---- static polyphase tap plan (per layer, per tap j, per phase r) ------
    layer_plan = []
    needed_ds = {-1, 1}                      # ConvTranspose prev/next sources
    for layer in range(NL):
        dil = max(1, NL - layer)
        pcv = (K - 1) * dil // 2
        taps = []
        for j in range(K):
            off = j * dil - pcv
            qd = [((r + off) % E, (r + off) // E) for r in range(E)]
            taps.append(qd)
            for _, d in qd:
                if d != 0:
                    needed_ds.add(d)
        layer_plan.append(taps)
    needed_ds = sorted(needed_ds)

    def kernel(x_ref, w_in_ref, b_in_ref, w_up_ref, b_up_ref,
               dw_w_ref, dw_b_ref, pw_w_ref, pw_b_ref, ln_g_ref, ln_b_ref,
               w_out_ref, b_out_ref, og_ref, ob_ref, o_ref):
        # hoisted per-row "s within batch element" index and boundary masks
        s_idx = jax.lax.broadcasted_iota(jnp.int32, (M, H), 0) % Lc
        mask = {d: ((s_idx + d >= 0) & (s_idx + d < Lc)).astype(f32)
                for d in needed_ds}

        def shift_rows(a, d):
            # result[i, :] = a[i + d, :] when 0 <= (i % Lc) + d < Lc, else 0
            if d == 0:
                return a
            if abs(d) >= Lc:
                return jnp.zeros_like(a)
            rows, width = a.shape
            if d > 0:
                shifted = jnp.concatenate(
                    [a[d:, :], jnp.zeros((d, width), f32)], axis=0)
            else:
                shifted = jnp.concatenate(
                    [jnp.zeros((-d, width), f32), a[:rows + d, :]], axis=0)
            return shifted * mask[d]

        # ---- input projection + wide up-projection (M = Bt*Lc MXU rows) -----
        h = jnp.dot(x_ref[...].astype(bf16), w_in_ref[...],
                    preferred_element_type=f32) + b_in_ref[...]      # (M, H)
        y = jnp.dot(h.astype(bf16), w_up_ref[...],
                    preferred_element_type=f32)                      # (M, 2E*H)

        # ---- ConvTranspose1d combine, polyphase (t = s*E + r) ---------------
        b_up = jnp.broadcast_to(b_up_ref[...], (M, H))               # hoisted
        phases = []
        for r in range(E):
            k1 = r + half                       # tap fed by source pos s
            main = y[:, k1 * H:(k1 + 1) * H]
            if r < half:                        # second tap from source s-1
                k2 = k1 + E
                sec = shift_rows(y[:, k2 * H:(k2 + 1) * H], -1)
            else:                               # second tap from source s+1
                k2 = k1 - E
                sec = shift_rows(y[:, k2 * H:(k2 + 1) * H], +1)
            phases.append(main + sec + b_up)
        # phase-major stack: rows [r*M:(r+1)*M] hold residue r (M % 8 == 0,
        # so this concatenate is pure vreg stacking)
        v = jnp.concatenate(phases, axis=0)                          # (E*M, H)

        # ---- TemporalConvBlocks: depthwise dilated -> pointwise -> LN -> ReLU
        #      -> (+ residual); dropout is identity in eval mode. -------------
        for layer in range(NL):
            taps = layer_plan[layer]
            cache = {}

            def src(q, d, _v=v, _cache=cache):
                key = (q, d)
                if key not in _cache:
                    _cache[key] = shift_rows(_v[q * M:(q + 1) * M, :], d)
                return _cache[key]

            acc = None
            for j in range(K):
                stack_j = jnp.concatenate([src(q, d) for (q, d) in taps[j]],
                                          axis=0)                    # (E*M, H)
                w_j = jnp.broadcast_to(
                    dw_w_ref[layer * K + j:layer * K + j + 1, :], (E * M, H))
                term = w_j * stack_j
                acc = term if acc is None else acc + term
            z = acc + dw_b_ref[layer:layer + 1, :]
            z = jnp.dot(z.astype(bf16), pw_w_ref[layer],
                        preferred_element_type=f32) + pw_b_ref[layer:layer + 1, :]
            z = _layer_norm(z, ln_g_ref[layer:layer + 1, :],
                            ln_b_ref[layer:layer + 1, :])
            z = jnp.maximum(z, 0.0)
            v = z + v                                                # residual

        # ---- head + single lane-dense store ---------------------------------
        if fuse_head:
            o = jnp.dot(v.astype(bf16), w_out_ref[...],
                        preferred_element_type=f32) + b_out_ref[...]
            if Dout > 1:
                o = _layer_norm(o, og_ref[...], ob_ref[...])
            C, srcv = Dout, o
        else:
            C, srcv = H, v
        # column block r holds residue r -> HBM [B*Lc, E*C] reshapes to
        # [B, Lc*E, C] for free.
        blk = jnp.concatenate([srcv[r * M:(r + 1) * M, :] for r in range(E)],
                              axis=1)                                # (M, E*C)
        pad = out_cols - E * C
        if pad > 0:
            blk = jnp.concatenate([blk, jnp.zeros((M, pad), f32)], axis=1)
        o_ref[...] = blk.astype(o_ref.dtype)

    return kernel


def temporal_decoder_forward(x, params, cfg, tgt_len):
    B, Lc, Din = x.shape
    H = cfg["hidden_dim"]
    E = cfg["expansion_factor"]
    NL = cfg["num_layers"]
    K = cfg["kernel_size"]
    Dout = cfg["output_dim"]

    assert E >= 2 and E % 2 == 0, "supports even expansion_factor >= 2"
    pad_up = E // 2
    L_up = (Lc - 1) * E - 2 * pad_up + 2 * E
    assert L_up == Lc * E

    fuse_head = (tgt_len == L_up)  # standard config: no interpolation needed

    # batch folding: Bt batch elements per grid step -> M = Bt*Lc MXU rows.
    # (On v7x keep B // Bt >= 2 when B allows, so both TensorCores get work.)
    Bt = _pick_bt(B, Lc)
    M = Bt * Lc
    grid = (B // Bt,)

    bf16 = jnp.bfloat16
    w_in = params["w_in"].astype(bf16)                                   # (Din, H)
    # ConvTranspose taps [k, Cin, Cout] -> single wide (Cin, 2E*Cout) operand
    w_up_wide = jnp.transpose(params["w_up"], (1, 0, 2)).reshape(
        H, 2 * E * H).astype(bf16)
    pw_w = params["pw_w"].astype(bf16)                                   # (NL, H, H)
    w_out = params["w_out"].astype(bf16)                                 # (H, Dout)
    dw_w = params["dw_w"].reshape(NL * K, H)                             # f32 (VPU)

    if fuse_head:
        cols = E * Dout
        out_cols = 128 if cols < 128 else cols        # pad -> unmasked vst
        out_dtype = jnp.float32
    else:
        cols = E * H                                   # 128 lanes for H=32,E=4
        out_cols = cols
        out_dtype = jnp.bfloat16                       # halve feature writeback

    kernel = _build_kernel(M=M, Lc=Lc, H=H, E=E, NL=NL, K=K, Dout=Dout,
                           fuse_head=fuse_head, out_cols=out_cols)

    x2d = x.reshape(B * Lc, Din)                       # free reshape

    flops = (2 * B * Lc * Din * H + 2 * B * Lc * H * (2 * E * H)
             + NL * (2 * B * L_up * H * H + 2 * B * L_up * K * H)
             + (2 * B * L_up * H * Dout if fuse_head else 0))
    transcendentals = B * L_up * (NL + (1 if (fuse_head and Dout > 1) else 0))
    bytes_accessed = (int(x2d.size) * 4
                      + B * Lc * out_cols * (4 if fuse_head else 2)
                      + (int(w_in.size) + int(w_up_wide.size)
                         + int(pw_w.size) + int(w_out.size)) * 2
                      + (int(dw_w.size) + int(params["dw_b"].size)
                         + int(params["pw_b"].size) + int(params["ln_g"].size)
                         + int(params["ln_b"].size)) * 4)

    # NOTE(v7x): grid-invariant weight inputs could use
    # pipeline_mode=pl.Buffered(1) to halve their VMEM footprint.
    res = pl.pallas_call(
        kernel,
        out_shape=jax.ShapeDtypeStruct((B * Lc, out_cols), out_dtype),
        grid=grid,
        in_specs=[
            pl.BlockSpec((M, Din), lambda g: (g, 0)),
            pl.BlockSpec((Din, H), lambda g: (0, 0)),
            pl.BlockSpec((1, H), lambda g: (0, 0)),
            pl.BlockSpec((H, 2 * E * H), lambda g: (0, 0)),
            pl.BlockSpec((1, H), lambda g: (0, 0)),
            pl.BlockSpec((NL * K, H), lambda g: (0, 0)),
            pl.BlockSpec((NL, H), lambda g: (0, 0)),
            pl.BlockSpec((NL, H, H), lambda g: (0, 0, 0)),
            pl.BlockSpec((NL, H), lambda g: (0, 0)),
            pl.BlockSpec((NL, H), lambda g: (0, 0)),
            pl.BlockSpec((NL, H), lambda g: (0, 0)),
            pl.BlockSpec((H, Dout), lambda g: (0, 0)),
            pl.BlockSpec((1, Dout), lambda g: (0, 0)),
            pl.BlockSpec((1, Dout), lambda g: (0, 0)),
            pl.BlockSpec((1, Dout), lambda g: (0, 0)),
        ],
        out_specs=pl.BlockSpec((M, out_cols), lambda g: (g, 0)),
        compiler_params=pltpu.CompilerParams(
            dimension_semantics=("parallel",),        # batch blocks independent
            vmem_limit_bytes=32 * 1024 * 1024,        # safe on v5e/v6e/v7x
        ),
        cost_estimate=pl.CostEstimate(flops=int(flops),
                                      transcendentals=int(transcendentals),
                                      bytes_accessed=int(bytes_accessed)),
    )(x2d, w_in, params["b_in"], w_up_wide, params["b_up"], dw_w, params["dw_b"],
      pw_w, params["pw_b"], params["ln_g"], params["ln_b"],
      w_out, params["b_out"], params["out_g"], params["out_b"])

    if fuse_head:
        # (b*Lc + s, r*Dout + c) == (b, s*E + r, c): free row-major reshape.
        return res[:, :E * Dout].reshape(B, L_up, Dout)

    # general tgt_len: kernel emitted lane-dense bf16 [B*Lc, E*H] features.
    feat = res.astype(jnp.float32).reshape(B, L_up, H)   # free reshape
    feat = _linear_interp(feat, tgt_len)                 # O(L) two-tap lerp
    o = jnp.dot(feat.astype(bf16), w_out, preferred_element_type=jnp.float32)
    o = o + params["b_out"]
    if Dout > 1:
        o = _layer_norm(o, params["out_g"], params["out_b"])
    return o


# ----------------------------------------------------------------------------
# numpy reference (float64, mirroring the kernel's explicit bf16 rounding of
# MXU operands / the bf16 feature writeback so the comparison is tight while
# remaining an independent implementation of the module semantics).
# ----------------------------------------------------------------------------
def _bf16_np(a):
    return np.asarray(a, dtype=np.float32).astype(jnp.bfloat16).astype(np.float64)


def _interp_linear_np(v, tgt_len):
    B, L, C = v.shape
    if tgt_len == L:
        return v
    scale = L / tgt_len
    pos = (np.arange(tgt_len) + 0.5) * scale - 0.5
    pos = np.maximum(pos, 0.0)
    i0 = np.clip(np.floor(pos).astype(np.int64), 0, L - 1)
    i1 = np.minimum(i0 + 1, L - 1)
    frac = pos - i0
    return (v[:, i0, :] * (1.0 - frac)[None, :, None]
            + v[:, i1, :] * frac[None, :, None])


def reference_forward(x, p, cfg, tgt_len):
    f64 = lambda a: np.asarray(a, np.float64)
    x = f64(x)
    B, Lc, _ = x.shape
    H = cfg["hidden_dim"]; E = cfg["expansion_factor"]
    NL = cfg["num_layers"]; K = cfg["kernel_size"]; Dout = cfg["output_dim"]
    pad = E // 2
    L_up = (Lc - 1) * E - 2 * pad + 2 * E

    w_in = _bf16_np(p["w_in"]); w_up = _bf16_np(p["w_up"])
    pw_w = _bf16_np(p["pw_w"]); w_out = _bf16_np(p["w_out"])
    b_in = f64(p["b_in"]); b_up = f64(p["b_up"])
    dw_w = f64(p["dw_w"]); dw_b = f64(p["dw_b"]); pw_b = f64(p["pw_b"])
    ln_g = f64(p["ln_g"]); ln_b = f64(p["ln_b"])
    b_out = f64(p["b_out"]); out_g = f64(p["out_g"]); out_b = f64(p["out_b"])

    h = _bf16_np(x) @ w_in + b_in                        # input_proj
    hq = _bf16_np(h)
    u = np.zeros((B, L_up, H))
    for s in range(Lc):                                  # ConvTranspose1d
        for k in range(2 * E):
            t = s * E + k - pad
            if 0 <= t < L_up:
                u[:, t, :] += hq[:, s, :] @ w_up[k]
    u = u + b_up

    v = u
    for layer in range(NL):                              # TemporalConvBlocks
        dil = max(1, NL - layer)
        pd = (K - 1) * dil // 2
        xp = np.pad(v, ((0, 0), (pd, pd), (0, 0)))
        acc = np.zeros_like(v)
        for k in range(K):
            acc += xp[:, k * dil:k * dil + L_up, :] * dw_w[layer, k][None, None, :]
        z = _bf16_np(acc + dw_b[layer][None, None, :]) @ pw_w[layer]
        z = z + pw_b[layer][None, None, :]
        mu = z.mean(-1, keepdims=True)
        var = ((z - mu) ** 2).mean(-1, keepdims=True)
        z = (z - mu) / np.sqrt(var + 1e-5) * ln_g[layer] + ln_b[layer]
        z = np.maximum(z, 0.0)
        v = z + v

    if tgt_len != L_up:
        v = _bf16_np(v)                                  # mirror bf16 feature slab
        v = _interp_linear_np(v, tgt_len)
    o = _bf16_np(v) @ w_out + b_out                      # output_proj
    if Dout > 1:                                         # output LayerNorm
        mu = o.mean(-1, keepdims=True)
        var = ((o - mu) ** 2).mean(-1, keepdims=True)
        o = (o - mu) / np.sqrt(var + 1e-5) * out_g + out_b
    return o


# ----------------------------------------------------------------------------
# main
# ----------------------------------------------------------------------------
if __name__ == "__main__":
    B, Lc, Din = 2, 8, 16
    H, Dout = 32, 8
    NL, K, E = 4, 3, 4

    cfg = dict(input_dim=Din, output_dim=Dout, hidden_dim=H,
               num_layers=NL, kernel_size=K, expansion_factor=E)

    key = jax.random.PRNGKey(0)
    ks = jax.random.split(key, 16)

    def u_init(k, shape, fan_in):
        bound = 1.0 / np.sqrt(fan_in)
        return jax.random.uniform(k, shape, jnp.float32, -bound, bound)

    params = {
        "w_in": u_init(ks[0], (Din, H), Din),
        "b_in": u_init(ks[1], (1, H), Din),
        "w_up": u_init(ks[2], (2 * E, H, H), H * 2 * E),   # [tap, C_in, C_out]
        "b_up": u_init(ks[3], (1, H), H * 2 * E),
        "dw_w": u_init(ks[4], (NL, K, H), K),              # depthwise taps
        "dw_b": u_init(ks[5], (NL, H), K),
        "pw_w": u_init(ks[6], (NL, H, H), H),              # pointwise [C_in, C_out]
        "pw_b": u_init(ks[7], (NL, H), H),
        "ln_g": 1.0 + 0.05 * jax.random.normal(ks[8], (NL, H), jnp.float32),
        "ln_b": 0.05 * jax.random.normal(ks[9], (NL, H), jnp.float32),
        "w_out": u_init(ks[10], (H, Dout), H),
        "b_out": u_init(ks[11], (1, Dout), H),
        "out_g": 1.0 + 0.05 * jax.random.normal(ks[12], (1, Dout), jnp.float32),
        "out_b": 0.05 * jax.random.normal(ks[13], (1, Dout), jnp.float32),
    }
    x = jax.random.normal(ks[14], (B, Lc, Din), jnp.float32)

    # path 1: tgt_len == expansion_factor * compressed_len -> fully fused kernel
    tgt_len = E * Lc
    out = jax.block_until_ready(temporal_decoder_forward(x, params, cfg, tgt_len))
    assert out.shape == (B, tgt_len, Dout), out.shape
    ref = reference_forward(np.asarray(x), params, cfg, tgt_len)
    np.testing.assert_allclose(np.asarray(out, np.float64), ref,
                               rtol=2e-2, atol=2e-2)

    # path 2: tgt_len != upsampled length -> kernel features + O(L) lerp tail
    tgt_len2 = 40
    out2 = jax.block_until_ready(temporal_decoder_forward(x, params, cfg, tgt_len2))
    assert out2.shape == (B, tgt_len2, Dout), out2.shape
    ref2 = reference_forward(np.asarray(x), params, cfg, tgt_len2)
    np.testing.assert_allclose(np.asarray(out2, np.float64), ref2,
                               rtol=2e-2, atol=2e-2)

    print("KERNEL_OK")
</pallas_src>

<mosaic_0001>
module attributes {stable_mosaic.version = 11 : i64} {
  func.func @kernel(%arg0: i32, %arg1: memref<16x16xf32, #tpu.memory_space<vmem>>, %arg2: memref<16x32xbf16, #tpu.memory_space<vmem>>, %arg3: memref<1x32xf32, #tpu.memory_space<vmem>>, %arg4: memref<32x256xbf16, #tpu.memory_space<vmem>>, %arg5: memref<1x32xf32, #tpu.memory_space<vmem>>, %arg6: memref<12x32xf32, #tpu.memory_space<vmem>>, %arg7: memref<4x32xf32, #tpu.memory_space<vmem>>, %arg8: memref<4x32x32xbf16, #tpu.memory_space<vmem>>, %arg9: memref<4x32xf32, #tpu.memory_space<vmem>>, %arg10: memref<4x32xf32, #tpu.memory_space<vmem>>, %arg11: memref<4x32xf32, #tpu.memory_space<vmem>>, %arg12: memref<32x8xbf16, #tpu.memory_space<vmem>>, %arg13: memref<1x8xf32, #tpu.memory_space<vmem>>, %arg14: memref<1x8xf32, #tpu.memory_space<vmem>>, %arg15: memref<1x8xf32, #tpu.memory_space<vmem>>, %arg16: memref<16x128xf32, #tpu.memory_space<vmem>>) attributes {dimension_semantics = [#tpu.dimension_semantics<parallel>], iteration_bounds = array<i64: 1>, scalar_prefetch = 0 : i64, scratch_operands = 0 : i64, tpu.core_type = #tpu.core_type<tc>, window_params = [{transform_indices = @transform_0, window_bounds = array<i64: 16, 16>}, {pipeline_mode = #tpu.pipeline_mode<synchronous>, transform_indices = @transform_1, window_bounds = array<i64: 16, 32>}, {pipeline_mode = #tpu.pipeline_mode<synchronous>, transform_indices = @transform_2, window_bounds = array<i64: 1, 32>}, {pipeline_mode = #tpu.pipeline_mode<synchronous>, transform_indices = @transform_3, window_bounds = array<i64: 32, 256>}, {pipeline_mode = #tpu.pipeline_mode<synchronous>, transform_indices = @transform_4, window_bounds = array<i64: 1, 32>}, {pipeline_mode = #tpu.pipeline_mode<synchronous>, transform_indices = @transform_5, window_bounds = array<i64: 12, 32>}, {pipeline_mode = #tpu.pipeline_mode<synchronous>, transform_indices = @transform_6, window_bounds = array<i64: 4, 32>}, {pipeline_mode = #tpu.pipeline_mode<synchronous>, transform_indices = @transform_7, window_bounds = array<i64: 4, 32, 32>}, {pipeline_mode = #tpu.pipeline_mode<synchronous>, transform_indices = @transform_8, window_bounds = array<i64: 4, 32>}, {pipeline_mode = #tpu.pipeline_mode<synchronous>, transform_indices = @transform_9, window_bounds = array<i64: 4, 32>}, {pipeline_mode = #tpu.pipeline_mode<synchronous>, transform_indices = @transform_10, window_bounds = array<i64: 4, 32>}, {pipeline_mode = #tpu.pipeline_mode<synchronous>, transform_indices = @transform_11, window_bounds = array<i64: 32, 8>}, {pipeline_mode = #tpu.pipeline_mode<synchronous>, transform_indices = @transform_12, window_bounds = array<i64: 1, 8>}, {pipeline_mode = #tpu.pipeline_mode<synchronous>, transform_indices = @transform_13, window_bounds = array<i64: 1, 8>}, {pipeline_mode = #tpu.pipeline_mode<synchronous>, transform_indices = @transform_14, window_bounds = array<i64: 1, 8>}, {transform_indices = @transform_15, window_bounds = array<i64: 16, 128>}]} {
    %0 = tpu.iota {dimensions = array<i32: 0>} : vector<16x32xi32>
    %c8_i32 = arith.constant 8 : i32
    %c0_i32 = arith.constant 0 : i32
    %1 = arith.cmpi eq, %c8_i32, %c0_i32 : i32
    %c1_i32 = arith.constant 1 : i32
    %2 = arith.select %1, %c1_i32, %c8_i32 : i32
    %3 = vector.broadcast %2 : i32 to vector<16x32xi32>
    %4 = arith.remsi %0, %3 : vector<16x32xi32>
    %c0_i32_0 = arith.constant 0 : i32
    %5 = vector.broadcast %c0_i32_0 : i32 to vector<16x32xi32>
    %6 = arith.cmpi ne, %4, %5 : vector<16x32xi32>
    %c0_i32_1 = arith.constant 0 : i32
    %7 = vector.broadcast %c0_i32_1 : i32 to vector<16x32xi32>
    %8 = arith.cmpi slt, %4, %7 : vector<16x32xi32>
    %c0_i32_2 = arith.constant 0 : i32
    %9 = arith.cmpi slt, %2, %c0_i32_2 : i32
    %10 = vector.broadcast %9 : i1 to vector<16x32xi1>
    %11 = vector.broadcast %10 : vector<16x32xi1> to vector<16x32xi1>
    %12 = arith.xori %8, %11 : vector<16x32xi1>
    %13 = arith.andi %12, %6 : vector<16x32xi1>
    %14 = vector.broadcast %2 : i32 to vector<16x32xi32>
    %15 = arith.addi %4, %14 : vector<16x32xi32>
    %16 = arith.select %13, %15, %4 : vector<16x32xi1>, vector<16x32xi32>
    %c-1_i32 = arith.constant -1 : i32
    %17 = vector.broadcast %c-1_i32 : i32 to vector<16x32xi32>
    %18 = arith.addi %16, %17 : vector<16x32xi32>
    %c0_i32_3 = arith.constant 0 : i32
    %19 = vector.broadcast %c0_i32_3 : i32 to vector<16x32xi32>
    %20 = arith.cmpi sge, %18, %19 : vector<16x32xi32>
    %c-1_i32_4 = arith.constant -1 : i32
    %21 = vector.broadcast %c-1_i32_4 : i32 to vector<16x32xi32>
    %22 = arith.addi %16, %21 : vector<16x32xi32>
    %c8_i32_5 = arith.constant 8 : i32
    %23 = vector.broadcast %c8_i32_5 : i32 to vector<16x32xi32>
    %24 = arith.cmpi slt, %22, %23 : vector<16x32xi32>
    %25 = arith.andi %20, %24 : vector<16x32xi1>
    %26 = arith.extui %25 : vector<16x32xi1> to vector<16x32xi32>
    %27 = arith.sitofp %26 : vector<16x32xi32> to vector<16x32xf32>
    %c1_i32_6 = arith.constant 1 : i32
    %28 = vector.broadcast %c1_i32_6 : i32 to vector<16x32xi32>
    %29 = arith.addi %16, %28 : vector<16x32xi32>
    %c0_i32_7 = arith.constant 0 : i32
    %30 = vector.broadcast %c0_i32_7 : i32 to vector<16x32xi32>
    %31 = arith.cmpi sge, %29, %30 : vector<16x32xi32>
    %c1_i32_8 = arith.constant 1 : i32
    %32 = vector.broadcast %c1_i32_8 : i32 to vector<16x32xi32>
    %33 = arith.addi %16, %32 : vector<16x32xi32>
    %c8_i32_9 = arith.constant 8 : i32
    %34 = vector.broadcast %c8_i32_9 : i32 to vector<16x32xi32>
    %35 = arith.cmpi slt, %33, %34 : vector<16x32xi32>
    %36 = arith.andi %31, %35 : vector<16x32xi1>
    %37 = arith.extui %36 : vector<16x32xi1> to vector<16x32xi32>
    %38 = arith.sitofp %37 : vector<16x32xi32> to vector<16x32xf32>
    %c0 = arith.constant 0 : index
    %c0_10 = arith.constant 0 : index
    %39 = vector.load %arg1[%c0, %c0_10] : memref<16x16xf32, #tpu.memory_space<vmem>>, vector<16x16xf32>
    %40 = arith.truncf %39 : vector<16x16xf32> to vector<16x16xbf16>
    %c0_11 = arith.constant 0 : index
    %c0_12 = arith.constant 0 : index
    %41 = vector.load %arg2[%c0_11, %c0_12] : memref<16x32xbf16, #tpu.memory_space<vmem>>, vector<16x32xbf16>
    %cst = arith.constant dense<0.000000e+00> : vector<16x32xf32>
    %42 = tpu.matmul %40, %41, %cst {dimension_numbers = #tpu.dot_dimension_numbers<[1], [0], [0], [1], [0, 0, 1, 1], [], []>} : vector<16x16xbf16>, vector<16x32xbf16>, vector<16x32xf32> -> vector<16x32xf32>
    %c0_13 = arith.constant 0 : index
    %c0_14 = arith.constant 0 : index
    %43 = vector.load %arg3[%c0_13, %c0_14] : memref<1x32xf32, #tpu.memory_space<vmem>>, vector<1x32xf32>
    %44 = vector.broadcast %43 : vector<1x32xf32> to vector<16x32xf32>
    %45 = arith.addf %42, %44 : vector<16x32xf32>
    %46 = arith.truncf %45 : vector<16x32xf32> to vector<16x32xbf16>
    %c0_15 = arith.constant 0 : index
    %c0_16 = arith.constant 0 : index
    %47 = vector.load %arg4[%c0_15, %c0_16] : memref<32x256xbf16, #tpu.memory_space<vmem>>, vector<32x256xbf16>
    %cst_17 = arith.constant dense<0.000000e+00> : vector<16x256xf32>
    %48 = tpu.matmul %46, %47, %cst_17 {dimension_numbers = #tpu.dot_dimension_numbers<[1], [0], [0], [1], [0, 0, 1, 1], [], []>} : vector<16x32xbf16>, vector<32x256xbf16>, vector<16x256xf32> -> vector<16x256xf32>
    %c0_18 = arith.constant 0 : index
    %c0_19 = arith.constant 0 : index
    %49 = vector.load %arg5[%c0_18, %c0_19] : memref<1x32xf32, #tpu.memory_space<vmem>>, vector<1x32xf32>
    %50 = vector.shape_cast %49 : vector<1x32xf32> to vector<1x32xf32>
    %51 = vector.broadcast %50 : vector<1x32xf32> to vector<16x32xf32>
    %52 = vector.extract_strided_slice %48 {offsets = [0, 64], sizes = [16, 32], strides = [1, 1]} : vector<16x256xf32> to vector<16x32xf32>
    %53 = vector.extract_strided_slice %48 {offsets = [0, 192], sizes = [16, 32], strides = [1, 1]} : vector<16x256xf32> to vector<16x32xf32>
    %cst_20 = arith.constant 0.000000e+00 : f32
    %54 = vector.broadcast %cst_20 : f32 to vector<1x32xf32>
    %55 = vector.extract_strided_slice %53 {offsets = [0, 0], sizes = [15, 32], strides = [1, 1]} : vector<16x32xf32> to vector<15x32xf32>
    %56 = tpu.concatenate %54, %55 in 0 : vector<1x32xf32>, vector<15x32xf32> -> vector<16x32xf32>
    %57 = arith.mulf %56, %27 : vector<16x32xf32>
    %58 = arith.addf %52, %57 : vector<16x32xf32>
    %59 = arith.addf %58, %51 : vector<16x32xf32>
    %60 = vector.extract_strided_slice %48 {offsets = [0, 96], sizes = [16, 32], strides = [1, 1]} : vector<16x256xf32> to vector<16x32xf32>
    %61 = vector.extract_strided_slice %48 {offsets = [0, 224], sizes = [16, 32], strides = [1, 1]} : vector<16x256xf32> to vector<16x32xf32>
    %cst_21 = arith.constant 0.000000e+00 : f32
    %62 = vector.broadcast %cst_21 : f32 to vector<1x32xf32>
    %63 = vector.extract_strided_slice %61 {offsets = [0, 0], sizes = [15, 32], strides = [1, 1]} : vector<16x32xf32> to vector<15x32xf32>
    %64 = tpu.concatenate %62, %63 in 0 : vector<1x32xf32>, vector<15x32xf32> -> vector<16x32xf32>
    %65 = arith.mulf %64, %27 : vector<16x32xf32>
    %66 = arith.addf %60, %65 : vector<16x32xf32>
    %67 = arith.addf %66, %51 : vector<16x32xf32>
    %68 = vector.extract_strided_slice %48 {offsets = [0, 128], sizes = [16, 32], strides = [1, 1]} : vector<16x256xf32> to vector<16x32xf32>
    %69 = vector.extract_strided_slice %48 {offsets = [0, 0], sizes = [16, 32], strides = [1, 1]} : vector<16x256xf32> to vector<16x32xf32>
    %70 = vector.extract_strided_slice %69 {offsets = [1, 0], sizes = [15, 32], strides = [1, 1]} : vector<16x32xf32> to vector<15x32xf32>
    %cst_22 = arith.constant 0.000000e+00 : f32
    %71 = vector.broadcast %cst_22 : f32 to vector<1x32xf32>
    %72 = tpu.concatenate %70, %71 in 0 : vector<15x32xf32>, vector<1x32xf32> -> vector<16x32xf32>
    %73 = arith.mulf %72, %38 : vector<16x32xf32>
    %74 = arith.addf %68, %73 : vector<16x32xf32>
    %75 = arith.addf %74, %51 : vector<16x32xf32>
    %76 = vector.extract_strided_slice %48 {offsets = [0, 160], sizes = [16, 32], strides = [1, 1]} : vector<16x256xf32> to vector<16x32xf32>
    %77 = vector.extract_strided_slice %48 {offsets = [0, 32], sizes = [16, 32], strides = [1, 1]} : vector<16x256xf32> to vector<16x32xf32>
    %78 = vector.extract_strided_slice %77 {offsets = [1, 0], sizes = [15, 32], strides = [1, 1]} : vector<16x32xf32> to vector<15x32xf32>
    %cst_23 = arith.constant 0.000000e+00 : f32
    %79 = vector.broadcast %cst_23 : f32 to vector<1x32xf32>
    %80 = tpu.concatenate %78, %79 in 0 : vector<15x32xf32>, vector<1x32xf32> -> vector<16x32xf32>
    %81 = arith.mulf %80, %38 : vector<16x32xf32>
    %82 = arith.addf %76, %81 : vector<16x32xf32>
    %83 = arith.addf %82, %51 : vector<16x32xf32>
    %84 = tpu.concatenate %59, %67, %75, %83 in 0 : vector<16x32xf32>, vector<16x32xf32>, vector<16x32xf32>, vector<16x32xf32> -> vector<64x32xf32>
    %85 = vector.extract_strided_slice %84 {offsets = [0, 0], sizes = [16, 32], strides = [1, 1]} : vector<64x32xf32> to vector<16x32xf32>
    %cst_24 = arith.constant 0.000000e+00 : f32
    %86 = vector.broadcast %cst_24 : f32 to vector<1x32xf32>
    %87 = vector.extract_strided_slice %85 {offsets = [0, 0], sizes = [15, 32], strides = [1, 1]} : vector<16x32xf32> to vector<15x32xf32>
    %88 = tpu.concatenate %86, %87 in 0 : vector<1x32xf32>, vector<15x32xf32> -> vector<16x32xf32>
    %89 = arith.mulf %88, %27 : vector<16x32xf32>
    %90 = vector.extract_strided_slice %84 {offsets = [16, 0], sizes = [16, 32], strides = [1, 1]} : vector<64x32xf32> to vector<16x32xf32>
    %cst_25 = arith.constant 0.000000e+00 : f32
    %91 = vector.broadcast %cst_25 : f32 to vector<1x32xf32>
    %92 = vector.extract_strided_slice %90 {offsets = [0, 0], sizes = [15, 32], strides = [1, 1]} : vector<16x32xf32> to vector<15x32xf32>
    %93 = tpu.concatenate %91, %92 in 0 : vector<1x32xf32>, vector<15x32xf32> -> vector<16x32xf32>
    %94 = arith.mulf %93, %27 : vector<16x32xf32>
    %95 = vector.extract_strided_slice %84 {offsets = [32, 0], sizes = [16, 32], strides = [1, 1]} : vector<64x32xf32> to vector<16x32xf32>
    %cst_26 = arith.constant 0.000000e+00 : f32
    %96 = vector.broadcast %cst_26 : f32 to vector<1x32xf32>
    %97 = vector.extract_strided_slice %95 {offsets = [0, 0], sizes = [15, 32], strides = [1, 1]} : vector<16x32xf32> to vector<15x32xf32>
    %98 = tpu.concatenate %96, %97 in 0 : vector<1x32xf32>, vector<15x32xf32> -> vector<16x32xf32>
    %99 = arith.mulf %98, %27 : vector<16x32xf32>
    %100 = vector.extract_strided_slice %84 {offsets = [48, 0], sizes = [16, 32], strides = [1, 1]} : vector<64x32xf32> to vector<16x32xf32>
    %cst_27 = arith.constant 0.000000e+00 : f32
    %101 = vector.broadcast %cst_27 : f32 to vector<1x32xf32>
    %102 = vector.extract_strided_slice %100 {offsets = [0, 0], sizes = [15, 32], strides = [1, 1]} : vector<16x32xf32> to vector<15x32xf32>
    %103 = tpu.concatenate %101, %102 in 0 : vector<1x32xf32>, vector<15x32xf32> -> vector<16x32xf32>
    %104 = arith.mulf %103, %27 : vector<16x32xf32>
    %105 = tpu.concatenate %89, %94, %99, %104 in 0 : vector<16x32xf32>, vector<16x32xf32>, vector<16x32xf32>, vector<16x32xf32> -> vector<64x32xf32>
    %c0_28 = arith.constant 0 : index
    %c0_29 = arith.constant 0 : index
    %106 = vector.load %arg6[%c0_28, %c0_29] : memref<12x32xf32, #tpu.memory_space<vmem>>, vector<1x32xf32>
    %107 = vector.shape_cast %106 : vector<1x32xf32> to vector<1x32xf32>
    %108 = vector.broadcast %107 : vector<1x32xf32> to vector<64x32xf32>
    %109 = arith.mulf %108, %105 : vector<64x32xf32>
    %110 = vector.extract_strided_slice %84 {offsets = [0, 0], sizes = [16, 32], strides = [1, 1]} : vector<64x32xf32> to vector<16x32xf32>
    %111 = vector.extract_strided_slice %84 {offsets = [16, 0], sizes = [16, 32], strides = [1, 1]} : vector<64x32xf32> to vector<16x32xf32>
    %112 = vector.extract_strided_slice %84 {offsets = [32, 0], sizes = [16, 32], strides = [1, 1]} : vector<64x32xf32> to vector<16x32xf32>
    %113 = vector.extract_strided_slice %84 {offsets = [48, 0], sizes = [16, 32], strides = [1, 1]} : vector<64x32xf32> to vector<16x32xf32>
    %114 = tpu.concatenate %110, %111, %112, %113 in 0 : vector<16x32xf32>, vector<16x32xf32>, vector<16x32xf32>, vector<16x32xf32> -> vector<64x32xf32>
    %c1 = arith.constant 1 : index
    %c0_30 = arith.constant 0 : index
    %115 = vector.load %arg6[%c1, %c0_30] : memref<12x32xf32, #tpu.memory_space<vmem>>, vector<1x32xf32>
    %116 = vector.shape_cast %115 : vector<1x32xf32> to vector<1x32xf32>
    %117 = vector.broadcast %116 : vector<1x32xf32> to vector<64x32xf32>
    %118 = arith.mulf %117, %114 : vector<64x32xf32>
    %119 = arith.addf %109, %118 : vector<64x32xf32>
    %120 = vector.extract_strided_slice %84 {offsets = [0, 0], sizes = [16, 32], strides = [1, 1]} : vector<64x32xf32> to vector<16x32xf32>
    %121 = vector.extract_strided_slice %120 {offsets = [1, 0], sizes = [15, 32], strides = [1, 1]} : vector<16x32xf32> to vector<15x32xf32>
    %cst_31 = arith.constant 0.000000e+00 : f32
    %122 = vector.broadcast %cst_31 : f32 to vector<1x32xf32>
    %123 = tpu.concatenate %121, %122 in 0 : vector<15x32xf32>, vector<1x32xf32> -> vector<16x32xf32>
    %124 = arith.mulf %123, %38 : vector<16x32xf32>
    %125 = vector.extract_strided_slice %84 {offsets = [16, 0], sizes = [16, 32], strides = [1, 1]} : vector<64x32xf32> to vector<16x32xf32>
    %126 = vector.extract_strided_slice %125 {offsets = [1, 0], sizes = [15, 32], strides = [1, 1]} : vector<16x32xf32> to vector<15x32xf32>
    %cst_32 = arith.constant 0.000000e+00 : f32
    %127 = vector.broadcast %cst_32 : f32 to vector<1x32xf32>
    %128 = tpu.concatenate %126, %127 in 0 : vector<15x32xf32>, vector<1x32xf32> -> vector<16x32xf32>
    %129 = arith.mulf %128, %38 : vector<16x32xf32>
    %130 = vector.extract_strided_slice %84 {offsets = [32, 0], sizes = [16, 32], strides = [1, 1]} : vector<64x32xf32> to vector<16x32xf32>
    %131 = vector.extract_strided_slice %130 {offsets = [1, 0], sizes = [15, 32], strides = [1, 1]} : vector<16x32xf32> to vector<15x32xf32>
    %cst_33 = arith.constant 0.000000e+00 : f32
    %132 = vector.broadcast %cst_33 : f32 to vector<1x32xf32>
    %133 = tpu.concatenate %131, %132 in 0 : vector<15x32xf32>, vector<1x32xf32> -> vector<16x32xf32>
    %134 = arith.mulf %133, %38 : vector<16x32xf32>
    %135 = vector.extract_strided_slice %84 {offsets = [48, 0], sizes = [16, 32], strides = [1, 1]} : vector<64x32xf32> to vector<16x32xf32>
    %136 = vector.extract_strided_slice %135 {offsets = [1, 0], sizes = [15, 32], strides = [1, 1]} : vector<16x32xf32> to vector<15x32xf32>
    %cst_34 = arith.constant 0.000000e+00 : f32
    %137 = vector.broadcast %cst_34 : f32 to vector<1x32xf32>
    %138 = tpu.concatenate %136, %137 in 0 : vector<15x32xf32>, vector<1x32xf32> -> vector<16x32xf32>
    %139 = arith.mulf %138, %38 : vector<16x32xf32>
    %140 = tpu.concatenate %124, %129, %134, %139 in 0 : vector<16x32xf32>, vector<16x32xf32>, vector<16x32xf32>, vector<16x32xf32> -> vector<64x32xf32>
    %c2 = arith.constant 2 : index
    %c0_35 = arith.constant 0 : index
    %141 = vector.load %arg6[%c2, %c0_35] : memref<12x32xf32, #tpu.memory_space<vmem>>, vector<1x32xf32>
    %142 = vector.shape_cast %141 : vector<1x32xf32> to vector<1x32xf32>
    %143 = vector.broadcast %142 : vector<1x32xf32> to vector<64x32xf32>
    %144 = arith.mulf %143, %140 : vector<64x32xf32>
    %145 = arith.addf %119, %144 : vector<64x32xf32>
    %c0_36 = arith.constant 0 : index
    %c0_37 = arith.constant 0 : index
    %146 = vector.load %arg7[%c0_36, %c0_37] : memref<4x32xf32, #tpu.memory_space<vmem>>, vector<1x32xf32>
    %147 = vector.broadcast %146 : vector<1x32xf32> to vector<64x32xf32>
    %148 = arith.addf %145, %147 : vector<64x32xf32>
    %149 = arith.truncf %148 : vector<64x32xf32> to vector<64x32xbf16>
    %c0_38 = arith.constant 0 : index
    %c0_39 = arith.constant 0 : index
    %c0_40 = arith.constant 0 : index
    %150 = vector.load %arg8[%c0_38, %c0_39, %c0_40] : memref<4x32x32xbf16, #tpu.memory_space<vmem>>, vector<1x32x32xbf16>
    %151 = vector.shape_cast %150 : vector<1x32x32xbf16> to vector<32x32xbf16>
    %cst_41 = arith.constant dense<0.000000e+00> : vector<64x32xf32>
    %152 = tpu.matmul %149, %151, %cst_41 {dimension_numbers = #tpu.dot_dimension_numbers<[1], [0], [0], [1], [0, 0, 1, 1], [], []>} : vector<64x32xbf16>, vector<32x32xbf16>, vector<64x32xf32> -> vector<64x32xf32>
    %c0_42 = arith.constant 0 : index
    %c0_43 = arith.constant 0 : index
    %153 = vector.load %arg9[%c0_42, %c0_43] : memref<4x32xf32, #tpu.memory_space<vmem>>, vector<1x32xf32>
    %154 = vector.broadcast %153 : vector<1x32xf32> to vector<64x32xf32>
    %155 = arith.addf %152, %154 : vector<64x32xf32>
    %c0_44 = arith.constant 0 : index
    %c0_45 = arith.constant 0 : index
    %156 = vector.load %arg10[%c0_44, %c0_45] : memref<4x32xf32, #tpu.memory_space<vmem>>, vector<1x32xf32>
    %c0_46 = arith.constant 0 : index
    %c0_47 = arith.constant 0 : index
    %157 = vector.load %arg11[%c0_46, %c0_47] : memref<4x32xf32, #tpu.memory_space<vmem>>, vector<1x32xf32>
    %cst_48 = arith.constant dense<0.000000e+00> : vector<64xf32>
    %158 = vector.multi_reduction <add>, %155, %cst_48 [1] : vector<64x32xf32> to vector<64xf32>
    %159 = vector.shape_cast %158 : vector<64xf32> to vector<64x1xf32>
    %cst_49 = arith.constant 3.200000e+01 : f32
    %160 = vector.broadcast %cst_49 : f32 to vector<64x1xf32>
    %161 = arith.divf %159, %160 : vector<64x1xf32>
    %162 = vector.broadcast %161 : vector<64x1xf32> to vector<64x32xf32>
    %163 = arith.subf %155, %162 : vector<64x32xf32>
    %164 = arith.mulf %163, %163 : vector<64x32xf32>
    %cst_50 = arith.constant dense<0.000000e+00> : vector<64xf32>
    %165 = vector.multi_reduction <add>, %164, %cst_50 [1] : vector<64x32xf32> to vector<64xf32>
    %166 = vector.shape_cast %165 : vector<64xf32> to vector<64x1xf32>
    %cst_51 = arith.constant 3.200000e+01 : f32
    %167 = vector.broadcast %cst_51 : f32 to vector<64x1xf32>
    %168 = arith.divf %166, %167 : vector<64x1xf32>
    %169 = vector.broadcast %161 : vector<64x1xf32> to vector<64x32xf32>
    %170 = arith.subf %155, %169 : vector<64x32xf32>
    %cst_52 = arith.constant 9.99999974E-6 : f32
    %171 = vector.broadcast %cst_52 : f32 to vector<64x1xf32>
    %172 = arith.addf %168, %171 : vector<64x1xf32>
    %173 = math.rsqrt %172 : vector<64x1xf32>
    %174 = vector.broadcast %173 : vector<64x1xf32> to vector<64x32xf32>
    %175 = arith.mulf %170, %174 : vector<64x32xf32>
    %176 = vector.broadcast %156 : vector<1x32xf32> to vector<64x32xf32>
    %177 = arith.mulf %175, %176 : vector<64x32xf32>
    %178 = vector.broadcast %157 : vector<1x32xf32> to vector<64x32xf32>
    %179 = arith.addf %177, %178 : vector<64x32xf32>
    %cst_53 = arith.constant 0.000000e+00 : f32
    %180 = vector.broadcast %cst_53 : f32 to vector<64x32xf32>
    %181 = arith.maximumf %179, %180 : vector<64x32xf32>
    %182 = arith.addf %181, %84 : vector<64x32xf32>
    %183 = vector.extract_strided_slice %182 {offsets = [16, 0], sizes = [16, 32], strides = [1, 1]} : vector<64x32xf32> to vector<16x32xf32>
    %cst_54 = arith.constant 0.000000e+00 : f32
    %184 = vector.broadcast %cst_54 : f32 to vector<1x32xf32>
    %185 = vector.extract_strided_slice %183 {offsets = [0, 0], sizes = [15, 32], strides = [1, 1]} : vector<16x32xf32> to vector<15x32xf32>
    %186 = tpu.concatenate %184, %185 in 0 : vector<1x32xf32>, vector<15x32xf32> -> vector<16x32xf32>
    %187 = arith.mulf %186, %27 : vector<16x32xf32>
    %188 = vector.extract_strided_slice %182 {offsets = [32, 0], sizes = [16, 32], strides = [1, 1]} : vector<64x32xf32> to vector<16x32xf32>
    %cst_55 = arith.constant 0.000000e+00 : f32
    %189 = vector.broadcast %cst_55 : f32 to vector<1x32xf32>
    %190 = vector.extract_strided_slice %188 {offsets = [0, 0], sizes = [15, 32], strides = [1, 1]} : vector<16x32xf32> to vector<15x32xf32>
    %191 = tpu.concatenate %189, %190 in 0 : vector<1x32xf32>, vector<15x32xf32> -> vector<16x32xf32>
    %192 = arith.mulf %191, %27 : vector<16x32xf32>
    %193 = vector.extract_strided_slice %182 {offsets = [48, 0], sizes = [16, 32], strides = [1, 1]} : vector<64x32xf32> to vector<16x32xf32>
    %cst_56 = arith.constant 0.000000e+00 : f32
    %194 = vector.broadcast %cst_56 : f32 to vector<1x32xf32>
    %195 = vector.extract_strided_slice %193 {offsets = [0, 0], sizes = [15, 32], strides = [1, 1]} : vector<16x32xf32> to vector<15x32xf32>
    %196 = tpu.concatenate %194, %195 in 0 : vector<1x32xf32>, vector<15x32xf32> -> vector<16x32xf32>
    %197 = arith.mulf %196, %27 : vector<16x32xf32>
    %198 = vector.extract_strided_slice %182 {offsets = [0, 0], sizes = [16, 32], strides = [1, 1]} : vector<64x32xf32> to vector<16x32xf32>
    %199 = tpu.concatenate %187, %192, %197, %198 in 0 : vector<16x32xf32>, vector<16x32xf32>, vector<16x32xf32>, vector<16x32xf32> -> vector<64x32xf32>
    %c3 = arith.constant 3 : index
    %c0_57 = arith.constant 0 : index
    %200 = vector.load %arg6[%c3, %c0_57] : memref<12x32xf32, #tpu.memory_space<vmem>>, vector<1x32xf32>
    %201 = vector.shape_cast %200 : vector<1x32xf32> to vector<1x32xf32>
    %202 = vector.broadcast %201 : vector<1x32xf32> to vector<64x32xf32>
    %203 = arith.mulf %202, %199 : vector<64x32xf32>
    %204 = vector.extract_strided_slice %182 {offsets = [16, 0], sizes = [16, 32], strides = [1, 1]} : vector<64x32xf32> to vector<16x32xf32>
    %205 = vector.extract_strided_slice %182 {offsets = [32, 0], sizes = [16, 32], strides = [1, 1]} : vector<64x32xf32> to vector<16x32xf32>
    %206 = vector.extract_strided_slice %182 {offsets = [48, 0], sizes = [16, 32], strides = [1, 1]} : vector<64x32xf32> to vector<16x32xf32>
    %207 = tpu.concatenate %198, %204, %205, %206 in 0 : vector<16x32xf32>, vector<16x32xf32>, vector<16x32xf32>, vector<16x32xf32> -> vector<64x32xf32>
    %c4 = arith.constant 4 : index
    %c0_58 = arith.constant 0 : index
    %208 = vector.load %arg6[%c4, %c0_58] : memref<12x32xf32, #tpu.memory_space<vmem>>, vector<1x32xf32>
    %209 = vector.shape_cast %208 : vector<1x32xf32> to vector<1x32xf32>
    %210 = vector.broadcast %209 : vector<1x32xf32> to vector<64x32xf32>
    %211 = arith.mulf %210, %207 : vector<64x32xf32>
    %212 = arith.addf %203, %211 : vector<64x32xf32>
    %213 = vector.extract_strided_slice %182 {offsets = [0, 0], sizes = [16, 32], strides = [1, 1]} : vector<64x32xf32> to vector<16x32xf32>
    %214 = vector.extract_strided_slice %213 {offsets = [1, 0], sizes = [15, 32], strides = [1, 1]} : vector<16x32xf32> to vector<15x32xf32>
    %cst_59 = arith.constant 0.000000e+00 : f32
    %215 = vector.broadcast %cst_59 : f32 to vector<1x32xf32>
    %216 = tpu.concatenate %214, %215 in 0 : vector<15x32xf32>, vector<1x32xf32> -> vector<16x32xf32>
    %217 = arith.mulf %216, %38 : vector<16x32xf32>
    %218 = vector.extract_strided_slice %182 {offsets = [16, 0], sizes = [16, 32], strides = [1, 1]} : vector<64x32xf32> to vector<16x32xf32>
    %219 = vector.extract_strided_slice %218 {offsets = [1, 0], sizes = [15, 32], strides = [1, 1]} : vector<16x32xf32> to vector<15x32xf32>
    %cst_60 = arith.constant 0.000000e+00 : f32
    %220 = vector.broadcast %cst_60 : f32 to vector<1x32xf32>
    %221 = tpu.concatenate %219, %220 in 0 : vector<15x32xf32>, vector<1x32xf32> -> vector<16x32xf32>
    %222 = arith.mulf %221, %38 : vector<16x32xf32>
    %223 = vector.extract_strided_slice %182 {offsets = [32, 0], sizes = [16, 32], strides = [1, 1]} : vector<64x32xf32> to vector<16x32xf32>
    %224 = vector.extract_strided_slice %223 {offsets = [1, 0], sizes = [15, 32], strides = [1, 1]} : vector<16x32xf32> to vector<15x32xf32>
    %cst_61 = arith.constant 0.000000e+00 : f32
    %225 = vector.broadcast %cst_61 : f32 to vector<1x32xf32>
    %226 = tpu.concatenate %224, %225 in 0 : vector<15x32xf32>, vector<1x32xf32> -> vector<16x32xf32>
    %227 = arith.mulf %226, %38 : vector<16x32xf32>
    %228 = tpu.concatenate %206, %217, %222, %227 in 0 : vector<16x32xf32>, vector<16x32xf32>, vector<16x32xf32>, vector<16x32xf32> -> vector<64x32xf32>
    %c5 = arith.constant 5 : index
    %c0_62 = arith.constant 0 : index
    %229 = vector.load %arg6[%c5, %c0_62] : memref<12x32xf32, #tpu.memory_space<vmem>>, vector<1x32xf32>
    %230 = vector.shape_cast %229 : vector<1x32xf32> to vector<1x32xf32>
    %231 = vector.broadcast %230 : vector<1x32xf32> to vector<64x32xf32>
    %232 = arith.mulf %231, %228 : vector<64x32xf32>
    %233 = arith.addf %212, %232 : vector<64x32xf32>
    %c1_63 = arith.constant 1 : index
    %c0_64 = arith.constant 0 : index
    %234 = vector.load %arg7[%c1_63, %c0_64] : memref<4x32xf32, #tpu.memory_space<vmem>>, vector<1x32xf32>
    %235 = vector.broadcast %234 : vector<1x32xf32> to vector<64x32xf32>
    %236 = arith.addf %233, %235 : vector<64x32xf32>
    %237 = arith.truncf %236 : vector<64x32xf32> to vector<64x32xbf16>
    %c1_65 = arith.constant 1 : index
    %c0_66 = arith.constant 0 : index
    %c0_67 = arith.constant 0 : index
    %238 = vector.load %arg8[%c1_65, %c0_66, %c0_67] : memref<4x32x32xbf16, #tpu.memory_space<vmem>>, vector<1x32x32xbf16>
    %239 = vector.shape_cast %238 : vector<1x32x32xbf16> to vector<32x32xbf16>
    %cst_68 = arith.constant dense<0.000000e+00> : vector<64x32xf32>
    %240 = tpu.matmul %237, %239, %cst_68 {dimension_numbers = #tpu.dot_dimension_numbers<[1], [0], [0], [1], [0, 0, 1, 1], [], []>} : vector<64x32xbf16>, vector<32x32xbf16>, vector<64x32xf32> -> vector<64x32xf32>
    %c1_69 = arith.constant 1 : index
    %c0_70 = arith.constant 0 : index
    %241 = vector.load %arg9[%c1_69, %c0_70] : memref<4x32xf32, #tpu.memory_space<vmem>>, vector<1x32xf32>
    %242 = vector.broadcast %241 : vector<1x32xf32> to vector<64x32xf32>
    %243 = arith.addf %240, %242 : vector<64x32xf32>
    %c1_71 = arith.constant 1 : index
    %c0_72 = arith.constant 0 : index
    %244 = vector.load %arg10[%c1_71, %c0_72] : memref<4x32xf32, #tpu.memory_space<vmem>>, vector<1x32xf32>
    %c1_73 = arith.constant 1 : index
    %c0_74 = arith.constant 0 : index
    %245 = vector.load %arg11[%c1_73, %c0_74] : memref<4x32xf32, #tpu.memory_space<vmem>>, vector<1x32xf32>
    %cst_75 = arith.constant dense<0.000000e+00> : vector<64xf32>
    %246 = vector.multi_reduction <add>, %243, %cst_75 [1] : vector<64x32xf32> to vector<64xf32>
    %247 = vector.shape_cast %246 : vector<64xf32> to vector<64x1xf32>
    %cst_76 = arith.constant 3.200000e+01 : f32
    %248 = vector.broadcast %cst_76 : f32 to vector<64x1xf32>
    %249 = arith.divf %247, %248 : vector<64x1xf32>
    %250 = vector.broadcast %249 : vector<64x1xf32> to vector<64x32xf32>
    %251 = arith.subf %243, %250 : vector<64x32xf32>
    %252 = arith.mulf %251, %251 : vector<64x32xf32>
    %cst_77 = arith.constant dense<0.000000e+00> : vector<64xf32>
    %253 = vector.multi_reduction <add>, %252, %cst_77 [1] : vector<64x32xf32> to vector<64xf32>
    %254 = vector.shape_cast %253 : vector<64xf32> to vector<64x1xf32>
    %cst_78 = arith.constant 3.200000e+01 : f32
    %255 = vector.broadcast %cst_78 : f32 to vector<64x1xf32>
    %256 = arith.divf %254, %255 : vector<64x1xf32>
    %257 = vector.broadcast %249 : vector<64x1xf32> to vector<64x32xf32>
    %258 = arith.subf %243, %257 : vector<64x32xf32>
    %cst_79 = arith.constant 9.99999974E-6 : f32
    %259 = vector.broadcast %cst_79 : f32 to vector<64x1xf32>
    %260 = arith.addf %256, %259 : vector<64x1xf32>
    %261 = math.rsqrt %260 : vector<64x1xf32>
    %262 = vector.broadcast %261 : vector<64x1xf32> to vector<64x32xf32>
    %263 = arith.mulf %258, %262 : vector<64x32xf32>
    %264 = vector.broadcast %244 : vector<1x32xf32> to vector<64x32xf32>
    %265 = arith.mulf %263, %264 : vector<64x32xf32>
    %266 = vector.broadcast %245 : vector<1x32xf32> to vector<64x32xf32>
    %267 = arith.addf %265, %266 : vector<64x32xf32>
    %cst_80 = arith.constant 0.000000e+00 : f32
    %268 = vector.broadcast %cst_80 : f32 to vector<64x32xf32>
    %269 = arith.maximumf %267, %268 : vector<64x32xf32>
    %270 = arith.addf %269, %182 : vector<64x32xf32>
    %271 = vector.extract_strided_slice %270 {offsets = [32, 0], sizes = [16, 32], strides = [1, 1]} : vector<64x32xf32> to vector<16x32xf32>
    %cst_81 = arith.constant 0.000000e+00 : f32
    %272 = vector.broadcast %cst_81 : f32 to vector<1x32xf32>
    %273 = vector.extract_strided_slice %271 {offsets = [0, 0], sizes = [15, 32], strides = [1, 1]} : vector<16x32xf32> to vector<15x32xf32>
    %274 = tpu.concatenate %272, %273 in 0 : vector<1x32xf32>, vector<15x32xf32> -> vector<16x32xf32>
    %275 = arith.mulf %274, %27 : vector<16x32xf32>
    %276 = vector.extract_strided_slice %270 {offsets = [48, 0], sizes = [16, 32], strides = [1, 1]} : vector<64x32xf32> to vector<16x32xf32>
    %cst_82 = arith.constant 0.000000e+00 : f32
    %277 = vector.broadcast %cst_82 : f32 to vector<1x32xf32>
    %278 = vector.extract_strided_slice %276 {offsets = [0, 0], sizes = [15, 32], strides = [1, 1]} : vector<16x32xf32> to vector<15x32xf32>
    %279 = tpu.concatenate %277, %278 in 0 : vector<1x32xf32>, vector<15x32xf32> -> vector<16x32xf32>
    %280 = arith.mulf %279, %27 : vector<16x32xf32>
    %281 = vector.extract_strided_slice %270 {offsets = [0, 0], sizes = [16, 32], strides = [1, 1]} : vector<64x32xf32> to vector<16x32xf32>
    %282 = vector.extract_strided_slice %270 {offsets = [16, 0], sizes = [16, 32], strides = [1, 1]} : vector<64x32xf32> to vector<16x32xf32>
    %283 = tpu.concatenate %275, %280, %281, %282 in 0 : vector<16x32xf32>, vector<16x32xf32>, vector<16x32xf32>, vector<16x32xf32> -> vector<64x32xf32>
    %c6 = arith.constant 6 : index
    %c0_83 = arith.constant 0 : index
    %284 = vector.load %arg6[%c6, %c0_83] : memref<12x32xf32, #tpu.memory_space<vmem>>, vector<1x32xf32>
    %285 = vector.shape_cast %284 : vector<1x32xf32> to vector<1x32xf32>
    %286 = vector.broadcast %285 : vector<1x32xf32> to vector<64x32xf32>
    %287 = arith.mulf %286, %283 : vector<64x32xf32>
    %288 = vector.extract_strided_slice %270 {offsets = [32, 0], sizes = [16, 32], strides = [1, 1]} : vector<64x32xf32> to vector<16x32xf32>
    %289 = vector.extract_strided_slice %270 {offsets = [48, 0], sizes = [16, 32], strides = [1, 1]} : vector<64x32xf32> to vector<16x32xf32>
    %290 = tpu.concatenate %281, %282, %288, %289 in 0 : vector<16x32xf32>, vector<16x32xf32>, vector<16x32xf32>, vector<16x32xf32> -> vector<64x32xf32>
    %c7 = arith.constant 7 : index
    %c0_84 = arith.constant 0 : index
    %291 = vector.load %arg6[%c7, %c0_84] : memref<12x32xf32, #tpu.memory_space<vmem>>, vector<1x32xf32>
    %292 = vector.shape_cast %291 : vector<1x32xf32> to vector<1x32xf32>
    %293 = vector.broadcast %292 : vector<1x32xf32> to vector<64x32xf32>
    %294 = arith.mulf %293, %290 : vector<64x32xf32>
    %295 = arith.addf %287, %294 : vector<64x32xf32>
    %296 = vector.extract_strided_slice %270 {offsets = [0, 0], sizes = [16, 32], strides = [1, 1]} : vector<64x32xf32> to vector<16x32xf32>
    %297 = vector.extract_strided_slice %296 {offsets = [1, 0], sizes = [15, 32], strides = [1, 1]} : vector<16x32xf32> to vector<15x32xf32>
    %cst_85 = arith.constant 0.000000e+00 : f32
    %298 = vector.broadcast %cst_85 : f32 to vector<1x32xf32>
    %299 = tpu.concatenate %297, %298 in 0 : vector<15x32xf32>, vector<1x32xf32> -> vector<16x32xf32>
    %300 = arith.mulf %299, %38 : vector<16x32xf32>
    %301 = vector.extract_strided_slice %270 {offsets = [16, 0], sizes = [16, 32], strides = [1, 1]} : vector<64x32xf32> to vector<16x32xf32>
    %302 = vector.extract_strided_slice %301 {offsets = [1, 0], sizes = [15, 32], strides = [1, 1]} : vector<16x32xf32> to vector<15x32xf32>
    %cst_86 = arith.constant 0.000000e+00 : f32
    %303 = vector.broadcast %cst_86 : f32 to vector<1x32xf32>
    %304 = tpu.concatenate %302, %303 in 0 : vector<15x32xf32>, vector<1x32xf32> -> vector<16x32xf32>
    %305 = arith.mulf %304, %38 : vector<16x32xf32>
    %306 = tpu.concatenate %288, %289, %300, %305 in 0 : vector<16x32xf32>, vector<16x32xf32>, vector<16x32xf32>, vector<16x32xf32> -> vector<64x32xf32>
    %c8 = arith.constant 8 : index
    %c0_87 = arith.constant 0 : index
    %307 = vector.load %arg6[%c8, %c0_87] : memref<12x32xf32, #tpu.memory_space<vmem>>, vector<1x32xf32>
    %308 = vector.shape_cast %307 : vector<1x32xf32> to vector<1x32xf32>
    %309 = vector.broadcast %308 : vector<1x32xf32> to vector<64x32xf32>
    %310 = arith.mulf %309, %306 : vector<64x32xf32>
    %311 = arith.addf %295, %310 : vector<64x32xf32>
    %c2_88 = arith.constant 2 : index
    %c0_89 = arith.constant 0 : index
    %312 = vector.load %arg7[%c2_88, %c0_89] : memref<4x32xf32, #tpu.memory_space<vmem>>, vector<1x32xf32>
    %313 = vector.broadcast %312 : vector<1x32xf32> to vector<64x32xf32>
    %314 = arith.addf %311, %313 : vector<64x32xf32>
    %315 = arith.truncf %314 : vector<64x32xf32> to vector<64x32xbf16>
    %c2_90 = arith.constant 2 : index
    %c0_91 = arith.constant 0 : index
    %c0_92 = arith.constant 0 : index
    %316 = vector.load %arg8[%c2_90, %c0_91, %c0_92] : memref<4x32x32xbf16, #tpu.memory_space<vmem>>, vector<1x32x32xbf16>
    %317 = vector.shape_cast %316 : vector<1x32x32xbf16> to vector<32x32xbf16>
    %cst_93 = arith.constant dense<0.000000e+00> : vector<64x32xf32>
    %318 = tpu.matmul %315, %317, %cst_93 {dimension_numbers = #tpu.dot_dimension_numbers<[1], [0], [0], [1], [0, 0, 1, 1], [], []>} : vector<64x32xbf16>, vector<32x32xbf16>, vector<64x32xf32> -> vector<64x32xf32>
    %c2_94 = arith.constant 2 : index
    %c0_95 = arith.constant 0 : index
    %319 = vector.load %arg9[%c2_94, %c0_95] : memref<4x32xf32, #tpu.memory_space<vmem>>, vector<1x32xf32>
    %320 = vector.broadcast %319 : vector<1x32xf32> to vector<64x32xf32>
    %321 = arith.addf %318, %320 : vector<64x32xf32>
    %c2_96 = arith.constant 2 : index
    %c0_97 = arith.constant 0 : index
    %322 = vector.load %arg10[%c2_96, %c0_97] : memref<4x32xf32, #tpu.memory_space<vmem>>, vector<1x32xf32>
    %c2_98 = arith.constant 2 : index
    %c0_99 = arith.constant 0 : index
    %323 = vector.load %arg11[%c2_98, %c0_99] : memref<4x32xf32, #tpu.memory_space<vmem>>, vector<1x32xf32>
    %cst_100 = arith.constant dense<0.000000e+00> : vector<64xf32>
    %324 = vector.multi_reduction <add>, %321, %cst_100 [1] : vector<64x32xf32> to vector<64xf32>
    %325 = vector.shape_cast %324 : vector<64xf32> to vector<64x1xf32>
    %cst_101 = arith.constant 3.200000e+01 : f32
    %326 = vector.broadcast %cst_101 : f32 to vector<64x1xf32>
    %327 = arith.divf %325, %326 : vector<64x1xf32>
    %328 = vector.broadcast %327 : vector<64x1xf32> to vector<64x32xf32>
    %329 = arith.subf %321, %328 : vector<64x32xf32>
    %330 = arith.mulf %329, %329 : vector<64x32xf32>
    %cst_102 = arith.constant dense<0.000000e+00> : vector<64xf32>
    %331 = vector.multi_reduction <add>, %330, %cst_102 [1] : vector<64x32xf32> to vector<64xf32>
    %332 = vector.shape_cast %331 : vector<64xf32> to vector<64x1xf32>
    %cst_103 = arith.constant 3.200000e+01 : f32
    %333 = vector.broadcast %cst_103 : f32 to vector<64x1xf32>
    %334 = arith.divf %332, %333 : vector<64x1xf32>
    %335 = vector.broadcast %327 : vector<64x1xf32> to vector<64x32xf32>
    %336 = arith.subf %321, %335 : vector<64x32xf32>
    %cst_104 = arith.constant 9.99999974E-6 : f32
    %337 = vector.broadcast %cst_104 : f32 to vector<64x1xf32>
    %338 = arith.addf %334, %337 : vector<64x1xf32>
    %339 = math.rsqrt %338 : vector<64x1xf32>
    %340 = vector.broadcast %339 : vector<64x1xf32> to vector<64x32xf32>
    %341 = arith.mulf %336, %340 : vector<64x32xf32>
    %342 = vector.broadcast %322 : vector<1x32xf32> to vector<64x32xf32>
    %343 = arith.mulf %341, %342 : vector<64x32xf32>
    %344 = vector.broadcast %323 : vector<1x32xf32> to vector<64x32xf32>
    %345 = arith.addf %343, %344 : vector<64x32xf32>
    %cst_105 = arith.constant 0.000000e+00 : f32
    %346 = vector.broadcast %cst_105 : f32 to vector<64x32xf32>
    %347 = arith.maximumf %345, %346 : vector<64x32xf32>
    %348 = arith.addf %347, %270 : vector<64x32xf32>
    %349 = vector.extract_strided_slice %348 {offsets = [48, 0], sizes = [16, 32], strides = [1, 1]} : vector<64x32xf32> to vector<16x32xf32>
    %cst_106 = arith.constant 0.000000e+00 : f32
    %350 = vector.broadcast %cst_106 : f32 to vector<1x32xf32>
    %351 = vector.extract_strided_slice %349 {offsets = [0, 0], sizes = [15, 32], strides = [1, 1]} : vector<16x32xf32> to vector<15x32xf32>
    %352 = tpu.concatenate %350, %351 in 0 : vector<1x32xf32>, vector<15x32xf32> -> vector<16x32xf32>
    %353 = arith.mulf %352, %27 : vector<16x32xf32>
    %354 = vector.extract_strided_slice %348 {offsets = [0, 0], sizes = [16, 32], strides = [1, 1]} : vector<64x32xf32> to vector<16x32xf32>
    %355 = vector.extract_strided_slice %348 {offsets = [16, 0], sizes = [16, 32], strides = [1, 1]} : vector<64x32xf32> to vector<16x32xf32>
    %356 = vector.extract_strided_slice %348 {offsets = [32, 0], sizes = [16, 32], strides = [1, 1]} : vector<64x32xf32> to vector<16x32xf32>
    %357 = tpu.concatenate %353, %354, %355, %356 in 0 : vector<16x32xf32>, vector<16x32xf32>, vector<16x32xf32>, vector<16x32xf32> -> vector<64x32xf32>
    %c9 = arith.constant 9 : index
    %c0_107 = arith.constant 0 : index
    %358 = vector.load %arg6[%c9, %c0_107] : memref<12x32xf32, #tpu.memory_space<vmem>>, vector<1x32xf32>
    %359 = vector.shape_cast %358 : vector<1x32xf32> to vector<1x32xf32>
    %360 = vector.broadcast %359 : vector<1x32xf32> to vector<64x32xf32>
    %361 = arith.mulf %360, %357 : vector<64x32xf32>
    %362 = vector.extract_strided_slice %348 {offsets = [48, 0], sizes = [16, 32], strides = [1, 1]} : vector<64x32xf32> to vector<16x32xf32>
    %363 = tpu.concatenate %354, %355, %356, %362 in 0 : vector<16x32xf32>, vector<16x32xf32>, vector<16x32xf32>, vector<16x32xf32> -> vector<64x32xf32>
    %c10 = arith.constant 10 : index
    %c0_108 = arith.constant 0 : index
    %364 = vector.load %arg6[%c10, %c0_108] : memref<12x32xf32, #tpu.memory_space<vmem>>, vector<1x32xf32>
    %365 = vector.shape_cast %364 : vector<1x32xf32> to vector<1x32xf32>
    %366 = vector.broadcast %365 : vector<1x32xf32> to vector<64x32xf32>
    %367 = arith.mulf %366, %363 : vector<64x32xf32>
    %368 = arith.addf %361, %367 : vector<64x32xf32>
    %369 = vector.extract_strided_slice %348 {offsets = [0, 0], sizes = [16, 32], strides = [1, 1]} : vector<64x32xf32> to vector<16x32xf32>
    %370 = vector.extract_strided_slice %369 {offsets = [1, 0], sizes = [15, 32], strides = [1, 1]} : vector<16x32xf32> to vector<15x32xf32>
    %cst_109 = arith.constant 0.000000e+00 : f32
    %371 = vector.broadcast %cst_109 : f32 to vector<1x32xf32>
    %372 = tpu.concatenate %370, %371 in 0 : vector<15x32xf32>, vector<1x32xf32> -> vector<16x32xf32>
    %373 = arith.mulf %372, %38 : vector<16x32xf32>
    %374 = tpu.concatenate %355, %356, %362, %373 in 0 : vector<16x32xf32>, vector<16x32xf32>, vector<16x32xf32>, vector<16x32xf32> -> vector<64x32xf32>
    %c11 = arith.constant 11 : index
    %c0_110 = arith.constant 0 : index
    %375 = vector.load %arg6[%c11, %c0_110] : memref<12x32xf32, #tpu.memory_space<vmem>>, vector<1x32xf32>
    %376 = vector.shape_cast %375 : vector<1x32xf32> to vector<1x32xf32>
    %377 = vector.broadcast %376 : vector<1x32xf32> to vector<64x32xf32>
    %378 = arith.mulf %377, %374 : vector<64x32xf32>
    %379 = arith.addf %368, %378 : vector<64x32xf32>
    %c3_111 = arith.constant 3 : index
    %c0_112 = arith.constant 0 : index
    %380 = vector.load %arg7[%c3_111, %c0_112] : memref<4x32xf32, #tpu.memory_space<vmem>>, vector<1x32xf32>
    %381 = vector.broadcast %380 : vector<1x32xf32> to vector<64x32xf32>
    %382 = arith.addf %379, %381 : vector<64x32xf32>
    %383 = arith.truncf %382 : vector<64x32xf32> to vector<64x32xbf16>
    %c3_113 = arith.constant 3 : index
    %c0_114 = arith.constant 0 : index
    %c0_115 = arith.constant 0 : index
    %384 = vector.load %arg8[%c3_113, %c0_114, %c0_115] : memref<4x32x32xbf16, #tpu.memory_space<vmem>>, vector<1x32x32xbf16>
    %385 = vector.shape_cast %384 : vector<1x32x32xbf16> to vector<32x32xbf16>
    %cst_116 = arith.constant dense<0.000000e+00> : vector<64x32xf32>
    %386 = tpu.matmul %383, %385, %cst_116 {dimension_numbers = #tpu.dot_dimension_numbers<[1], [0], [0], [1], [0, 0, 1, 1], [], []>} : vector<64x32xbf16>, vector<32x32xbf16>, vector<64x32xf32> -> vector<64x32xf32>
    %c3_117 = arith.constant 3 : index
    %c0_118 = arith.constant 0 : index
    %387 = vector.load %arg9[%c3_117, %c0_118] : memref<4x32xf32, #tpu.memory_space<vmem>>, vector<1x32xf32>
    %388 = vector.broadcast %387 : vector<1x32xf32> to vector<64x32xf32>
    %389 = arith.addf %386, %388 : vector<64x32xf32>
    %c3_119 = arith.constant 3 : index
    %c0_120 = arith.constant 0 : index
    %390 = vector.load %arg10[%c3_119, %c0_120] : memref<4x32xf32, #tpu.memory_space<vmem>>, vector<1x32xf32>
    %c3_121 = arith.constant 3 : index
    %c0_122 = arith.constant 0 : index
    %391 = vector.load %arg11[%c3_121, %c0_122] : memref<4x32xf32, #tpu.memory_space<vmem>>, vector<1x32xf32>
    %cst_123 = arith.constant dense<0.000000e+00> : vector<64xf32>
    %392 = vector.multi_reduction <add>, %389, %cst_123 [1] : vector<64x32xf32> to vector<64xf32>
    %393 = vector.shape_cast %392 : vector<64xf32> to vector<64x1xf32>
    %cst_124 = arith.constant 3.200000e+01 : f32
    %394 = vector.broadcast %cst_124 : f32 to vector<64x1xf32>
    %395 = arith.divf %393, %394 : vector<64x1xf32>
    %396 = vector.broadcast %395 : vector<64x1xf32> to vector<64x32xf32>
    %397 = arith.subf %389, %396 : vector<64x32xf32>
    %398 = arith.mulf %397, %397 : vector<64x32xf32>
    %cst_125 = arith.constant dense<0.000000e+00> : vector<64xf32>
    %399 = vector.multi_reduction <add>, %398, %cst_125 [1] : vector<64x32xf32> to vector<64xf32>
    %400 = vector.shape_cast %399 : vector<64xf32> to vector<64x1xf32>
    %cst_126 = arith.constant 3.200000e+01 : f32
    %401 = vector.broadcast %cst_126 : f32 to vector<64x1xf32>
    %402 = arith.divf %400, %401 : vector<64x1xf32>
    %403 = vector.broadcast %395 : vector<64x1xf32> to vector<64x32xf32>
    %404 = arith.subf %389, %403 : vector<64x32xf32>
    %cst_127 = arith.constant 9.99999974E-6 : f32
    %405 = vector.broadcast %cst_127 : f32 to vector<64x1xf32>
    %406 = arith.addf %402, %405 : vector<64x1xf32>
    %407 = math.rsqrt %406 : vector<64x1xf32>
    %408 = vector.broadcast %407 : vector<64x1xf32> to vector<64x32xf32>
    %409 = arith.mulf %404, %408 : vector<64x32xf32>
    %410 = vector.broadcast %390 : vector<1x32xf32> to vector<64x32xf32>
    %411 = arith.mulf %409, %410 : vector<64x32xf32>
    %412 = vector.broadcast %391 : vector<1x32xf32> to vector<64x32xf32>
    %413 = arith.addf %411, %412 : vector<64x32xf32>
    %cst_128 = arith.constant 0.000000e+00 : f32
    %414 = vector.broadcast %cst_128 : f32 to vector<64x32xf32>
    %415 = arith.maximumf %413, %414 : vector<64x32xf32>
    %416 = arith.addf %415, %348 : vector<64x32xf32>
    %417 = arith.truncf %416 : vector<64x32xf32> to vector<64x32xbf16>
    %c0_129 = arith.constant 0 : index
    %c0_130 = arith.constant 0 : index
    %418 = vector.load %arg12[%c0_129, %c0_130] : memref<32x8xbf16, #tpu.memory_space<vmem>>, vector<32x8xbf16>
    %cst_131 = arith.constant dense<0.000000e+00> : vector<64x8xf32>
    %419 = tpu.matmul %417, %418, %cst_131 {dimension_numbers = #tpu.dot_dimension_numbers<[1], [0], [0], [1], [0, 0, 1, 1], [], []>} : vector<64x32xbf16>, vector<32x8xbf16>, vector<64x8xf32> -> vector<64x8xf32>
    %c0_132 = arith.constant 0 : index
    %c0_133 = arith.constant 0 : index
    %420 = vector.load %arg13[%c0_132, %c0_133] : memref<1x8xf32, #tpu.memory_space<vmem>>, vector<1x8xf32>
    %421 = vector.broadcast %420 : vector<1x8xf32> to vector<64x8xf32>
    %422 = arith.addf %419, %421 : vector<64x8xf32>
    %c0_134 = arith.constant 0 : index
    %c0_135 = arith.constant 0 : index
    %423 = vector.load %arg14[%c0_134, %c0_135] : memref<1x8xf32, #tpu.memory_space<vmem>>, vector<1x8xf32>
    %c0_136 = arith.constant 0 : index
    %c0_137 = arith.constant 0 : index
    %424 = vector.load %arg15[%c0_136, %c0_137] : memref<1x8xf32, #tpu.memory_space<vmem>>, vector<1x8xf32>
    %cst_138 = arith.constant dense<0.000000e+00> : vector<64xf32>
    %425 = vector.multi_reduction <add>, %422, %cst_138 [1] : vector<64x8xf32> to vector<64xf32>
    %426 = vector.shape_cast %425 : vector<64xf32> to vector<64x1xf32>
    %cst_139 = arith.constant 8.000000e+00 : f32
    %427 = vector.broadcast %cst_139 : f32 to vector<64x1xf32>
    %428 = arith.divf %426, %427 : vector<64x1xf32>
    %429 = vector.broadcast %428 : vector<64x1xf32> to vector<64x8xf32>
    %430 = arith.subf %422, %429 : vector<64x8xf32>
    %431 = arith.mulf %430, %430 : vector<64x8xf32>
    %cst_140 = arith.constant dense<0.000000e+00> : vector<64xf32>
    %432 = vector.multi_reduction <add>, %431, %cst_140 [1] : vector<64x8xf32> to vector<64xf32>
    %433 = vector.shape_cast %432 : vector<64xf32> to vector<64x1xf32>
    %cst_141 = arith.constant 8.000000e+00 : f32
    %434 = vector.broadcast %cst_141 : f32 to vector<64x1xf32>
    %435 = arith.divf %433, %434 : vector<64x1xf32>
    %436 = vector.broadcast %428 : vector<64x1xf32> to vector<64x8xf32>
    %437 = arith.subf %422, %436 : vector<64x8xf32>
    %cst_142 = arith.constant 9.99999974E-6 : f32
    %438 = vector.broadcast %cst_142 : f32 to vector<64x1xf32>
    %439 = arith.addf %435, %438 : vector<64x1xf32>
    %440 = math.rsqrt %439 : vector<64x1xf32>
    %441 = vector.broadcast %440 : vector<64x1xf32> to vector<64x8xf32>
    %442 = arith.mulf %437, %441 : vector<64x8xf32>
    %443 = vector.broadcast %423 : vector<1x8xf32> to vector<64x8xf32>
    %444 = arith.mulf %442, %443 : vector<64x8xf32>
    %445 = vector.broadcast %424 : vector<1x8xf32> to vector<64x8xf32>
    %446 = arith.addf %444, %445 : vector<64x8xf32>
    %447 = vector.extract_strided_slice %446 {offsets = [0, 0], sizes = [16, 8], strides = [1, 1]} : vector<64x8xf32> to vector<16x8xf32>
    %448 = vector.extract_strided_slice %446 {offsets = [16, 0], sizes = [16, 8], strides = [1, 1]} : vector<64x8xf32> to vector<16x8xf32>
    %449 = vector.extract_strided_slice %446 {offsets = [32, 0], sizes = [16, 8], strides = [1, 1]} : vector<64x8xf32> to vector<16x8xf32>
    %450 = vector.extract_strided_slice %446 {offsets = [48, 0], sizes = [16, 8], strides = [1, 1]} : vector<64x8xf32> to vector<16x8xf32>
    %451 = tpu.concatenate %447, %448, %449, %450 in 1 : vector<16x8xf32>, vector<16x8xf32>, vector<16x8xf32>, vector<16x8xf32> -> vector<16x32xf32>
    %cst_143 = arith.constant 0.000000e+00 : f32
    %452 = vector.broadcast %cst_143 : f32 to vector<16x96xf32>
    %453 = tpu.concatenate %451, %452 in 1 : vector<16x32xf32>, vector<16x96xf32> -> vector<16x128xf32>
    %c0_144 = arith.constant 0 : index
    %c0_145 = arith.constant 0 : index
    %454 = vector.load %arg16[%c0_144, %c0_145] : memref<16x128xf32, #tpu.memory_space<vmem>>, vector<16x128xf32>
    tpu.vector_store %arg16[%c0_144, %c0_145], %453 {strides = array<i32>} : memref<16x128xf32, #tpu.memory_space<vmem>>, vector<16x128xf32>,
    return
  }
  func.func @transform_0(%arg0: i32) -> (i32, i32) {
    %c0_i32 = arith.constant 0 : i32
    %c0_i32_0 = arith.constant 0 : i32
    return %arg0, %c0_i32 : i32, i32
  }
  func.func @transform_1(%arg0: i32) -> (i32, i32) {
    %c0_i32 = arith.constant 0 : i32
    %c0_i32_0 = arith.constant 0 : i32
    %c0_i32_1 = arith.constant 0 : i32
    return %c0_i32, %c0_i32_0 : i32, i32
  }
  func.func @transform_2(%arg0: i32) -> (i32, i32) {
    %c0_i32 = arith.constant 0 : i32
    %c0_i32_0 = arith.constant 0 : i32
    %c0_i32_1 = arith.constant 0 : i32
    return %c0_i32, %c0_i32_0 : i32, i32
  }
  func.func @transform_3(%arg0: i32) -> (i32, i32) {
    %c0_i32 = arith.constant 0 : i32
    %c0_i32_0 = arith.constant 0 : i32
    %c0_i32_1 = arith.constant 0 : i32
    return %c0_i32, %c0_i32_0 : i32, i32
  }
  func.func @transform_4(%arg0: i32) -> (i32, i32) {
    %c0_i32 = arith.constant 0 : i32
    %c0_i32_0 = arith.constant 0 : i32
    %c0_i32_1 = arith.constant 0 : i32
    return %c0_i32, %c0_i32_0 : i32, i32
  }
  func.func @transform_5(%arg0: i32) -> (i32, i32) {
    %c0_i32 = arith.constant 0 : i32
    %c0_i32_0 = arith.constant 0 : i32
    %c0_i32_1 = arith.constant 0 : i32
    return %c0_i32, %c0_i32_0 : i32, i32
  }
  func.func @transform_6(%arg0: i32) -> (i32, i32) {
    %c0_i32 = arith.constant 0 : i32
    %c0_i32_0 = arith.constant 0 : i32
    %c0_i32_1 = arith.constant 0 : i32
    return %c0_i32, %c0_i32_0 : i32, i32
  }
  func.func @transform_7(%arg0: i32) -> (i32, i32, i32) {
    %c0_i32 = arith.constant 0 : i32
    %c0_i32_0 = arith.constant 0 : i32
    %c0_i32_1 = arith.constant 0 : i32
    %c0_i32_2 = arith.constant 0 : i32
    return %c0_i32, %c0_i32_0, %c0_i32_1 : i32, i32, i32
  }
  func.func @transform_8(%arg0: i32) -> (i32, i32) {
    %c0_i32 = arith.constant 0 : i32
    %c0_i32_0 = arith.constant 0 : i32
    %c0_i32_1 = arith.constant 0 : i32
    return %c0_i32, %c0_i32_0 : i32, i32
  }
  func.func @transform_9(%arg0: i32) -> (i32, i32) {
    %c0_i32 = arith.constant 0 : i32
    %c0_i32_0 = arith.constant 0 : i32
    %c0_i32_1 = arith.constant 0 : i32
    return %c0_i32, %c0_i32_0 : i32, i32
  }
  func.func @transform_10(%arg0: i32) -> (i32, i32) {
    %c0_i32 = arith.constant 0 : i32
    %c0_i32_0 = arith.constant 0 : i32
    %c0_i32_1 = arith.constant 0 : i32
    return %c0_i32, %c0_i32_0 : i32, i32
  }
  func.func @transform_11(%arg0: i32) -> (i32, i32) {
    %c0_i32 = arith.constant 0 : i32
    %c0_i32_0 = arith.constant 0 : i32
    %c0_i32_1 = arith.constant 0 : i32
    return %c0_i32, %c0_i32_0 : i32, i32
  }
  func.func @transform_12(%arg0: i32) -> (i32, i32) {
    %c0_i32 = arith.constant 0 : i32
    %c0_i32_0 = arith.constant 0 : i32
    %c0_i32_1 = arith.constant 0 : i32
    return %c0_i32, %c0_i32_0 : i32, i32
  }
  func.func @transform_13(%arg0: i32) -> (i32, i32) {
    %c0_i32 = arith.constant 0 : i32
    %c0_i32_0 = arith.constant 0 : i32
    %c0_i32_1 = arith.constant 0 : i32
    return %c0_i32, %c0_i32_0 : i32, i32
  }
  func.func @transform_14(%arg0: i32) -> (i32, i32) {
    %c0_i32 = arith.constant 0 : i32
    %c0_i32_0 = arith.constant 0 : i32
    %c0_i32_1 = arith.constant 0 : i32
    return %c0_i32, %c0_i32_0 : i32, i32
  }
  func.func @transform_15(%arg0: i32) -> (i32, i32) {
    %c0_i32 = arith.constant 0 : i32
    %c0_i32_0 = arith.constant 0 : i32
    return %arg0, %c0_i32 : i32, i32
  }
}

</mosaic_0001>

<llo_original>
// kernel: tpu_custom_call.1
$region0: #{tpu_custom_call.1}
  #allocation0 [shape = 'u32[]', space=smem, size = 0x4, offset = 0x4, fixed_abs, tag = 'smem constant byte address 0x4 - core index']
  #allocation1 [shape = 'u32[144,128]{1,0:T(1,128)}', space=vmem, size = 0x12000, scoped, tag = 'internal scratch']
  %s0 = inlined_call_operand.vmem [shape: f32[16,16], index: 0, kind: input, shape index: {}]
  %s1 = inlined_call_operand.hbm [shape: bf16[16,32], index: 1, kind: input, shape index: {}]
  %s2 = inlined_call_operand.hbm [shape: f32[1,32], index: 2, kind: input, shape index: {}]
  %s3 = inlined_call_operand.hbm [shape: bf16[32,256], index: 3, kind: input, shape index: {}]
  %s4 = inlined_call_operand.hbm [shape: f32[1,32], index: 4, kind: input, shape index: {}]
  %s5 = inlined_call_operand.hbm [shape: f32[12,32], index: 5, kind: input, shape index: {}]
  %s6 = inlined_call_operand.vmem [shape: f32[4,32], index: 6, kind: input, shape index: {}]
  %s7 = inlined_call_operand.hbm [shape: bf16[4,32,32], index: 7, kind: input, shape index: {}]
  %s8 = inlined_call_operand.vmem [shape: f32[4,32], index: 8, kind: input, shape index: {}]
  %s9 = inlined_call_operand.vmem [shape: f32[4,32], index: 9, kind: input, shape index: {}]
  %s10 = inlined_call_operand.vmem [shape: f32[4,32], index: 10, kind: input, shape index: {}]
  %s11 = inlined_call_operand.vmem [shape: bf16[32,8], index: 11, kind: input, shape index: {}]
  %s12 = inlined_call_operand.vmem [shape: f32[1,8], index: 12, kind: input, shape index: {}]
  %s13 = inlined_call_operand.vmem [shape: f32[1,8], index: 13, kind: input, shape index: {}]
  %s14 = inlined_call_operand.vmem [shape: f32[1,8], index: 14, kind: input, shape index: {}]
  %s15 = inlined_call_operand.hbm [shape: f32[16,128], index: 15, kind: output, shape index: {}]
  %s16 = sld [smem:[#allocation0]]
  $region94: #{tpu_custom_call.1} parent=0
    _
  %s18 = ssub.s32 1, %s16
  %s19 = scalar_select 0, %s18, %s16
  $region1: #{tpu_custom_call.1} parent=0
    #allocation2 [shape = 'u8[4096]{0}', space=vmem, size = 0x1000, scoped, tag = 'input window, operand 1, single buffered']
    #allocation3 [shape = 's32[1]{0}', space=sflag, size = 0x4, scoped, tag = 'scoped memory for tpu_custom_call.1']
    #allocation4 [shape = 's32[1]{0}', space=sflag, size = 0x4, scoped, tag = 'scoped memory for tpu_custom_call.1']
    #allocation5 [shape = 'u8[512]{0}', space=vmem, size = 0x400, scoped, tag = 'input window, operand 2, single buffered']
    #allocation6 [shape = 's32[1]{0}', space=sflag, size = 0x4, scoped, tag = 'scoped memory for tpu_custom_call.1']
    #allocation7 [shape = 'u8[16384]{0}', space=vmem, size = 0x4000, scoped, tag = 'input window, operand 3, single buffered']
    #allocation8 [shape = 'u8[512]{0}', space=vmem, size = 0x400, scoped, tag = 'input window, operand 4, single buffered']
    #allocation9 [shape = 's32[1]{0}', space=sflag, size = 0x4, scoped, tag = 'scoped memory for tpu_custom_call.1']
    #allocation10 [shape = 'u8[8192]{0}', space=vmem, size = 0x2000, scoped, tag = 'input window, operand 5, single buffered']
    #allocation11 [shape = 'u8[32768]{0}', space=vmem, size = 0x8000, scoped, tag = 'input window, operand 7, single buffered']
    #allocation12 [shape = 's32[1]{0}', space=sflag, size = 0x4, scoped, tag = 'scoped memory for tpu_custom_call.1']
    #allocation13 [shape = 'u8[8192]{0}', space=vmem, size = 0x2000, scoped, tag = 'output window, operand 0, single buffered']
    %20 = vsyncpa [#allocation3], 0
    %21 = vsyncpa [#allocation6], 0
    %22 = vsyncpa [#allocation9], 0
    %23 = vsyncpa [#allocation12], 0
    %24 = vsyncpa [#allocation4], 0
    // Predicated region
    $region2: #{tpu_custom_call.1} parent=1 // pred_check
      _
    $region3: #{tpu_custom_call.1} parent=1 // pred_check_branch
      %26 = sbr.rel (0) target = $region5
    $region4: #{tpu_custom_call.1} parent=1 // pred_region
      _
    $region5: #{tpu_custom_call.1} parent=1 // pred_fallthru
      _
    // Predicated region
    $region6: #{tpu_custom_call.1} parent=1 // pred_check
      _
    $region7: #{tpu_custom_call.1} parent=1 // pred_check_branch
      %28 = sbr.rel (0) target = $region9
    $region8: #{tpu_custom_call.1} parent=1 // pred_region
      %s30 = ssub.s32 128, 128
      %31 = vsyncadd [#allocation3], %s30
      %s32 = sshll.u32 [#allocation2], 4
      %s33 = int_to_ptr.vmem [resolvable:$true] %s32
      %38 = dma.hbm_to_vmem [thread:$0]  %s1, 128, %s33, [#allocation3], 64, 64, 4
    $region9: #{tpu_custom_call.1} parent=1 // pred_fallthru
      _
    // Predicated region
    $region10: #{tpu_custom_call.1} parent=1 // pred_check
      _
    $region11: #{tpu_custom_call.1} parent=1 // pred_check_branch
      %40 = sbr.rel (0) target = $region13
    $region12: #{tpu_custom_call.1} parent=1 // pred_region
      %s42 = ssub.s32 16, 16
      %43 = vsyncadd [#allocation6], %s42
      %s45 = sshll.u32 [#allocation5], 4
      %s46 = int_to_ptr.vmem [resolvable:$true] %s45
      %48 = dma.hbm_to_vmem [thread:$0]  %s2, 16, %s46, [#allocation6]
    $region13: #{tpu_custom_call.1} parent=1 // pred_fallthru
      _
    // Predicated region
    $region14: #{tpu_custom_call.1} parent=1 // pred_check
      _
    $region15: #{tpu_custom_call.1} parent=1 // pred_check_branch
      %50 = sbr.rel (0) target = $region17
    $region16: #{tpu_custom_call.1} parent=1 // pred_region
      %s52 = ssub.s32 512, 512
      %53 = vsyncadd [#allocation6], %s52
      %s54 = sshll.u32 [#allocation7], 4
      %s55 = int_to_ptr.vmem [resolvable:$true] %s54
      %60 = dma.hbm_to_vmem [thread:$0]  %s3, 512, %s55, [#allocation6], 128, 128, 8
    $region17: #{tpu_custom_call.1} parent=1 // pred_fallthru
      _
    // Predicated region
    $region18: #{tpu_custom_call.1} parent=1 // pred_check
      _
    $region19: #{tpu_custom_call.1} parent=1 // pred_check_branch
      %62 = sbr.rel (0) target = $region21
    $region20: #{tpu_custom_call.1} parent=1 // pred_region
      %s64 = ssub.s32 16, 16
      %65 = vsyncadd [#allocation9], %s64
      %s67 = sshll.u32 [#allocation8], 4
      %s68 = int_to_ptr.vmem [resolvable:$true] %s67
      %70 = dma.hbm_to_vmem [thread:$0]  %s4, 16, %s68, [#allocation9]
    $region21: #{tpu_custom_call.1} parent=1 // pred_fallthru
      _
    // Predicated region
    $region22: #{tpu_custom_call.1} parent=1 // pred_check
      _
    $region23: #{tpu_custom_call.1} parent=1 // pred_check_branch
      %72 = sbr.rel (0) target = $region25
    $region24: #{tpu_custom_call.1} parent=1 // pred_region
      %s74 = ssub.s32 256, 256
      %75 = vsyncadd [#allocation9], %s74
      %s76 = sshll.u32 [#allocation10], 4
      %s77 = int_to_ptr.vmem [resolvable:$true] %s76
      %82 = dma.hbm_to_vmem [thread:$0]  %s5, 256, %s77, [#allocation9], 128, 128, 8
    $region25: #{tpu_custom_call.1} parent=1 // pred_fallthru
      _
    // Predicated region
    $region26: #{tpu_custom_call.1} parent=1 // pred_check
      _
    $region27: #{tpu_custom_call.1} parent=1 // pred_check_branch
      %84 = sbr.rel (0) target = $region29
    $region28: #{tpu_custom_call.1} parent=1 // pred_region
      _
    $region29: #{tpu_custom_call.1} parent=1 // pred_fallthru
      _
    // Predicated region
    $region30: #{tpu_custom_call.1} parent=1 // pred_check
      _
    $region31: #{tpu_custom_call.1} parent=1 // pred_check_branch
      %86 = sbr.rel (0) target = $region33
    $region32: #{tpu_custom_call.1} parent=1 // pred_region
      %s88 = ssub.s32 1024, 1024
      %89 = vsyncadd [#allocation12], %s88
      %s90 = sshll.u32 [#allocation11], 4
      %s91 = int_to_ptr.vmem [resolvable:$true] %s90
      %96 = dma.hbm_to_vmem [thread:$0]  %s7, 1024, %s91, [#allocation12], 64, 64, 4
    $region33: #{tpu_custom_call.1} parent=1 // pred_fallthru
      _
    // Predicated region
    $region34: #{tpu_custom_call.1} parent=1 // pred_check
      _
    $region35: #{tpu_custom_call.1} parent=1 // pred_check_branch
      %98 = sbr.rel (0) target = $region37
    $region36: #{tpu_custom_call.1} parent=1 // pred_region
      _
    $region37: #{tpu_custom_call.1} parent=1 // pred_fallthru
      _
    // Predicated region
    $region38: #{tpu_custom_call.1} parent=1 // pred_check
      _
    $region39: #{tpu_custom_call.1} parent=1 // pred_check_branch
      %100 = sbr.rel (0) target = $region41
    $region40: #{tpu_custom_call.1} parent=1 // pred_region
      _
    $region41: #{tpu_custom_call.1} parent=1 // pred_fallthru
      _
    // Predicated region
    $region42: #{tpu_custom_call.1} parent=1 // pred_check
      _
    $region43: #{tpu_custom_call.1} parent=1 // pred_check_branch
      %102 = sbr.rel (0) target = $region45
    $region44: #{tpu_custom_call.1} parent=1 // pred_region
      _
    $region45: #{tpu_custom_call.1} parent=1 // pred_fallthru
      _
    // Predicated region
    $region46: #{tpu_custom_call.1} parent=1 // pred_check
      _
    $region47: #{tpu_custom_call.1} parent=1 // pred_check_branch
      %104 = sbr.rel (0) target = $region49
    $region48: #{tpu_custom_call.1} parent=1 // pred_region
      _
    $region49: #{tpu_custom_call.1} parent=1 // pred_fallthru
      _
    // Predicated region
    $region50: #{tpu_custom_call.1} parent=1 // pred_check
      _
    $region51: #{tpu_custom_call.1} parent=1 // pred_check_branch
      %106 = sbr.rel (0) target = $region53
    $region52: #{tpu_custom_call.1} parent=1 // pred_region
      _
    $region53: #{tpu_custom_call.1} parent=1 // pred_fallthru
      _
    // Predicated region
    $region54: #{tpu_custom_call.1} parent=1 // pred_check
      _
    $region55: #{tpu_custom_call.1} parent=1 // pred_check_branch
      %108 = sbr.rel (0) target = $region57
    $region56: #{tpu_custom_call.1} parent=1 // pred_region
      _
    $region57: #{tpu_custom_call.1} parent=1 // pred_fallthru
      _
    // Predicated region
    $region58: #{tpu_custom_call.1} parent=1 // pred_check
      _
    $region59: #{tpu_custom_call.1} parent=1 // pred_check_branch
      %110 = sbr.rel (0) target = $region61
    $region60: #{tpu_custom_call.1} parent=1 // pred_region
      _
    $region61: #{tpu_custom_call.1} parent=1 // pred_fallthru
      _
    // Predicated region
    $region62: #{tpu_custom_call.1} parent=1 // pred_check
      _
    $region63: #{tpu_custom_call.1} parent=1 // pred_check_branch
      %112 = sbr.rel (0) target = $region65
    $region64: #{tpu_custom_call.1} parent=1 // pred_region
      %113 = dma.done [#allocation3], 128
    $region65: #{tpu_custom_call.1} parent=1 // pred_fallthru
      _
    // Predicated region
    $region66: #{tpu_custom_call.1} parent=1 // pred_check
      _
    $region67: #{tpu_custom_call.1} parent=1 // pred_check_branch
      %115 = sbr.rel (0) target = $region69
    $region68: #{tpu_custom_call.1} parent=1 // pred_region
      %116 = dma.done [#allocation6], 16
    $region69: #{tpu_custom_call.1} parent=1 // pred_fallthru
      _
    // Predicated region
    $region70: #{tpu_custom_call.1} parent=1 // pred_check
      _
    $region71: #{tpu_custom_call.1} parent=1 // pred_check_branch
      %118 = sbr.rel (0) target = $region73
    $region72: #{tpu_custom_call.1} parent=1 // pred_region
      %119 = dma.done [#allocation6], 512
    $region73: #{tpu_custom_call.1} parent=1 // pred_fallthru
      _
    // Predicated region
    $region74: #{tpu_custom_call.1} parent=1 // pred_check
      _
    $region75: #{tpu_custom_call.1} parent=1 // pred_check_branch
      %121 = sbr.rel (0) target = $region77
    $region76: #{tpu_custom_call.1} parent=1 // pred_region
      %122 = dma.done [#allocation9], 16
    $region77: #{tpu_custom_call.1} parent=1 // pred_fallthru
      _
    // Predicated region
    $region78: #{tpu_custom_call.1} parent=1 // pred_check
      _
    $region79: #{tpu_custom_call.1} parent=1 // pred_check_branch
      %124 = sbr.rel (0) target = $region81
    $region80: #{tpu_custom_call.1} parent=1 // pred_region
      %125 = dma.done [#allocation9], 256
    $region81: #{tpu_custom_call.1} parent=1 // pred_fallthru
      _
    // Predicated region
    $region82: #{tpu_custom_call.1} parent=1 // pred_check
      _
    $region83: #{tpu_custom_call.1} parent=1 // pred_check_branch
      %127 = sbr.rel (0) target = $region85
    $region84: #{tpu_custom_call.1} parent=1 // pred_region
      %128 = dma.done [#allocation12], 1024
    $region85: #{tpu_custom_call.1} parent=1 // pred_fallthru
      _
    %v130 = vlaneseq
    %v131 = vshrl.u32 %v130, 7
    %v132 = vadd.s32 %v131, 8
    %vm133 = vcmp.lt.s32.totalorder %v131, 0
    %v134 = vsub.s32 0, %v131
    %v135 = vsel %vm133, %v134, %v131
    %v136 = vshrl.u32 %v135, 3
    %v137 = vand.u32 %v135, 7
    %v138 = vsub.s32 0, %v137
    %v139 = vsel %vm133, %v138, %v137
    %vm140 = vcmp.lt.s32.totalorder %v132, 0
    %v141 = vsub.s32 0, %v132
    %v142 = vsel %vm140, %v141, %v132
    %v143 = vshrl.u32 %v142, 3
    %v144 = vand.u32 %v142, 7
    %v145 = vsub.s32 0, %v144
    %v146 = vsel %vm140, %v145, %v144
    %vm147 = vcmp.ne.s32.totalorder %v139, 0
    %vm148 = vcmp.ne.s32.totalorder %v146, 0
    %vm149 = vcmp.lt.s32.totalorder %v139, 0
    %vm150 = vcmp.lt.s32.totalorder %v146, 0
    %vm151 = vmand %vm149, %vm147
    %vm152 = vmand %vm150, %vm148
    %v153 = vadd.s32 %v139, 8
    %v154 = vadd.s32 %v146, 8
    %v155 = vsel %vm151, %v153, %v139
    %v156 = vsel %vm152, %v154, %v146
    %v157 = vadd.s32 %v155, 4294967295
    %v158 = vadd.s32 %v156, 4294967295
    %vm159 = vcmp.ge.s32.totalorder %v157, 0
    %vm160 = vcmp.ge.s32.totalorder %v158, 0
    %vm161 = vcmp.lt.s32.totalorder %v157, 8
    %vm162 = vcmp.lt.s32.totalorder %v158, 8
    %vm163 = vmand %vm159, %vm161
    %vm164 = vmand %vm160, %vm162
    %v165 = vsel %vm163, 1, 0
    %v166 = vsel %vm164, 1, 0
    %v167 = vcvt.s32.f32 %v165
    %v168 = vcvt.s32.f32 %v166
    %v169 = vadd.s32 %v155, 1
    %v170 = vadd.s32 %v156, 1
    %vm171 = vcmp.ge.s32.totalorder %v169, 0
    %vm172 = vcmp.ge.s32.totalorder %v170, 0
    %vm173 = vcmp.lt.s32.totalorder %v169, 8
    %vm174 = vcmp.lt.s32.totalorder %v170, 8
    %vm175 = vmand %vm171, %vm173
    %vm176 = vmand %vm172, %vm174
    %v177 = vsel %vm175, 1, 0
    %v178 = vsel %vm176, 1, 0
    %v179 = vcvt.s32.f32 %v177
    %v180 = vcvt.s32.f32 %v178
    %v181 = vld [vmem:[%s0] sm:$0xff]
    %v182 = vld [vmem:[%s0 + $0x8] sm:$0xff]
    %v183 = vpack.c.bf16 %v182, %v181
    %v184 = vld [vmem:[#allocation2] sm:$0xf]
    %v185 = vld [vmem:[#allocation2 + $0x4] sm:$0xf]
    %v186 = vld [vmem:[#allocation5] sm:$0x1]
    %v188 = vlaneseq
    %v189 = vshrl.u32 %v188, 7
    %v190 = vsub.s32 0, %v189
    %v191 = vrot.slane %v186, %v190
    %v195 = vunpack.c.l.b16 %v184
    %v196 = vunpack.c.l.b16 %v185
    %v197 = vpack.c.b16 %v196, %v195
    %vm199 = vcmask 130048
    %v201 = vsel %vm199, %v183, 0
    %203 = vmatprep.subr.bf16.mxu0 0
    %204 = vmatpush1.bf16.msra.mxu0 0
    %205 = vmatprep.subr.bf16.mxu0 0
    %206 = vmatpush1.bf16.msra.mxu0 0
    %207 = vmatprep.subr.bf16.mxu0 0
    %208 = vmatpush1.bf16.msra.mxu0 0
    %209 = vmatprep.subr.bf16.mxu0 0
    %210 = vmatpush1.bf16.msra.mxu0 0
    %211 = vmatprep.subr.bf16.mxu0 0
    %212 = vmatpush1.bf16.msra.mxu0 0
    %213 = vmatprep.subr.bf16.mxu0 0
    %214 = vmatpush1.bf16.msra.mxu0 0
    %215 = vmatprep.subr.bf16.mxu0 0
    %216 = vmatpush1.bf16.msra.mxu0 0
    %217 = vmatprep.subr.bf16.mxu0 0
    %218 = vmatpush1.bf16.msra.mxu0 %v197
    %219 = vmatprep.subr.bf16.mxu0 0
    %220 = vmatpush2.bf16.msra.mxu0 0
    %221 = vmatprep.subr.bf16.mxu0 0
    %222 = vmatpush2.bf16.msra.mxu0 0
    %223 = vmatprep.subr.bf16.mxu0 0
    %224 = vmatpush2.bf16.msra.mxu0 0
    %225 = vmatprep.subr.bf16.mxu0 0
    %226 = vmatpush2.bf16.msra.mxu0 0
    %227 = vmatprep.subr.bf16.mxu0 0
    %228 = vmatpush2.bf16.msra.mxu0 0
    %229 = vmatprep.subr.bf16.mxu0 0
    %230 = vmatpush2.bf16.msra.mxu0 0
    %231 = vmatprep.subr.bf16.mxu0 0
    %232 = vmatpush2.bf16.msra.mxu0 0
    %233 = vmatprep.subr.bf16.mxu0 0
    %234 = vmatpush2.bf16.msra.mxu0 0
    %235 = vmatprep.mubr.bf16.mxu0 0
    %236 = vmatmul.mubr.bf16.gmra.mxu0 %v201
    %v237 = vpop.f32.mrf.mxu0
    %v238 = vadd.f32 %v191, %v237
    %v239 = vpop.f32.mrf.mxu0
    %v240 = vpop.f32.mrf.mxu0
    %v241 = vadd.f32 %v191, %v240
    %v242 = vpop.f32.mrf.mxu0
    %243 = vdwg.mxu0
    %v244 = vpack.c.bf16 %v241, %v238
    %v245 = vld [vmem:[#allocation7] sm:$0xff]
    %v246 = vld [vmem:[#allocation7 + $0x8] sm:$0xff]
    %v247 = vld [vmem:[#allocation7 + $0x10] sm:$0xff]
    %v248 = vld [vmem:[#allocation7 + $0x18] sm:$0xff]
    %v253 = vunpack.c.l.b16 %v245
    %v254 = vunpack.c.h.b16 %v245
    %v255 = vunpack.c.l.b16 %v246
    %v256 = vunpack.c.h.b16 %v246
    %v257 = vunpack.c.l.b16 %v247
    %v258 = vunpack.c.h.b16 %v247
    %v259 = vunpack.c.l.b16 %v248
    %v260 = vunpack.c.h.b16 %v248
    %v261 = vpack.c.b16 %v255, %v253
    %v262 = vpack.c.b16 %v256, %v254
    %v263 = vpack.c.b16 %v259, %v257
    %v264 = vpack.c.b16 %v260, %v258
    %vm269 = vcmask 261120
    %v271 = vsel %vm269, %v244, 0
    %273 = vmatprep.subr.bf16.mxu0 0
    %274 = vmatpush1.bf16.msra.mxu0 0
    %275 = vmatprep.subr.bf16.mxu0 0
    %276 = vmatpush1.bf16.msra.mxu0 0
    %277 = vmatprep.subr.bf16.mxu0 0
    %278 = vmatpush1.bf16.msra.mxu0 0
    %279 = vmatprep.subr.bf16.mxu0 0
    %280 = vmatpush1.bf16.msra.mxu0 0
    %281 = vmatprep.subr.bf16.mxu0 0
    %282 = vmatpush1.bf16.msra.mxu0 0
    %283 = vmatprep.subr.bf16.mxu0 0
    %284 = vmatpush1.bf16.msra.mxu0 0
    %285 = vmatprep.subr.bf16.mxu0 %v264
    %286 = vmatpush1.bf16.msra.mxu0 %v263
    %287 = vmatprep.subr.bf16.mxu0 %v262
    %288 = vmatpush1.bf16.msra.mxu0 %v261
    %289 = vmatprep.subr.bf16.mxu0 0
    %290 = vmatpush2.bf16.msra.mxu0 0
    %291 = vmatprep.subr.bf16.mxu0 0
    %292 = vmatpush2.bf16.msra.mxu0 0
    %293 = vmatprep.subr.bf16.mxu0 0
    %294 = vmatpush2.bf16.msra.mxu0 0
    %295 = vmatprep.subr.bf16.mxu0 0
    %296 = vmatpush2.bf16.msra.mxu0 0
    %297 = vmatprep.subr.bf16.mxu0 0
    %298 = vmatpush2.bf16.msra.mxu0 0
    %299 = vmatprep.subr.bf16.mxu0 0
    %300 = vmatpush2.bf16.msra.mxu0 0
    %301 = vmatprep.subr.bf16.mxu0 0
    %302 = vmatpush2.bf16.msra.mxu0 0
    %303 = vmatprep.subr.bf16.mxu0 0
    %304 = vmatpush2.bf16.msra.mxu0 0
    %305 = vmatprep.mubr.bf16.mxu0 0
    %306 = vmatmul.mubr.bf16.gmra.mxu0 %v271
    %v307 = vpop.f32.mrf.mxu0
    %v308 = vadd.f32 0.0, %v307
    %v309 = vpop.f32.mrf.mxu0
    %v310 = vadd.f32 0.0, %v309
    %v311 = vpop.f32.mrf.mxu0
    %v312 = vadd.f32 0.0, %v311
    %v313 = vpop.f32.mrf.mxu0
    %v314 = vadd.f32 0.0, %v313
    %315 = vdwg.mxu0
    %v316 = vld [vmem:[#allocation8] sm:$0x1]
    %v318 = vlaneseq
    %v319 = vshrl.u32 %v318, 7
    %v320 = vsub.s32 0, %v319
    %v321 = vrot.slane %v316, %v320
    %vm325 = vcmask 1040384
    %v326 = vrot.slane %v310, 7
    %v327 = vrot.slane %v314, 7
    %v328 = vsel %vm325, %v326, %v327
    %329 = vrot.lane.b32.xlu0 %v326, 64
    %v330 = vpop.permute.xlu0 %329
    %331 = vrot.lane.b32.xlu0 %v328, 64
    %v332 = vpop.permute.xlu0 %331
    %v335 = vsel %vm325, 0.0, %v330
    %v336 = vmul.f32 %v335, %v167
    %v337 = vmul.f32 %v332, %v168
    %340 = vrot.lane.b32.xlu0 %v336, 64
    %v341 = vpop.permute.xlu0 %340
    %342 = vrot.lane.b32.xlu0 %v337, 64
    %v343 = vpop.permute.xlu0 %342
    %v346 = vadd.f32 %v308, %v341
    %v347 = vadd.f32 %v312, %v343
    %348 = vrot.lane.b32.xlu0 %v321, 64
    %v349 = vpop.permute.xlu0 %348
    %v351 = vadd.f32 %v346, %v349
    %v352 = vadd.f32 %v347, %v349
    %353 = vrot.lane.b32.xlu0 %v326, 32
    %v354 = vpop.permute.xlu0 %353
    %355 = vrot.lane.b32.xlu0 %v328, 32
    %v356 = vpop.permute.xlu0 %355
    %v359 = vsel %vm325, 0.0, %v354
    %v360 = vmul.f32 %v359, %v167
    %v361 = vmul.f32 %v356, %v168
    %364 = vrot.lane.b32.xlu0 %v360, 96
    %v365 = vpop.permute.xlu0 %364
    %366 = vrot.lane.b32.xlu0 %v361, 96
    %v367 = vpop.permute.xlu0 %366
    %v370 = vadd.f32 %v308, %v365
    %v371 = vadd.f32 %v312, %v367
    %372 = vrot.lane.b32.xlu0 %v321, 96
    %v373 = vpop.permute.xlu0 %372
    %v375 = vadd.f32 %v370, %v373
    %v376 = vadd.f32 %v371, %v373
    %vm379 = vcmask 1046528
    %v380 = vrot.slane %v308, 1
    %v381 = vrot.slane %v312, 1
    %v382 = vsel %vm379, %v380, %v381
    %v385 = vsel %vm379, %v381, 0.0
    %v386 = vmul.f32 %v382, %v179
    %v387 = vmul.f32 %v385, %v180
    %v388 = vadd.f32 %v310, %v386
    %v389 = vadd.f32 %v314, %v387
    %v390 = vadd.f32 %v388, %v321
    %v391 = vadd.f32 %v389, %v321
    %392 = vrot.lane.b32.xlu0 %v321, 32
    %v393 = vpop.permute.xlu0 %392
    %v395 = vadd.f32 %v388, %v393
    %v396 = vadd.f32 %v389, %v393
    %399 = vrot.lane.b32.xlu0 %v375, 96
    %v400 = vpop.permute.xlu0 %399
    %401 = vrot.lane.b32.xlu0 %v376, 96
    %v402 = vpop.permute.xlu0 %401
    %405 = vrot.lane.b32.xlu0 %v390, 64
    %v406 = vpop.permute.xlu0 %405
    %407 = vrot.lane.b32.xlu0 %v391, 64
    %v408 = vpop.permute.xlu0 %407
    %411 = vrot.lane.b32.xlu0 %v395, 32
    %v412 = vpop.permute.xlu0 %411
    %413 = vrot.lane.b32.xlu0 %v396, 32
    %v414 = vpop.permute.xlu0 %413
    %v417 = vrot.slane %v351, 7
    %v418 = vrot.slane %v352, 7
    %v419 = vsel %vm325, %v417, %v418
    %420 = vrot.lane.b32.xlu0 %v417, 64
    %v421 = vpop.permute.xlu0 %420
    %422 = vrot.lane.b32.xlu0 %v419, 64
    %v423 = vpop.permute.xlu0 %422
    %v426 = vsel %vm325, 0.0, %v421
    %v427 = vmul.f32 %v426, %v167
    %v428 = vmul.f32 %v423, %v168
    %v429 = vrot.slane %v400, 7
    %v430 = vrot.slane %v402, 7
    %v431 = vsel %vm325, %v429, %v430
    %432 = vrot.lane.b32.xlu0 %v429, 64
    %v433 = vpop.permute.xlu0 %432
    %434 = vrot.lane.b32.xlu0 %v431, 64
    %v435 = vpop.permute.xlu0 %434
    %v438 = vsel %vm325, 0.0, %v433
    %v439 = vmul.f32 %v438, %v167
    %v440 = vmul.f32 %v435, %v168
    %v441 = vrot.slane %v406, 7
    %v442 = vrot.slane %v408, 7
    %v443 = vsel %vm325, %v441, %v442
    %444 = vrot.lane.b32.xlu0 %v441, 64
    %v445 = vpop.permute.xlu0 %444
    %446 = vrot.lane.b32.xlu0 %v443, 64
    %v447 = vpop.permute.xlu0 %446
    %v450 = vsel %vm325, 0.0, %v445
    %v451 = vmul.f32 %v450, %v167
    %v452 = vmul.f32 %v447, %v168
    %v453 = vrot.slane %v412, 7
    %v454 = vrot.slane %v414, 7
    %v455 = vsel %vm325, %v453, %v454
    %456 = vrot.lane.b32.xlu0 %v453, 64
    %v457 = vpop.permute.xlu0 %456
    %458 = vrot.lane.b32.xlu0 %v455, 64
    %v459 = vpop.permute.xlu0 %458
    %v462 = vsel %vm325, 0.0, %v457
    %v463 = vmul.f32 %v462, %v167
    %v464 = vmul.f32 %v459, %v168
    %v465 = vld [vmem:[#allocation10] sm:$0x1]
    %v466 = vlaneseq
    %v467 = vshrl.u32 %v466, 7
    %v468 = vsub.s32 0, %v467
    %v469 = vrot.slane %v465, %v468
    %v470 = vmul.f32 %v469, %v427
    %v471 = vmul.f32 %v469, %v428
    %v472 = vmul.f32 %v469, %v439
    %v473 = vmul.f32 %v469, %v440
    %v474 = vmul.f32 %v469, %v451
    %v475 = vmul.f32 %v469, %v452
    %v476 = vmul.f32 %v469, %v463
    %v477 = vmul.f32 %v469, %v464
    %v478 = vld [vmem:[#allocation10 + $0x1] sm:$0x1]
    %v479 = vlaneseq
    %v480 = vshrl.u32 %v479, 7
    %v481 = vsub.s32 0, %v480
    %v482 = vrot.slane %v478, %v481
    %483 = vrot.lane.b32.xlu0 %v351, 64
    %v484 = vpop.permute.xlu0 %483
    %485 = vrot.lane.b32.xlu0 %v352, 64
    %v486 = vpop.permute.xlu0 %485
    %487 = vrot.lane.b32.xlu0 %v400, 64
    %v488 = vpop.permute.xlu0 %487
    %489 = vrot.lane.b32.xlu0 %v402, 64
    %v490 = vpop.permute.xlu0 %489
    %491 = vrot.lane.b32.xlu0 %v406, 64
    %v492 = vpop.permute.xlu0 %491
    %493 = vrot.lane.b32.xlu0 %v408, 64
    %v494 = vpop.permute.xlu0 %493
    %495 = vrot.lane.b32.xlu0 %v412, 64
    %v496 = vpop.permute.xlu0 %495
    %497 = vrot.lane.b32.xlu0 %v414, 64
    %v498 = vpop.permute.xlu0 %497
    %v507 = vmul.f32 %v482, %v484
    %v508 = vmul.f32 %v482, %v486
    %v509 = vmul.f32 %v482, %v488
    %v510 = vmul.f32 %v482, %v490
    %v511 = vmul.f32 %v482, %v492
    %v512 = vmul.f32 %v482, %v494
    %v513 = vmul.f32 %v482, %v496
    %v514 = vmul.f32 %v482, %v498
    %v515 = vadd.f32 %v470, %v507
    %v516 = vadd.f32 %v471, %v508
    %v517 = vadd.f32 %v472, %v509
    %v518 = vadd.f32 %v473, %v510
    %v519 = vadd.f32 %v474, %v511
    %v520 = vadd.f32 %v475, %v512
    %v521 = vadd.f32 %v476, %v513
    %v522 = vadd.f32 %v477, %v514
    %v523 = vrot.slane %v351, 1
    %v524 = vrot.slane %v352, 1
    %v525 = vsel %vm379, %v523, %v524
    %v528 = vsel %vm379, %v524, 0.0
    %v529 = vmul.f32 %v525, %v179
    %v530 = vmul.f32 %v528, %v180
    %v531 = vrot.slane %v400, 1
    %v532 = vrot.slane %v402, 1
    %v533 = vsel %vm379, %v531, %v532
    %v536 = vsel %vm379, %v532, 0.0
    %v537 = vmul.f32 %v533, %v179
    %v538 = vmul.f32 %v536, %v180
    %v539 = vrot.slane %v406, 1
    %v540 = vrot.slane %v408, 1
    %v541 = vsel %vm379, %v539, %v540
    %v544 = vsel %vm379, %v540, 0.0
    %v545 = vmul.f32 %v541, %v179
    %v546 = vmul.f32 %v544, %v180
    %v547 = vrot.slane %v412, 1
    %v548 = vrot.slane %v414, 1
    %v549 = vsel %vm379, %v547, %v548
    %v552 = vsel %vm379, %v548, 0.0
    %v553 = vmul.f32 %v549, %v179
    %v554 = vmul.f32 %v552, %v180
    %v555 = vld [vmem:[#allocation10 + $0x2] sm:$0x1]
    %v556 = vlaneseq
    %v557 = vshrl.u32 %v556, 7
    %v558 = vsub.s32 0, %v557
    %v559 = vrot.slane %v555, %v558
    %568 = vrot.lane.b32.xlu0 %v529, 64
    %v569 = vpop.permute.xlu0 %568
    %570 = vrot.lane.b32.xlu0 %v530, 64
    %v571 = vpop.permute.xlu0 %570
    %572 = vrot.lane.b32.xlu0 %v537, 64
    %v573 = vpop.permute.xlu0 %572
    %574 = vrot.lane.b32.xlu0 %v538, 64
    %v575 = vpop.permute.xlu0 %574
    %576 = vrot.lane.b32.xlu0 %v545, 64
    %v577 = vpop.permute.xlu0 %576
    %578 = vrot.lane.b32.xlu0 %v546, 64
    %v579 = vpop.permute.xlu0 %578
    %580 = vrot.lane.b32.xlu0 %v553, 64
    %v581 = vpop.permute.xlu0 %580
    %582 = vrot.lane.b32.xlu0 %v554, 64
    %v583 = vpop.permute.xlu0 %582
    %v592 = vmul.f32 %v559, %v569
    %v593 = vmul.f32 %v559, %v571
    %v594 = vmul.f32 %v559, %v573
    %v595 = vmul.f32 %v559, %v575
    %v596 = vmul.f32 %v559, %v577
    %v597 = vmul.f32 %v559, %v579
    %v598 = vmul.f32 %v559, %v581
    %v599 = vmul.f32 %v559, %v583
    %v600 = vadd.f32 %v515, %v592
    %v601 = vadd.f32 %v516, %v593
    %v602 = vadd.f32 %v517, %v594
    %v603 = vadd.f32 %v518, %v595
    %v604 = vadd.f32 %v519, %v596
    %v605 = vadd.f32 %v520, %v597
    %v606 = vadd.f32 %v521, %v598
    %v607 = vadd.f32 %v522, %v599
    %v608 = vld [vmem:[%s6] sm:$0x1]
    %v609 = vlaneseq
    %v610 = vshrl.u32 %v609, 7
    %v611 = vsub.s32 0, %v610
    %v612 = vrot.slane %v608, %v611
    %v613 = vadd.f32 %v600, %v612
    %v614 = vadd.f32 %v601, %v612
    %v615 = vadd.f32 %v602, %v612
    %v616 = vadd.f32 %v603, %v612
    %v617 = vadd.f32 %v604, %v612
    %v618 = vadd.f32 %v605, %v612
    %v619 = vadd.f32 %v606, %v612
    %v620 = vadd.f32 %v607, %v612
    %v621 = vpack.c.bf16 %v614, %v613
    %v622 = vpack.c.bf16 %v616, %v615
    %v623 = vpack.c.bf16 %v618, %v617
    %v624 = vpack.c.bf16 %v620, %v619
    %v625 = vld [vmem:[#allocation11] sm:$0xf]
    %v626 = vld [vmem:[#allocation11 + $0x4] sm:$0xf]
    %v627 = vld [vmem:[#allocation11 + $0x8] sm:$0xf]
    %v628 = vld [vmem:[#allocation11 + $0xc] sm:$0xf]
    %v629 = vld [vmem:[%s8] sm:$0x1]
    %v630 = vlaneseq
    %v631 = vshrl.u32 %v630, 7
    %v632 = vsub.s32 0, %v631
    %v633 = vrot.slane %v629, %v632
    %v638 = vunpack.c.l.b16 %v625
    %v639 = vunpack.c.l.b16 %v626
    %v640 = vunpack.c.l.b16 %v627
    %v641 = vunpack.c.l.b16 %v628
    %v642 = vpack.c.b16 %v639, %v638
    %v643 = vpack.c.b16 %v641, %v640
    %v647 = vsel %vm269, %v621, 0
    %v650 = vsel %vm269, %v622, 0
    %v653 = vsel %vm269, %v623, 0
    %v656 = vsel %vm269, %v624, 0
    %658 = vmatprep.subr.bf16.mxu0 0
    %659 = vmatpush1.bf16.msra.mxu0 0
    %660 = vmatprep.subr.bf16.mxu0 0
    %661 = vmatpush1.bf16.msra.mxu0 0
    %662 = vmatprep.subr.bf16.mxu0 0
    %663 = vmatpush1.bf16.msra.mxu0 0
    %664 = vmatprep.subr.bf16.mxu0 0
    %665 = vmatpush1.bf16.msra.mxu0 0
    %666 = vmatprep.subr.bf16.mxu0 0
    %667 = vmatpush1.bf16.msra.mxu0 0
    %668 = vmatprep.subr.bf16.mxu0 0
    %669 = vmatpush1.bf16.msra.mxu0 0
    %670 = vmatprep.subr.bf16.mxu0 0
    %671 = vmatpush1.bf16.msra.mxu0 %v643
    %672 = vmatprep.subr.bf16.mxu0 0
    %673 = vmatpush1.bf16.msra.mxu0 %v642
    %674 = vmatprep.subr.bf16.mxu0 0
    %675 = vmatpush2.bf16.msra.mxu0 0
    %676 = vmatprep.subr.bf16.mxu0 0
    %677 = vmatpush2.bf16.msra.mxu0 0
    %678 = vmatprep.subr.bf16.mxu0 0
    %679 = vmatpush2.bf16.msra.mxu0 0
    %680 = vmatprep.subr.bf16.mxu0 0
    %681 = vmatpush2.bf16.msra.mxu0 0
    %682 = vmatprep.subr.bf16.mxu0 0
    %683 = vmatpush2.bf16.msra.mxu0 0
    %684 = vmatprep.subr.bf16.mxu0 0
    %685 = vmatpush2.bf16.msra.mxu0 0
    %686 = vmatprep.subr.bf16.mxu0 0
    %687 = vmatpush2.bf16.msra.mxu0 0
    %688 = vmatprep.subr.bf16.mxu0 0
    %689 = vmatpush2.bf16.msra.mxu0 0
    %690 = vmatprep.mubr.bf16.mxu0 0
    %691 = vmatmul.mubr.bf16.gmra.mxu0 %v647
    %v692 = vpop.f32.mrf.mxu0
    %v693 = vadd.f32 %v633, %v692
    %v694 = vpop.f32.mrf.mxu0
    %v695 = vpop.f32.mrf.mxu0
    %v696 = vadd.f32 %v633, %v695
    %v697 = vpop.f32.mrf.mxu0
    %698 = vmatprep.mubr.bf16.mxu0 0
    %699 = vmatmul.mubr.bf16.gmra.mxu0 %v650
    %v700 = vpop.f32.mrf.mxu0
    %v701 = vadd.f32 %v633, %v700
    %v702 = vpop.f32.mrf.mxu0
    %v703 = vpop.f32.mrf.mxu0
    %v704 = vadd.f32 %v633, %v703
    %v705 = vpop.f32.mrf.mxu0
    %706 = vmatprep.mubr.bf16.mxu0 0
    %707 = vmatmul.mubr.bf16.gmra.mxu0 %v653
    %v708 = vpop.f32.mrf.mxu0
    %v709 = vadd.f32 %v633, %v708
    %v710 = vpop.f32.mrf.mxu0
    %v711 = vpop.f32.mrf.mxu0
    %v712 = vadd.f32 %v633, %v711
    %v713 = vpop.f32.mrf.mxu0
    %714 = vmatprep.mubr.bf16.mxu0 0
    %715 = vmatmul.mubr.bf16.gmra.mxu0 %v656
    %v716 = vpop.f32.mrf.mxu0
    %v717 = vadd.f32 %v633, %v716
    %v718 = vpop.f32.mrf.mxu0
    %v719 = vpop.f32.mrf.mxu0
    %v720 = vadd.f32 %v633, %v719
    %v721 = vpop.f32.mrf.mxu0
    %722 = vdwg.mxu0
    %v723 = vld [vmem:[%s9] sm:$0x1]
    %v724 = vld [vmem:[%s10] sm:$0x1]
    %v725 = vsel %vm269, %v693, 0.0
    %726 = vadd.xlane.f32.xlu0 %v725
    %v727 = vpop.xlane.xlu0 %726
    %v728 = vsel %vm269, %v696, 0.0
    %729 = vadd.xlane.f32.xlu0 %v728
    %v730 = vpop.xlane.xlu0 %729
    %v731 = vsel %vm269, %v701, 0.0
    %732 = vadd.xlane.f32.xlu0 %v731
    %v733 = vpop.xlane.xlu0 %732
    %v734 = vsel %vm269, %v704, 0.0
    %735 = vadd.xlane.f32.xlu0 %v734
    %v736 = vpop.xlane.xlu0 %735
    %v737 = vsel %vm269, %v709, 0.0
    %738 = vadd.xlane.f32.xlu0 %v737
    %v739 = vpop.xlane.xlu0 %738
    %v740 = vsel %vm269, %v712, 0.0
    %741 = vadd.xlane.f32.xlu0 %v740
    %v742 = vpop.xlane.xlu0 %741
    %v743 = vsel %vm269, %v717, 0.0
    %744 = vadd.xlane.f32.xlu0 %v743
    %v745 = vpop.xlane.xlu0 %744
    %v746 = vsel %vm269, %v720, 0.0
    %747 = vadd.xlane.f32.xlu0 %v746
    %v748 = vpop.xlane.xlu0 %747
    %v749 = vrcp.pop 32.0
    %v750 = vmul.f32 %v727, %v749
    %v751 = vmul.f32 %v730, %v749
    %v752 = vmul.f32 %v733, %v749
    %v753 = vmul.f32 %v736, %v749
    %v754 = vmul.f32 %v739, %v749
    %v755 = vmul.f32 %v742, %v749
    %v756 = vmul.f32 %v745, %v749
    %v757 = vmul.f32 %v748, %v749
    %v758 = vsub.f32 %v693, %v750
    %v759 = vsub.f32 %v696, %v751
    %v760 = vsub.f32 %v701, %v752
    %v761 = vsub.f32 %v704, %v753
    %v762 = vsub.f32 %v709, %v754
    %v763 = vsub.f32 %v712, %v755
    %v764 = vsub.f32 %v717, %v756
    %v765 = vsub.f32 %v720, %v757
    %v766 = vmul.f32 %v758, %v758
    %v767 = vmul.f32 %v759, %v759
    %v768 = vmul.f32 %v760, %v760
    %v769 = vmul.f32 %v761, %v761
    %v770 = vmul.f32 %v762, %v762
    %v771 = vmul.f32 %v763, %v763
    %v772 = vmul.f32 %v764, %v764
    %v773 = vmul.f32 %v765, %v765
    %v774 = vsel %vm269, %v766, 0.0
    %775 = vadd.xlane.f32.xlu0 %v774
    %v776 = vpop.xlane.xlu0 %775
    %v777 = vsel %vm269, %v767, 0.0
    %778 = vadd.xlane.f32.xlu0 %v777
    %v779 = vpop.xlane.xlu0 %778
    %v780 = vsel %vm269, %v768, 0.0
    %781 = vadd.xlane.f32.xlu0 %v780
    %v782 = vpop.xlane.xlu0 %781
    %v783 = vsel %vm269, %v769, 0.0
    %784 = vadd.xlane.f32.xlu0 %v783
    %v785 = vpop.xlane.xlu0 %784
    %v786 = vsel %vm269, %v770, 0.0
    %787 = vadd.xlane.f32.xlu0 %v786
    %v788 = vpop.xlane.xlu0 %787
    %v789 = vsel %vm269, %v771, 0.0
    %790 = vadd.xlane.f32.xlu0 %v789
    %v791 = vpop.xlane.xlu0 %790
    %v792 = vsel %vm269, %v772, 0.0
    %793 = vadd.xlane.f32.xlu0 %v792
    %v794 = vpop.xlane.xlu0 %793
    %v795 = vsel %vm269, %v773, 0.0
    %796 = vadd.xlane.f32.xlu0 %v795
    %v797 = vpop.xlane.xlu0 %796
    %v798 = vmul.f32 %v776, %v749
    %v799 = vmul.f32 %v779, %v749
    %v800 = vmul.f32 %v782, %v749
    %v801 = vmul.f32 %v785, %v749
    %v802 = vmul.f32 %v788, %v749
    %v803 = vmul.f32 %v791, %v749
    %v804 = vmul.f32 %v794, %v749
    %v805 = vmul.f32 %v797, %v749
    %v806 = vadd.f32 %v798, 1e-05
    %v807 = vadd.f32 %v799, 1e-05
    %v808 = vadd.f32 %v800, 1e-05
    %v809 = vadd.f32 %v801, 1e-05
    %v810 = vadd.f32 %v802, 1e-05
    %v811 = vadd.f32 %v803, 1e-05
    %v812 = vadd.f32 %v804, 1e-05
    %v813 = vadd.f32 %v805, 1e-05
    %v814 = vrsqrt.pop %v806
    %v815 = vrsqrt.pop %v807
    %v816 = vrsqrt.pop %v808
    %v817 = vrsqrt.pop %v809
    %v818 = vrsqrt.pop %v810
    %v819 = vrsqrt.pop %v811
    %v820 = vrsqrt.pop %v812
    %v821 = vrsqrt.pop %v813
    %v822 = vmul.f32 %v758, %v814
    %v823 = vmul.f32 %v759, %v815
    %v824 = vmul.f32 %v760, %v816
    %v825 = vmul.f32 %v761, %v817
    %v826 = vmul.f32 %v762, %v818
    %v827 = vmul.f32 %v763, %v819
    %v828 = vmul.f32 %v764, %v820
    %v829 = vmul.f32 %v765, %v821
    %v830 = vlaneseq
    %v831 = vshrl.u32 %v830, 7
    %v832 = vsub.s32 0, %v831
    %v833 = vrot.slane %v723, %v832
    %v834 = vmul.f32 %v822, %v833
    %v835 = vmul.f32 %v823, %v833
    %v836 = vmul.f32 %v824, %v833
    %v837 = vmul.f32 %v825, %v833
    %v838 = vmul.f32 %v826, %v833
    %v839 = vmul.f32 %v827, %v833
    %v840 = vmul.f32 %v828, %v833
    %v841 = vmul.f32 %v829, %v833
    %v842 = vlaneseq
    %v843 = vshrl.u32 %v842, 7
    %v844 = vsub.s32 0, %v843
    %v845 = vrot.slane %v724, %v844
    %v846 = vadd.f32 %v834, %v845
    %v847 = vadd.f32 %v835, %v845
    %v848 = vadd.f32 %v836, %v845
    %v849 = vadd.f32 %v837, %v845
    %v850 = vadd.f32 %v838, %v845
    %v851 = vadd.f32 %v839, %v845
    %v852 = vadd.f32 %v840, %v845
    %v853 = vadd.f32 %v841, %v845
    %v854 = vmax.f32 %v846, 0.0
    %v855 = vmax.f32 %v847, 0.0
    %v856 = vmax.f32 %v848, 0.0
    %v857 = vmax.f32 %v849, 0.0
    %v858 = vmax.f32 %v850, 0.0
    %v859 = vmax.f32 %v851, 0.0
    %v860 = vmax.f32 %v852, 0.0
    %v861 = vmax.f32 %v853, 0.0
    %v862 = vadd.f32 %v854, %v484
    %v863 = vadd.f32 %v855, %v486
    %v864 = vadd.f32 %v856, %v488
    %v865 = vadd.f32 %v857, %v490
    %v866 = vadd.f32 %v858, %v492
    %v867 = vadd.f32 %v859, %v494
    %v868 = vadd.f32 %v860, %v496
    %v869 = vadd.f32 %v861, %v498
    %v872 = vrot.slane %v864, 7
    %v873 = vrot.slane %v865, 7
    %v874 = vsel %vm325, %v872, %v873
    %v877 = vsel %vm325, 0.0, %v872
    %v878 = vmul.f32 %v877, %v167
    %v879 = vmul.f32 %v874, %v168
    %v882 = vrot.slane %v866, 7
    %v883 = vrot.slane %v867, 7
    %v884 = vsel %vm325, %v882, %v883
    %v887 = vsel %vm325, 0.0, %v882
    %v888 = vmul.f32 %v887, %v167
    %v889 = vmul.f32 %v884, %v168
    %v892 = vrot.slane %v868, 7
    %v893 = vrot.slane %v869, 7
    %v894 = vsel %vm325, %v892, %v893
    %v897 = vsel %vm325, 0.0, %v892
    %v898 = vmul.f32 %v897, %v167
    %v899 = vmul.f32 %v894, %v168
    %v900 = vld [vmem:[#allocation10 + $0x3] sm:$0x1]
    %v901 = vlaneseq
    %v902 = vshrl.u32 %v901, 7
    %v903 = vsub.s32 0, %v902
    %v904 = vrot.slane %v900, %v903
    %v905 = vmul.f32 %v904, %v878
    %v906 = vmul.f32 %v904, %v879
    %v907 = vmul.f32 %v904, %v888
    %v908 = vmul.f32 %v904, %v889
    %v909 = vmul.f32 %v904, %v898
    %v910 = vmul.f32 %v904, %v899
    %v911 = vmul.f32 %v904, %v862
    %v912 = vmul.f32 %v904, %v863
    %v913 = vld [vmem:[#allocation10 + $0x4] sm:$0x1]
    %v914 = vlaneseq
    %v915 = vshrl.u32 %v914, 7
    %v916 = vsub.s32 0, %v915
    %v917 = vrot.slane %v913, %v916
    %v918 = vmul.f32 %v917, %v862
    %v919 = vmul.f32 %v917, %v863
    %v920 = vmul.f32 %v917, %v864
    %v921 = vmul.f32 %v917, %v865
    %v922 = vmul.f32 %v917, %v866
    %v923 = vmul.f32 %v917, %v867
    %v924 = vmul.f32 %v917, %v868
    %v925 = vmul.f32 %v917, %v869
    %v926 = vadd.f32 %v905, %v918
    %v927 = vadd.f32 %v906, %v919
    %v928 = vadd.f32 %v907, %v920
    %v929 = vadd.f32 %v908, %v921
    %v930 = vadd.f32 %v909, %v922
    %v931 = vadd.f32 %v910, %v923
    %v932 = vadd.f32 %v911, %v924
    %v933 = vadd.f32 %v912, %v925
    %v936 = vrot.slane %v862, 1
    %v937 = vrot.slane %v863, 1
    %v938 = vsel %vm379, %v936, %v937
    %v941 = vsel %vm379, %v937, 0.0
    %v942 = vmul.f32 %v938, %v179
    %v943 = vmul.f32 %v941, %v180
    %v944 = vrot.slane %v864, 1
    %v945 = vrot.slane %v865, 1
    %v946 = vsel %vm379, %v944, %v945
    %v949 = vsel %vm379, %v945, 0.0
    %v950 = vmul.f32 %v946, %v179
    %v951 = vmul.f32 %v949, %v180
    %v952 = vrot.slane %v866, 1
    %v953 = vrot.slane %v867, 1
    %v954 = vsel %vm379, %v952, %v953
    %v957 = vsel %vm379, %v953, 0.0
    %v958 = vmul.f32 %v954, %v179
    %v959 = vmul.f32 %v957, %v180
    %v960 = vld [vmem:[#allocation10 + $0x5] sm:$0x1]
    %v961 = vlaneseq
    %v962 = vshrl.u32 %v961, 7
    %v963 = vsub.s32 0, %v962
    %v964 = vrot.slane %v960, %v963
    %v965 = vmul.f32 %v964, %v868
    %v966 = vmul.f32 %v964, %v869
    %v967 = vmul.f32 %v964, %v942
    %v968 = vmul.f32 %v964, %v943
    %v969 = vmul.f32 %v964, %v950
    %v970 = vmul.f32 %v964, %v951
    %v971 = vmul.f32 %v964, %v958
    %v972 = vmul.f32 %v964, %v959
    %v973 = vadd.f32 %v926, %v965
    %v974 = vadd.f32 %v927, %v966
    %v975 = vadd.f32 %v928, %v967
    %v976 = vadd.f32 %v929, %v968
    %v977 = vadd.f32 %v930, %v969
    %v978 = vadd.f32 %v931, %v970
    %v979 = vadd.f32 %v932, %v971
    %v980 = vadd.f32 %v933, %v972
    %v981 = vld [vmem:[%s6 + $0x1] sm:$0x1]
    %v982 = vlaneseq
    %v983 = vshrl.u32 %v982, 7
    %v984 = vsub.s32 0, %v983
    %v985 = vrot.slane %v981, %v984
    %v986 = vadd.f32 %v973, %v985
    %v987 = vadd.f32 %v974, %v985
    %v988 = vadd.f32 %v975, %v985
    %v989 = vadd.f32 %v976, %v985
    %v990 = vadd.f32 %v977, %v985
    %v991 = vadd.f32 %v978, %v985
    %v992 = vadd.f32 %v979, %v985
    %v993 = vadd.f32 %v980, %v985
    %v994 = vpack.c.bf16 %v987, %v986
    %v995 = vpack.c.bf16 %v989, %v988
    %v996 = vpack.c.bf16 %v991, %v990
    %v997 = vpack.c.bf16 %v993, %v992
    %s998 = scalar_lea.vmem [#allocation11], 16
    %v999 = vld [vmem:[%s998] sm:$0xf]
    %v1000 = vld [vmem:[%s998 + $0x4] sm:$0xf]
    %v1001 = vld [vmem:[%s998 + $0x8] sm:$0xf]
    %v1002 = vld [vmem:[%s998 + $0xc] sm:$0xf]
    %v1003 = vld [vmem:[%s8 + $0x1] sm:$0x1]
    %v1004 = vlaneseq
    %v1005 = vshrl.u32 %v1004, 7
    %v1006 = vsub.s32 0, %v1005
    %v1007 = vrot.slane %v1003, %v1006
    %v1012 = vunpack.c.l.b16 %v999
    %v1013 = vunpack.c.l.b16 %v1000
    %v1014 = vunpack.c.l.b16 %v1001
    %v1015 = vunpack.c.l.b16 %v1002
    %v1016 = vpack.c.b16 %v1013, %v1012
    %v1017 = vpack.c.b16 %v1015, %v1014
    %v1021 = vsel %vm269, %v994, 0
    %v1024 = vsel %vm269, %v995, 0
    %v1027 = vsel %vm269, %v996, 0
    %v1030 = vsel %vm269, %v997, 0
    %1032 = vmatprep.subr.bf16.mxu0 0
    %1033 = vmatpush1.bf16.msra.mxu0 0
    %1034 = vmatprep.subr.bf16.mxu0 0
    %1035 = vmatpush1.bf16.msra.mxu0 0
    %1036 = vmatprep.subr.bf16.mxu0 0
    %1037 = vmatpush1.bf16.msra.mxu0 0
    %1038 = vmatprep.subr.bf16.mxu0 0
    %1039 = vmatpush1.bf16.msra.mxu0 0
    %1040 = vmatprep.subr.bf16.mxu0 0
    %1041 = vmatpush1.bf16.msra.mxu0 0
    %1042 = vmatprep.subr.bf16.mxu0 0
    %1043 = vmatpush1.bf16.msra.mxu0 0
    %1044 = vmatprep.subr.bf16.mxu0 0
    %1045 = vmatpush1.bf16.msra.mxu0 %v1017
    %1046 = vmatprep.subr.bf16.mxu0 0
    %1047 = vmatpush1.bf16.msra.mxu0 %v1016
    %1048 = vmatprep.subr.bf16.mxu0 0
    %1049 = vmatpush2.bf16.msra.mxu0 0
    %1050 = vmatprep.subr.bf16.mxu0 0
    %1051 = vmatpush2.bf16.msra.mxu0 0
    %1052 = vmatprep.subr.bf16.mxu0 0
    %1053 = vmatpush2.bf16.msra.mxu0 0
    %1054 = vmatprep.subr.bf16.mxu0 0
    %1055 = vmatpush2.bf16.msra.mxu0 0
    %1056 = vmatprep.subr.bf16.mxu0 0
    %1057 = vmatpush2.bf16.msra.mxu0 0
    %1058 = vmatprep.subr.bf16.mxu0 0
    %1059 = vmatpush2.bf16.msra.mxu0 0
    %1060 = vmatprep.subr.bf16.mxu0 0
    %1061 = vmatpush2.bf16.msra.mxu0 0
    %1062 = vmatprep.subr.bf16.mxu0 0
    %1063 = vmatpush2.bf16.msra.mxu0 0
    %1064 = vmatprep.mubr.bf16.mxu0 0
    %1065 = vmatmul.mubr.bf16.gmra.mxu0 %v1021
    %v1066 = vpop.f32.mrf.mxu0
    %v1067 = vadd.f32 %v1007, %v1066
    %v1068 = vpop.f32.mrf.mxu0
    %v1069 = vpop.f32.mrf.mxu0
    %v1070 = vadd.f32 %v1007, %v1069
    %v1071 = vpop.f32.mrf.mxu0
    %1072 = vmatprep.mubr.bf16.mxu0 0
    %1073 = vmatmul.mubr.bf16.gmra.mxu0 %v1024
    %v1074 = vpop.f32.mrf.mxu0
    %v1075 = vadd.f32 %v1007, %v1074
    %v1076 = vpop.f32.mrf.mxu0
    %v1077 = vpop.f32.mrf.mxu0
    %v1078 = vadd.f32 %v1007, %v1077
    %v1079 = vpop.f32.mrf.mxu0
    %1080 = vmatprep.mubr.bf16.mxu0 0
    %1081 = vmatmul.mubr.bf16.gmra.mxu0 %v1027
    %v1082 = vpop.f32.mrf.mxu0
    %v1083 = vadd.f32 %v1007, %v1082
    %v1084 = vpop.f32.mrf.mxu0
    %v1085 = vpop.f32.mrf.mxu0
    %v1086 = vadd.f32 %v1007, %v1085
    %v1087 = vpop.f32.mrf.mxu0
    %1088 = vmatprep.mubr.bf16.mxu0 0
    %1089 = vmatmul.mubr.bf16.gmra.mxu0 %v1030
    %v1090 = vpop.f32.mrf.mxu0
    %v1091 = vadd.f32 %v1007, %v1090
    %v1092 = vpop.f32.mrf.mxu0
    %v1093 = vpop.f32.mrf.mxu0
    %v1094 = vadd.f32 %v1007, %v1093
    %v1095 = vpop.f32.mrf.mxu0
    %1096 = vdwg.mxu0
    %v1097 = vld [vmem:[%s9 + $0x1] sm:$0x1]
    %v1098 = vld [vmem:[%s10 + $0x1] sm:$0x1]
    %v1099 = vsel %vm269, %v1067, 0.0
    %1100 = vadd.xlane.f32.xlu0 %v1099
    %v1101 = vpop.xlane.xlu0 %1100
    %v1102 = vsel %vm269, %v1070, 0.0
    %1103 = vadd.xlane.f32.xlu0 %v1102
    %v1104 = vpop.xlane.xlu0 %1103
    %v1105 = vsel %vm269, %v1075, 0.0
    %1106 = vadd.xlane.f32.xlu0 %v1105
    %v1107 = vpop.xlane.xlu0 %1106
    %v1108 = vsel %vm269, %v1078, 0.0
    %1109 = vadd.xlane.f32.xlu0 %v1108
    %v1110 = vpop.xlane.xlu0 %1109
    %v1111 = vsel %vm269, %v1083, 0.0
    %1112 = vadd.xlane.f32.xlu0 %v1111
    %v1113 = vpop.xlane.xlu0 %1112
    %v1114 = vsel %vm269, %v1086, 0.0
    %1115 = vadd.xlane.f32.xlu0 %v1114
    %v1116 = vpop.xlane.xlu0 %1115
    %v1117 = vsel %vm269, %v1091, 0.0
    %1118 = vadd.xlane.f32.xlu0 %v1117
    %v1119 = vpop.xlane.xlu0 %1118
    %v1120 = vsel %vm269, %v1094, 0.0
    %1121 = vadd.xlane.f32.xlu0 %v1120
    %v1122 = vpop.xlane.xlu0 %1121
    %v1123 = vmul.f32 %v1101, %v749
    %v1124 = vmul.f32 %v1104, %v749
    %v1125 = vmul.f32 %v1107, %v749
    %v1126 = vmul.f32 %v1110, %v749
    %v1127 = vmul.f32 %v1113, %v749
    %v1128 = vmul.f32 %v1116, %v749
    %v1129 = vmul.f32 %v1119, %v749
    %v1130 = vmul.f32 %v1122, %v749
    %v1131 = vsub.f32 %v1067, %v1123
    %v1132 = vsub.f32 %v1070, %v1124
    %v1133 = vsub.f32 %v1075, %v1125
    %v1134 = vsub.f32 %v1078, %v1126
    %v1135 = vsub.f32 %v1083, %v1127
    %v1136 = vsub.f32 %v1086, %v1128
    %v1137 = vsub.f32 %v1091, %v1129
    %v1138 = vsub.f32 %v1094, %v1130
    %v1139 = vmul.f32 %v1131, %v1131
    %v1140 = vmul.f32 %v1132, %v1132
    %v1141 = vmul.f32 %v1133, %v1133
    %v1142 = vmul.f32 %v1134, %v1134
    %v1143 = vmul.f32 %v1135, %v1135
    %v1144 = vmul.f32 %v1136, %v1136
    %v1145 = vmul.f32 %v1137, %v1137
    %v1146 = vmul.f32 %v1138, %v1138
    %v1147 = vsel %vm269, %v1139, 0.0
    %1148 = vadd.xlane.f32.xlu0 %v1147
    %v1149 = vpop.xlane.xlu0 %1148
    %v1150 = vsel %vm269, %v1140, 0.0
    %1151 = vadd.xlane.f32.xlu0 %v1150
    %v1152 = vpop.xlane.xlu0 %1151
    %v1153 = vsel %vm269, %v1141, 0.0
    %1154 = vadd.xlane.f32.xlu0 %v1153
    %v1155 = vpop.xlane.xlu0 %1154
    %v1156 = vsel %vm269, %v1142, 0.0
    %1157 = vadd.xlane.f32.xlu0 %v1156
    %v1158 = vpop.xlane.xlu0 %1157
    %v1159 = vsel %vm269, %v1143, 0.0
    %1160 = vadd.xlane.f32.xlu0 %v1159
    %v1161 = vpop.xlane.xlu0 %1160
    %v1162 = vsel %vm269, %v1144, 0.0
    %1163 = vadd.xlane.f32.xlu0 %v1162
    %v1164 = vpop.xlane.xlu0 %1163
    %v1165 = vsel %vm269, %v1145, 0.0
    %1166 = vadd.xlane.f32.xlu0 %v1165
    %v1167 = vpop.xlane.xlu0 %1166
    %v1168 = vsel %vm269, %v1146, 0.0
    %1169 = vadd.xlane.f32.xlu0 %v1168
    %v1170 = vpop.xlane.xlu0 %1169
    %v1171 = vmul.f32 %v1149, %v749
    %v1172 = vmul.f32 %v1152, %v749
    %v1173 = vmul.f32 %v1155, %v749
    %v1174 = vmul.f32 %v1158, %v749
    %v1175 = vmul.f32 %v1161, %v749
    %v1176 = vmul.f32 %v1164, %v749
    %v1177 = vmul.f32 %v1167, %v749
    %v1178 = vmul.f32 %v1170, %v749
    %v1179 = vadd.f32 %v1171, 1e-05
    %v1180 = vadd.f32 %v1172, 1e-05
    %v1181 = vadd.f32 %v1173, 1e-05
    %v1182 = vadd.f32 %v1174, 1e-05
    %v1183 = vadd.f32 %v1175, 1e-05
    %v1184 = vadd.f32 %v1176, 1e-05
    %v1185 = vadd.f32 %v1177, 1e-05
    %v1186 = vadd.f32 %v1178, 1e-05
    %v1187 = vrsqrt.pop %v1179
    %v1188 = vrsqrt.pop %v1180
    %v1189 = vrsqrt.pop %v1181
    %v1190 = vrsqrt.pop %v1182
    %v1191 = vrsqrt.pop %v1183
    %v1192 = vrsqrt.pop %v1184
    %v1193 = vrsqrt.pop %v1185
    %v1194 = vrsqrt.pop %v1186
    %v1195 = vmul.f32 %v1131, %v1187
    %v1196 = vmul.f32 %v1132, %v1188
    %v1197 = vmul.f32 %v1133, %v1189
    %v1198 = vmul.f32 %v1134, %v1190
    %v1199 = vmul.f32 %v1135, %v1191
    %v1200 = vmul.f32 %v1136, %v1192
    %v1201 = vmul.f32 %v1137, %v1193
    %v1202 = vmul.f32 %v1138, %v1194
    %v1203 = vlaneseq
    %v1204 = vshrl.u32 %v1203, 7
    %v1205 = vsub.s32 0, %v1204
    %v1206 = vrot.slane %v1097, %v1205
    %v1207 = vmul.f32 %v1195, %v1206
    %v1208 = vmul.f32 %v1196, %v1206
    %v1209 = vmul.f32 %v1197, %v1206
    %v1210 = vmul.f32 %v1198, %v1206
    %v1211 = vmul.f32 %v1199, %v1206
    %v1212 = vmul.f32 %v1200, %v1206
    %v1213 = vmul.f32 %v1201, %v1206
    %v1214 = vmul.f32 %v1202, %v1206
    %v1215 = vlaneseq
    %v1216 = vshrl.u32 %v1215, 7
    %v1217 = vsub.s32 0, %v1216
    %v1218 = vrot.slane %v1098, %v1217
    %v1219 = vadd.f32 %v1207, %v1218
    %v1220 = vadd.f32 %v1208, %v1218
    %v1221 = vadd.f32 %v1209, %v1218
    %v1222 = vadd.f32 %v1210, %v1218
    %v1223 = vadd.f32 %v1211, %v1218
    %v1224 = vadd.f32 %v1212, %v1218
    %v1225 = vadd.f32 %v1213, %v1218
    %v1226 = vadd.f32 %v1214, %v1218
    %v1227 = vmax.f32 %v1219, 0.0
    %v1228 = vmax.f32 %v1220, 0.0
    %v1229 = vmax.f32 %v1221, 0.0
    %v1230 = vmax.f32 %v1222, 0.0
    %v1231 = vmax.f32 %v1223, 0.0
    %v1232 = vmax.f32 %v1224, 0.0
    %v1233 = vmax.f32 %v1225, 0.0
    %v1234 = vmax.f32 %v1226, 0.0
    %v1235 = vadd.f32 %v1227, %v862
    %v1236 = vadd.f32 %v1228, %v863
    %v1237 = vadd.f32 %v1229, %v864
    %v1238 = vadd.f32 %v1230, %v865
    %v1239 = vadd.f32 %v1231, %v866
    %v1240 = vadd.f32 %v1232, %v867
    %v1241 = vadd.f32 %v1233, %v868
    %v1242 = vadd.f32 %v1234, %v869
    %v1245 = vrot.slane %v1239, 7
    %v1246 = vrot.slane %v1240, 7
    %v1247 = vsel %vm325, %v1245, %v1246
    %v1250 = vsel %vm325, 0.0, %v1245
    %v1251 = vmul.f32 %v1250, %v167
    %v1252 = vmul.f32 %v1247, %v168
    %v1255 = vrot.slane %v1241, 7
    %v1256 = vrot.slane %v1242, 7
    %v1257 = vsel %vm325, %v1255, %v1256
    %v1260 = vsel %vm325, 0.0, %v1255
    %v1261 = vmul.f32 %v1260, %v167
    %v1262 = vmul.f32 %v1257, %v168
    %v1263 = vld [vmem:[#allocation10 + $0x6] sm:$0x1]
    %v1264 = vlaneseq
    %v1265 = vshrl.u32 %v1264, 7
    %v1266 = vsub.s32 0, %v1265
    %v1267 = vrot.slane %v1263, %v1266
    %v1268 = vmul.f32 %v1267, %v1251
    %v1269 = vmul.f32 %v1267, %v1252
    %v1270 = vmul.f32 %v1267, %v1261
    %v1271 = vmul.f32 %v1267, %v1262
    %v1272 = vmul.f32 %v1267, %v1235
    %v1273 = vmul.f32 %v1267, %v1236
    %v1274 = vmul.f32 %v1267, %v1237
    %v1275 = vmul.f32 %v1267, %v1238
    %v1276 = vld [vmem:[#allocation10 + $0x7] sm:$0x1]
    %v1277 = vlaneseq
    %v1278 = vshrl.u32 %v1277, 7
    %v1279 = vsub.s32 0, %v1278
    %v1280 = vrot.slane %v1276, %v1279
    %v1281 = vmul.f32 %v1280, %v1235
    %v1282 = vmul.f32 %v1280, %v1236
    %v1283 = vmul.f32 %v1280, %v1237
    %v1284 = vmul.f32 %v1280, %v1238
    %v1285 = vmul.f32 %v1280, %v1239
    %v1286 = vmul.f32 %v1280, %v1240
    %v1287 = vmul.f32 %v1280, %v1241
    %v1288 = vmul.f32 %v1280, %v1242
    %v1289 = vadd.f32 %v1268, %v1281
    %v1290 = vadd.f32 %v1269, %v1282
    %v1291 = vadd.f32 %v1270, %v1283
    %v1292 = vadd.f32 %v1271, %v1284
    %v1293 = vadd.f32 %v1272, %v1285
    %v1294 = vadd.f32 %v1273, %v1286
    %v1295 = vadd.f32 %v1274, %v1287
    %v1296 = vadd.f32 %v1275, %v1288
    %v1299 = vrot.slane %v1235, 1
    %v1300 = vrot.slane %v1236, 1
    %v1301 = vsel %vm379, %v1299, %v1300
    %v1304 = vsel %vm379, %v1300, 0.0
    %v1305 = vmul.f32 %v1301, %v179
    %v1306 = vmul.f32 %v1304, %v180
    %v1309 = vrot.slane %v1237, 1
    %v1310 = vrot.slane %v1238, 1
    %v1311 = vsel %vm379, %v1309, %v1310
    %v1314 = vsel %vm379, %v1310, 0.0
    %v1315 = vmul.f32 %v1311, %v179
    %v1316 = vmul.f32 %v1314, %v180
    %v1317 = vld [vmem:[#allocation10 + $0x8] sm:$0x1]
    %v1318 = vlaneseq
    %v1319 = vshrl.u32 %v1318, 7
    %v1320 = vsub.s32 0, %v1319
    %v1321 = vrot.slane %v1317, %v1320
    %v1322 = vmul.f32 %v1321, %v1239
    %v1323 = vmul.f32 %v1321, %v1240
    %v1324 = vmul.f32 %v1321, %v1241
    %v1325 = vmul.f32 %v1321, %v1242
    %v1326 = vmul.f32 %v1321, %v1305
    %v1327 = vmul.f32 %v1321, %v1306
    %v1328 = vmul.f32 %v1321, %v1315
    %v1329 = vmul.f32 %v1321, %v1316
    %v1330 = vadd.f32 %v1289, %v1322
    %v1331 = vadd.f32 %v1290, %v1323
    %v1332 = vadd.f32 %v1291, %v1324
    %v1333 = vadd.f32 %v1292, %v1325
    %v1334 = vadd.f32 %v1293, %v1326
    %v1335 = vadd.f32 %v1294, %v1327
    %v1336 = vadd.f32 %v1295, %v1328
    %v1337 = vadd.f32 %v1296, %v1329
    %v1338 = vld [vmem:[%s6 + $0x2] sm:$0x1]
    %v1339 = vlaneseq
    %v1340 = vshrl.u32 %v1339, 7
    %v1341 = vsub.s32 0, %v1340
    %v1342 = vrot.slane %v1338, %v1341
    %v1343 = vadd.f32 %v1330, %v1342
    %v1344 = vadd.f32 %v1331, %v1342
    %v1345 = vadd.f32 %v1332, %v1342
    %v1346 = vadd.f32 %v1333, %v1342
    %v1347 = vadd.f32 %v1334, %v1342
    %v1348 = vadd.f32 %v1335, %v1342
    %v1349 = vadd.f32 %v1336, %v1342
    %v1350 = vadd.f32 %v1337, %v1342
    %v1351 = vpack.c.bf16 %v1344, %v1343
    %v1352 = vpack.c.bf16 %v1346, %v1345
    %v1353 = vpack.c.bf16 %v1348, %v1347
    %v1354 = vpack.c.bf16 %v1350, %v1349
    %s1355 = scalar_lea.vmem [#allocation11], 32
    %v1356 = vld [vmem:[%s1355] sm:$0xf]
    %v1357 = vld [vmem:[%s1355 + $0x4] sm:$0xf]
    %v1358 = vld [vmem:[%s1355 + $0x8] sm:$0xf]
    %v1359 = vld [vmem:[%s1355 + $0xc] sm:$0xf]
    %v1360 = vld [vmem:[%s8 + $0x2] sm:$0x1]
    %v1361 = vlaneseq
    %v1362 = vshrl.u32 %v1361, 7
    %v1363 = vsub.s32 0, %v1362
    %v1364 = vrot.slane %v1360, %v1363
    %v1369 = vunpack.c.l.b16 %v1356
    %v1370 = vunpack.c.l.b16 %v1357
    %v1371 = vunpack.c.l.b16 %v1358
    %v1372 = vunpack.c.l.b16 %v1359
    %v1373 = vpack.c.b16 %v1370, %v1369
    %v1374 = vpack.c.b16 %v1372, %v1371
    %v1378 = vsel %vm269, %v1351, 0
    %v1381 = vsel %vm269, %v1352, 0
    %v1384 = vsel %vm269, %v1353, 0
    %v1387 = vsel %vm269, %v1354, 0
    %1389 = vmatprep.subr.bf16.mxu0 0
    %1390 = vmatpush1.bf16.msra.mxu0 0
    %1391 = vmatprep.subr.bf16.mxu0 0
    %1392 = vmatpush1.bf16.msra.mxu0 0
    %1393 = vmatprep.subr.bf16.mxu0 0
    %1394 = vmatpush1.bf16.msra.mxu0 0
    %1395 = vmatprep.subr.bf16.mxu0 0
    %1396 = vmatpush1.bf16.msra.mxu0 0
    %1397 = vmatprep.subr.bf16.mxu0 0
    %1398 = vmatpush1.bf16.msra.mxu0 0
    %1399 = vmatprep.subr.bf16.mxu0 0
    %1400 = vmatpush1.bf16.msra.mxu0 0
    %1401 = vmatprep.subr.bf16.mxu0 0
    %1402 = vmatpush1.bf16.msra.mxu0 %v1374
    %1403 = vmatprep.subr.bf16.mxu0 0
    %1404 = vmatpush1.bf16.msra.mxu0 %v1373
    %1405 = vmatprep.subr.bf16.mxu0 0
    %1406 = vmatpush2.bf16.msra.mxu0 0
    %1407 = vmatprep.subr.bf16.mxu0 0
    %1408 = vmatpush2.bf16.msra.mxu0 0
    %1409 = vmatprep.subr.bf16.mxu0 0
    %1410 = vmatpush2.bf16.msra.mxu0 0
    %1411 = vmatprep.subr.bf16.mxu0 0
    %1412 = vmatpush2.bf16.msra.mxu0 0
    %1413 = vmatprep.subr.bf16.mxu0 0
    %1414 = vmatpush2.bf16.msra.mxu0 0
    %1415 = vmatprep.subr.bf16.mxu0 0
    %1416 = vmatpush2.bf16.msra.mxu0 0
    %1417 = vmatprep.subr.bf16.mxu0 0
    %1418 = vmatpush2.bf16.msra.mxu0 0
    %1419 = vmatprep.subr.bf16.mxu0 0
    %1420 = vmatpush2.bf16.msra.mxu0 0
    %1421 = vmatprep.mubr.bf16.mxu0 0
    %1422 = vmatmul.mubr.bf16.gmra.mxu0 %v1378
    %v1423 = vpop.f32.mrf.mxu0
    %v1424 = vadd.f32 %v1364, %v1423
    %v1425 = vpop.f32.mrf.mxu0
    %v1426 = vpop.f32.mrf.mxu0
    %v1427 = vadd.f32 %v1364, %v1426
    %v1428 = vpop.f32.mrf.mxu0
    %1429 = vmatprep.mubr.bf16.mxu0 0
    %1430 = vmatmul.mubr.bf16.gmra.mxu0 %v1381
    %v1431 = vpop.f32.mrf.mxu0
    %v1432 = vadd.f32 %v1364, %v1431
    %v1433 = vpop.f32.mrf.mxu0
    %v1434 = vpop.f32.mrf.mxu0
    %v1435 = vadd.f32 %v1364, %v1434
    %v1436 = vpop.f32.mrf.mxu0
    %1437 = vmatprep.mubr.bf16.mxu0 0
    %1438 = vmatmul.mubr.bf16.gmra.mxu0 %v1384
    %v1439 = vpop.f32.mrf.mxu0
    %v1440 = vadd.f32 %v1364, %v1439
    %v1441 = vpop.f32.mrf.mxu0
    %v1442 = vpop.f32.mrf.mxu0
    %v1443 = vadd.f32 %v1364, %v1442
    %v1444 = vpop.f32.mrf.mxu0
    %1445 = vmatprep.mubr.bf16.mxu0 0
    %1446 = vmatmul.mubr.bf16.gmra.mxu0 %v1387
    %v1447 = vpop.f32.mrf.mxu0
    %v1448 = vadd.f32 %v1364, %v1447
    %v1449 = vpop.f32.mrf.mxu0
    %v1450 = vpop.f32.mrf.mxu0
    %v1451 = vadd.f32 %v1364, %v1450
    %v1452 = vpop.f32.mrf.mxu0
    %1453 = vdwg.mxu0
    %v1454 = vld [vmem:[%s9 + $0x2] sm:$0x1]
    %v1455 = vld [vmem:[%s10 + $0x2] sm:$0x1]
    %v1456 = vsel %vm269, %v1424, 0.0
    %1457 = vadd.xlane.f32.xlu0 %v1456
    %v1458 = vpop.xlane.xlu0 %1457
    %v1459 = vsel %vm269, %v1427, 0.0
    %1460 = vadd.xlane.f32.xlu0 %v1459
    %v1461 = vpop.xlane.xlu0 %1460
    %v1462 = vsel %vm269, %v1432, 0.0
    %1463 = vadd.xlane.f32.xlu0 %v1462
    %v1464 = vpop.xlane.xlu0 %1463
    %v1465 = vsel %vm269, %v1435, 0.0
    %1466 = vadd.xlane.f32.xlu0 %v1465
    %v1467 = vpop.xlane.xlu0 %1466
    %v1468 = vsel %vm269, %v1440, 0.0
    %1469 = vadd.xlane.f32.xlu0 %v1468
    %v1470 = vpop.xlane.xlu0 %1469
    %v1471 = vsel %vm269, %v1443, 0.0
    %1472 = vadd.xlane.f32.xlu0 %v1471
    %v1473 = vpop.xlane.xlu0 %1472
    %v1474 = vsel %vm269, %v1448, 0.0
    %1475 = vadd.xlane.f32.xlu0 %v1474
    %v1476 = vpop.xlane.xlu0 %1475
    %v1477 = vsel %vm269, %v1451, 0.0
    %1478 = vadd.xlane.f32.xlu0 %v1477
    %v1479 = vpop.xlane.xlu0 %1478
    %v1480 = vmul.f32 %v1458, %v749
    %v1481 = vmul.f32 %v1461, %v749
    %v1482 = vmul.f32 %v1464, %v749
    %v1483 = vmul.f32 %v1467, %v749
    %v1484 = vmul.f32 %v1470, %v749
    %v1485 = vmul.f32 %v1473, %v749
    %v1486 = vmul.f32 %v1476, %v749
    %v1487 = vmul.f32 %v1479, %v749
    %v1488 = vsub.f32 %v1424, %v1480
    %v1489 = vsub.f32 %v1427, %v1481
    %v1490 = vsub.f32 %v1432, %v1482
    %v1491 = vsub.f32 %v1435, %v1483
    %v1492 = vsub.f32 %v1440, %v1484
    %v1493 = vsub.f32 %v1443, %v1485
    %v1494 = vsub.f32 %v1448, %v1486
    %v1495 = vsub.f32 %v1451, %v1487
    %v1496 = vmul.f32 %v1488, %v1488
    %v1497 = vmul.f32 %v1489, %v1489
    %v1498 = vmul.f32 %v1490, %v1490
    %v1499 = vmul.f32 %v1491, %v1491
    %v1500 = vmul.f32 %v1492, %v1492
    %v1501 = vmul.f32 %v1493, %v1493
    %v1502 = vmul.f32 %v1494, %v1494
    %v1503 = vmul.f32 %v1495, %v1495
    %v1504 = vsel %vm269, %v1496, 0.0
    %1505 = vadd.xlane.f32.xlu0 %v1504
    %v1506 = vpop.xlane.xlu0 %1505
    %v1507 = vsel %vm269, %v1497, 0.0
    %1508 = vadd.xlane.f32.xlu0 %v1507
    %v1509 = vpop.xlane.xlu0 %1508
    %v1510 = vsel %vm269, %v1498, 0.0
    %1511 = vadd.xlane.f32.xlu0 %v1510
    %v1512 = vpop.xlane.xlu0 %1511
    %v1513 = vsel %vm269, %v1499, 0.0
    %1514 = vadd.xlane.f32.xlu0 %v1513
    %v1515 = vpop.xlane.xlu0 %1514
    %v1516 = vsel %vm269, %v1500, 0.0
    %1517 = vadd.xlane.f32.xlu0 %v1516
    %v1518 = vpop.xlane.xlu0 %1517
    %v1519 = vsel %vm269, %v1501, 0.0
    %1520 = vadd.xlane.f32.xlu0 %v1519
    %v1521 = vpop.xlane.xlu0 %1520
    %v1522 = vsel %vm269, %v1502, 0.0
    %1523 = vadd.xlane.f32.xlu0 %v1522
    %v1524 = vpop.xlane.xlu0 %1523
    %v1525 = vsel %vm269, %v1503, 0.0
    %1526 = vadd.xlane.f32.xlu0 %v1525
    %v1527 = vpop.xlane.xlu0 %1526
    %v1528 = vmul.f32 %v1506, %v749
    %v1529 = vmul.f32 %v1509, %v749
    %v1530 = vmul.f32 %v1512, %v749
    %v1531 = vmul.f32 %v1515, %v749
    %v1532 = vmul.f32 %v1518, %v749
    %v1533 = vmul.f32 %v1521, %v749
    %v1534 = vmul.f32 %v1524, %v749
    %v1535 = vmul.f32 %v1527, %v749
    %v1536 = vadd.f32 %v1528, 1e-05
    %v1537 = vadd.f32 %v1529, 1e-05
    %v1538 = vadd.f32 %v1530, 1e-05
    %v1539 = vadd.f32 %v1531, 1e-05
    %v1540 = vadd.f32 %v1532, 1e-05
    %v1541 = vadd.f32 %v1533, 1e-05
    %v1542 = vadd.f32 %v1534, 1e-05
    %v1543 = vadd.f32 %v1535, 1e-05
    %v1544 = vrsqrt.pop %v1536
    %v1545 = vrsqrt.pop %v1537
    %v1546 = vrsqrt.pop %v1538
    %v1547 = vrsqrt.pop %v1539
    %v1548 = vrsqrt.pop %v1540
    %v1549 = vrsqrt.pop %v1541
    %v1550 = vrsqrt.pop %v1542
    %v1551 = vrsqrt.pop %v1543
    %v1552 = vmul.f32 %v1488, %v1544
    %v1553 = vmul.f32 %v1489, %v1545
    %v1554 = vmul.f32 %v1490, %v1546
    %v1555 = vmul.f32 %v1491, %v1547
    %v1556 = vmul.f32 %v1492, %v1548
    %v1557 = vmul.f32 %v1493, %v1549
    %v1558 = vmul.f32 %v1494, %v1550
    %v1559 = vmul.f32 %v1495, %v1551
    %v1560 = vlaneseq
    %v1561 = vshrl.u32 %v1560, 7
    %v1562 = vsub.s32 0, %v1561
    %v1563 = vrot.slane %v1454, %v1562
    %v1564 = vmul.f32 %v1552, %v1563
    %v1565 = vmul.f32 %v1553, %v1563
    %v1566 = vmul.f32 %v1554, %v1563
    %v1567 = vmul.f32 %v1555, %v1563
    %v1568 = vmul.f32 %v1556, %v1563
    %v1569 = vmul.f32 %v1557, %v1563
    %v1570 = vmul.f32 %v1558, %v1563
    %v1571 = vmul.f32 %v1559, %v1563
    %v1572 = vlaneseq
    %v1573 = vshrl.u32 %v1572, 7
    %v1574 = vsub.s32 0, %v1573
    %v1575 = vrot.slane %v1455, %v1574
    %v1576 = vadd.f32 %v1564, %v1575
    %v1577 = vadd.f32 %v1565, %v1575
    %v1578 = vadd.f32 %v1566, %v1575
    %v1579 = vadd.f32 %v1567, %v1575
    %v1580 = vadd.f32 %v1568, %v1575
    %v1581 = vadd.f32 %v1569, %v1575
    %v1582 = vadd.f32 %v1570, %v1575
    %v1583 = vadd.f32 %v1571, %v1575
    %v1584 = vmax.f32 %v1576, 0.0
    %v1585 = vmax.f32 %v1577, 0.0
    %v1586 = vmax.f32 %v1578, 0.0
    %v1587 = vmax.f32 %v1579, 0.0
    %v1588 = vmax.f32 %v1580, 0.0
    %v1589 = vmax.f32 %v1581, 0.0
    %v1590 = vmax.f32 %v1582, 0.0
    %v1591 = vmax.f32 %v1583, 0.0
    %v1592 = vadd.f32 %v1584, %v1235
    %v1593 = vadd.f32 %v1585, %v1236
    %v1594 = vadd.f32 %v1586, %v1237
    %v1595 = vadd.f32 %v1587, %v1238
    %v1596 = vadd.f32 %v1588, %v1239
    %v1597 = vadd.f32 %v1589, %v1240
    %v1598 = vadd.f32 %v1590, %v1241
    %v1599 = vadd.f32 %v1591, %v1242
    %v1602 = vrot.slane %v1598, 7
    %v1603 = vrot.slane %v1599, 7
    %v1604 = vsel %vm325, %v1602, %v1603
    %v1607 = vsel %vm325, 0.0, %v1602
    %v1608 = vmul.f32 %v1607, %v167
    %v1609 = vmul.f32 %v1604, %v168
    %v1610 = vld [vmem:[#allocation10 + $0x9] sm:$0x1]
    %v1611 = vlaneseq
    %v1612 = vshrl.u32 %v1611, 7
    %v1613 = vsub.s32 0, %v1612
    %v1614 = vrot.slane %v1610, %v1613
    %v1615 = vmul.f32 %v1614, %v1608
    %v1616 = vmul.f32 %v1614, %v1609
    %v1617 = vmul.f32 %v1614, %v1592
    %v1618 = vmul.f32 %v1614, %v1593
    %v1619 = vmul.f32 %v1614, %v1594
    %v1620 = vmul.f32 %v1614, %v1595
    %v1621 = vmul.f32 %v1614, %v1596
    %v1622 = vmul.f32 %v1614, %v1597
    %v1623 = vld [vmem:[#allocation10 + $0xa] sm:$0x1]
    %v1624 = vlaneseq
    %v1625 = vshrl.u32 %v1624, 7
    %v1626 = vsub.s32 0, %v1625
    %v1627 = vrot.slane %v1623, %v1626
    %v1628 = vmul.f32 %v1627, %v1592
    %v1629 = vmul.f32 %v1627, %v1593
    %v1630 = vmul.f32 %v1627, %v1594
    %v1631 = vmul.f32 %v1627, %v1595
    %v1632 = vmul.f32 %v1627, %v1596
    %v1633 = vmul.f32 %v1627, %v1597
    %v1634 = vmul.f32 %v1627, %v1598
    %v1635 = vmul.f32 %v1627, %v1599
    %v1636 = vadd.f32 %v1615, %v1628
    %v1637 = vadd.f32 %v1616, %v1629
    %v1638 = vadd.f32 %v1617, %v1630
    %v1639 = vadd.f32 %v1618, %v1631
    %v1640 = vadd.f32 %v1619, %v1632
    %v1641 = vadd.f32 %v1620, %v1633
    %v1642 = vadd.f32 %v1621, %v1634
    %v1643 = vadd.f32 %v1622, %v1635
    %v1646 = vrot.slane %v1592, 1
    %v1647 = vrot.slane %v1593, 1
    %v1648 = vsel %vm379, %v1646, %v1647
    %v1651 = vsel %vm379, %v1647, 0.0
    %v1652 = vmul.f32 %v1648, %v179
    %v1653 = vmul.f32 %v1651, %v180
    %v1654 = vld [vmem:[#allocation10 + $0xb] sm:$0x1]
    %v1655 = vlaneseq
    %v1656 = vshrl.u32 %v1655, 7
    %v1657 = vsub.s32 0, %v1656
    %v1658 = vrot.slane %v1654, %v1657
    %v1659 = vmul.f32 %v1658, %v1594
    %v1660 = vmul.f32 %v1658, %v1595
    %v1661 = vmul.f32 %v1658, %v1596
    %v1662 = vmul.f32 %v1658, %v1597
    %v1663 = vmul.f32 %v1658, %v1598
    %v1664 = vmul.f32 %v1658, %v1599
    %v1665 = vmul.f32 %v1658, %v1652
    %v1666 = vmul.f32 %v1658, %v1653
    %v1667 = vadd.f32 %v1636, %v1659
    %v1668 = vadd.f32 %v1637, %v1660
    %v1669 = vadd.f32 %v1638, %v1661
    %v1670 = vadd.f32 %v1639, %v1662
    %v1671 = vadd.f32 %v1640, %v1663
    %v1672 = vadd.f32 %v1641, %v1664
    %v1673 = vadd.f32 %v1642, %v1665
    %v1674 = vadd.f32 %v1643, %v1666
    %v1675 = vld [vmem:[%s6 + $0x3] sm:$0x1]
    %v1676 = vlaneseq
    %v1677 = vshrl.u32 %v1676, 7
    %v1678 = vsub.s32 0, %v1677
    %v1679 = vrot.slane %v1675, %v1678
    %v1680 = vadd.f32 %v1667, %v1679
    %v1681 = vadd.f32 %v1668, %v1679
    %v1682 = vadd.f32 %v1669, %v1679
    %v1683 = vadd.f32 %v1670, %v1679
    %v1684 = vadd.f32 %v1671, %v1679
    %v1685 = vadd.f32 %v1672, %v1679
    %v1686 = vadd.f32 %v1673, %v1679
    %v1687 = vadd.f32 %v1674, %v1679
    %v1688 = vpack.c.bf16 %v1681, %v1680
    %v1689 = vpack.c.bf16 %v1683, %v1682
    %v1690 = vpack.c.bf16 %v1685, %v1684
    %v1691 = vpack.c.bf16 %v1687, %v1686
    %s1692 = scalar_lea.vmem [#allocation11], 48
    %v1693 = vld [vmem:[%s1692] sm:$0xf]
    %v1694 = vld [vmem:[%s1692 + $0x4] sm:$0xf]
    %v1695 = vld [vmem:[%s1692 + $0x8] sm:$0xf]
    %v1696 = vld [vmem:[%s1692 + $0xc] sm:$0xf]
    %v1697 = vld [vmem:[%s8 + $0x3] sm:$0x1]
    %v1698 = vlaneseq
    %v1699 = vshrl.u32 %v1698, 7
    %v1700 = vsub.s32 0, %v1699
    %v1701 = vrot.slane %v1697, %v1700
    %v1706 = vunpack.c.l.b16 %v1693
    %v1707 = vunpack.c.l.b16 %v1694
    %v1708 = vunpack.c.l.b16 %v1695
    %v1709 = vunpack.c.l.b16 %v1696
    %v1710 = vpack.c.b16 %v1707, %v1706
    %v1711 = vpack.c.b16 %v1709, %v1708
    %v1715 = vsel %vm269, %v1688, 0
    %v1718 = vsel %vm269, %v1689, 0
    %v1721 = vsel %vm269, %v1690, 0
    %v1724 = vsel %vm269, %v1691, 0
    %1726 = vmatprep.subr.bf16.mxu0 0
    %1727 = vmatpush1.bf16.msra.mxu0 0
    %1728 = vmatprep.subr.bf16.mxu0 0
    %1729 = vmatpush1.bf16.msra.mxu0 0
    %1730 = vmatprep.subr.bf16.mxu0 0
    %1731 = vmatpush1.bf16.msra.mxu0 0
    %1732 = vmatprep.subr.bf16.mxu0 0
    %1733 = vmatpush1.bf16.msra.mxu0 0
    %1734 = vmatprep.subr.bf16.mxu0 0
    %1735 = vmatpush1.bf16.msra.mxu0 0
    %1736 = vmatprep.subr.bf16.mxu0 0
    %1737 = vmatpush1.bf16.msra.mxu0 0
    %1738 = vmatprep.subr.bf16.mxu0 0
    %1739 = vmatpush1.bf16.msra.mxu0 %v1711
    %1740 = vmatprep.subr.bf16.mxu0 0
    %1741 = vmatpush1.bf16.msra.mxu0 %v1710
    %1742 = vmatprep.subr.bf16.mxu0 0
    %1743 = vmatpush2.bf16.msra.mxu0 0
    %1744 = vmatprep.subr.bf16.mxu0 0
    %1745 = vmatpush2.bf16.msra.mxu0 0
    %1746 = vmatprep.subr.bf16.mxu0 0
    %1747 = vmatpush2.bf16.msra.mxu0 0
    %1748 = vmatprep.subr.bf16.mxu0 0
    %1749 = vmatpush2.bf16.msra.mxu0 0
    %1750 = vmatprep.subr.bf16.mxu0 0
    %1751 = vmatpush2.bf16.msra.mxu0 0
    %1752 = vmatprep.subr.bf16.mxu0 0
    %1753 = vmatpush2.bf16.msra.mxu0 0
    %1754 = vmatprep.subr.bf16.mxu0 0
    %1755 = vmatpush2.bf16.msra.mxu0 0
    %1756 = vmatprep.subr.bf16.mxu0 0
    %1757 = vmatpush2.bf16.msra.mxu0 0
    %1758 = vmatprep.mubr.bf16.mxu0 0
    %1759 = vmatmul.mubr.bf16.gmra.mxu0 %v1715
    %v1760 = vpop.f32.mrf.mxu0
    %v1761 = vadd.f32 %v1701, %v1760
    %v1762 = vpop.f32.mrf.mxu0
    %v1763 = vpop.f32.mrf.mxu0
    %v1764 = vadd.f32 %v1701, %v1763
    %v1765 = vpop.f32.mrf.mxu0
    %1766 = vmatprep.mubr.bf16.mxu0 0
    %1767 = vmatmul.mubr.bf16.gmra.mxu0 %v1718
    %v1768 = vpop.f32.mrf.mxu0
    %v1769 = vadd.f32 %v1701, %v1768
    %v1770 = vpop.f32.mrf.mxu0
    %v1771 = vpop.f32.mrf.mxu0
    %v1772 = vadd.f32 %v1701, %v1771
    %v1773 = vpop.f32.mrf.mxu0
    %1774 = vmatprep.mubr.bf16.mxu0 0
    %1775 = vmatmul.mubr.bf16.gmra.mxu0 %v1721
    %v1776 = vpop.f32.mrf.mxu0
    %v1777 = vadd.f32 %v1701, %v1776
    %v1778 = vpop.f32.mrf.mxu0
    %v1779 = vpop.f32.mrf.mxu0
    %v1780 = vadd.f32 %v1701, %v1779
    %v1781 = vpop.f32.mrf.mxu0
    %1782 = vmatprep.mubr.bf16.mxu0 0
    %1783 = vmatmul.mubr.bf16.gmra.mxu0 %v1724
    %v1784 = vpop.f32.mrf.mxu0
    %v1785 = vadd.f32 %v1701, %v1784
    %v1786 = vpop.f32.mrf.mxu0
    %v1787 = vpop.f32.mrf.mxu0
    %v1788 = vadd.f32 %v1701, %v1787
    %v1789 = vpop.f32.mrf.mxu0
    %1790 = vdwg.mxu0
    %v1791 = vld [vmem:[%s9 + $0x3] sm:$0x1]
    %v1792 = vld [vmem:[%s10 + $0x3] sm:$0x1]
    %v1793 = vsel %vm269, %v1761, 0.0
    %1794 = vadd.xlane.f32.xlu0 %v1793
    %v1795 = vpop.xlane.xlu0 %1794
    %v1796 = vsel %vm269, %v1764, 0.0
    %1797 = vadd.xlane.f32.xlu0 %v1796
    %v1798 = vpop.xlane.xlu0 %1797
    %v1799 = vsel %vm269, %v1769, 0.0
    %1800 = vadd.xlane.f32.xlu0 %v1799
    %v1801 = vpop.xlane.xlu0 %1800
    %v1802 = vsel %vm269, %v1772, 0.0
    %1803 = vadd.xlane.f32.xlu0 %v1802
    %v1804 = vpop.xlane.xlu0 %1803
    %v1805 = vsel %vm269, %v1777, 0.0
    %1806 = vadd.xlane.f32.xlu0 %v1805
    %v1807 = vpop.xlane.xlu0 %1806
    %v1808 = vsel %vm269, %v1780, 0.0
    %1809 = vadd.xlane.f32.xlu0 %v1808
    %v1810 = vpop.xlane.xlu0 %1809
    %v1811 = vsel %vm269, %v1785, 0.0
    %1812 = vadd.xlane.f32.xlu0 %v1811
    %v1813 = vpop.xlane.xlu0 %1812
    %v1814 = vsel %vm269, %v1788, 0.0
    %1815 = vadd.xlane.f32.xlu0 %v1814
    %v1816 = vpop.xlane.xlu0 %1815
    %v1817 = vmul.f32 %v1795, %v749
    %v1818 = vmul.f32 %v1798, %v749
    %v1819 = vmul.f32 %v1801, %v749
    %v1820 = vmul.f32 %v1804, %v749
    %v1821 = vmul.f32 %v1807, %v749
    %v1822 = vmul.f32 %v1810, %v749
    %v1823 = vmul.f32 %v1813, %v749
    %v1824 = vmul.f32 %v1816, %v749
    %v1825 = vsub.f32 %v1761, %v1817
    %v1826 = vsub.f32 %v1764, %v1818
    %v1827 = vsub.f32 %v1769, %v1819
    %v1828 = vsub.f32 %v1772, %v1820
    %v1829 = vsub.f32 %v1777, %v1821
    %v1830 = vsub.f32 %v1780, %v1822
    %v1831 = vsub.f32 %v1785, %v1823
    %v1832 = vsub.f32 %v1788, %v1824
    %v1833 = vmul.f32 %v1825, %v1825
    %v1834 = vmul.f32 %v1826, %v1826
    %v1835 = vmul.f32 %v1827, %v1827
    %v1836 = vmul.f32 %v1828, %v1828
    %v1837 = vmul.f32 %v1829, %v1829
    %v1838 = vmul.f32 %v1830, %v1830
    %v1839 = vmul.f32 %v1831, %v1831
    %v1840 = vmul.f32 %v1832, %v1832
    %v1841 = vsel %vm269, %v1833, 0.0
    %1842 = vadd.xlane.f32.xlu0 %v1841
    %v1843 = vpop.xlane.xlu0 %1842
    %v1844 = vsel %vm269, %v1834, 0.0
    %1845 = vadd.xlane.f32.xlu0 %v1844
    %v1846 = vpop.xlane.xlu0 %1845
    %v1847 = vsel %vm269, %v1835, 0.0
    %1848 = vadd.xlane.f32.xlu0 %v1847
    %v1849 = vpop.xlane.xlu0 %1848
    %v1850 = vsel %vm269, %v1836, 0.0
    %1851 = vadd.xlane.f32.xlu0 %v1850
    %v1852 = vpop.xlane.xlu0 %1851
    %v1853 = vsel %vm269, %v1837, 0.0
    %1854 = vadd.xlane.f32.xlu0 %v1853
    %v1855 = vpop.xlane.xlu0 %1854
    %v1856 = vsel %vm269, %v1838, 0.0
    %1857 = vadd.xlane.f32.xlu0 %v1856
    %v1858 = vpop.xlane.xlu0 %1857
    %v1859 = vsel %vm269, %v1839, 0.0
    %1860 = vadd.xlane.f32.xlu0 %v1859
    %v1861 = vpop.xlane.xlu0 %1860
    %v1862 = vsel %vm269, %v1840, 0.0
    %1863 = vadd.xlane.f32.xlu0 %v1862
    %v1864 = vpop.xlane.xlu0 %1863
    %v1865 = vmul.f32 %v1843, %v749
    %v1866 = vmul.f32 %v1846, %v749
    %v1867 = vmul.f32 %v1849, %v749
    %v1868 = vmul.f32 %v1852, %v749
    %v1869 = vmul.f32 %v1855, %v749
    %v1870 = vmul.f32 %v1858, %v749
    %v1871 = vmul.f32 %v1861, %v749
    %v1872 = vmul.f32 %v1864, %v749
    %v1873 = vadd.f32 %v1865, 1e-05
    %v1874 = vadd.f32 %v1866, 1e-05
    %v1875 = vadd.f32 %v1867, 1e-05
    %v1876 = vadd.f32 %v1868, 1e-05
    %v1877 = vadd.f32 %v1869, 1e-05
    %v1878 = vadd.f32 %v1870, 1e-05
    %v1879 = vadd.f32 %v1871, 1e-05
    %v1880 = vadd.f32 %v1872, 1e-05
    %v1881 = vrsqrt.pop %v1873
    %v1882 = vrsqrt.pop %v1874
    %v1883 = vrsqrt.pop %v1875
    %v1884 = vrsqrt.pop %v1876
    %v1885 = vrsqrt.pop %v1877
    %v1886 = vrsqrt.pop %v1878
    %v1887 = vrsqrt.pop %v1879
    %v1888 = vrsqrt.pop %v1880
    %v1889 = vmul.f32 %v1825, %v1881
    %v1890 = vmul.f32 %v1826, %v1882
    %v1891 = vmul.f32 %v1827, %v1883
    %v1892 = vmul.f32 %v1828, %v1884
    %v1893 = vmul.f32 %v1829, %v1885
    %v1894 = vmul.f32 %v1830, %v1886
    %v1895 = vmul.f32 %v1831, %v1887
    %v1896 = vmul.f32 %v1832, %v1888
    %v1897 = vlaneseq
    %v1898 = vshrl.u32 %v1897, 7
    %v1899 = vsub.s32 0, %v1898
    %v1900 = vrot.slane %v1791, %v1899
    %v1901 = vmul.f32 %v1889, %v1900
    %v1902 = vmul.f32 %v1890, %v1900
    %v1903 = vmul.f32 %v1891, %v1900
    %v1904 = vmul.f32 %v1892, %v1900
    %v1905 = vmul.f32 %v1893, %v1900
    %v1906 = vmul.f32 %v1894, %v1900
    %v1907 = vmul.f32 %v1895, %v1900
    %v1908 = vmul.f32 %v1896, %v1900
    %v1909 = vlaneseq
    %v1910 = vshrl.u32 %v1909, 7
    %v1911 = vsub.s32 0, %v1910
    %v1912 = vrot.slane %v1792, %v1911
    %v1913 = vadd.f32 %v1901, %v1912
    %v1914 = vadd.f32 %v1902, %v1912
    %v1915 = vadd.f32 %v1903, %v1912
    %v1916 = vadd.f32 %v1904, %v1912
    %v1917 = vadd.f32 %v1905, %v1912
    %v1918 = vadd.f32 %v1906, %v1912
    %v1919 = vadd.f32 %v1907, %v1912
    %v1920 = vadd.f32 %v1908, %v1912
    %v1921 = vmax.f32 %v1913, 0.0
    %v1922 = vmax.f32 %v1914, 0.0
    %v1923 = vmax.f32 %v1915, 0.0
    %v1924 = vmax.f32 %v1916, 0.0
    %v1925 = vmax.f32 %v1917, 0.0
    %v1926 = vmax.f32 %v1918, 0.0
    %v1927 = vmax.f32 %v1919, 0.0
    %v1928 = vmax.f32 %v1920, 0.0
    %v1929 = vadd.f32 %v1921, %v1592
    %v1930 = vadd.f32 %v1922, %v1593
    %v1931 = vadd.f32 %v1923, %v1594
    %v1932 = vadd.f32 %v1924, %v1595
    %v1933 = vadd.f32 %v1925, %v1596
    %v1934 = vadd.f32 %v1926, %v1597
    %v1935 = vadd.f32 %v1927, %v1598
    %v1936 = vadd.f32 %v1928, %v1599
    %v1937 = vpack.c.bf16 %v1930, %v1929
    %v1938 = vpack.c.bf16 %v1932, %v1931
    %v1939 = vpack.c.bf16 %v1934, %v1933
    %v1940 = vpack.c.bf16 %v1936, %v1935
    %v1941 = vld [vmem:[%s11] sm:$0xf]
    %v1942 = vld [vmem:[%s11 + $0x4] sm:$0xf]
    %v1943 = vld [vmem:[%s11 + $0x8] sm:$0xf]
    %v1944 = vld [vmem:[%s11 + $0xc] sm:$0xf]
    %v1945 = vld [vmem:[%s12] sm:$0x1]
    %v1947 = vlaneseq
    %v1948 = vshrl.u32 %v1947, 7
    %v1949 = vsub.s32 0, %v1948
    %v1950 = vrot.slane %v1945, %v1949
    %v1956 = vunpack.c.l.b16 %v1941
    %v1957 = vunpack.c.l.b16 %v1942
    %v1958 = vunpack.c.l.b16 %v1943
    %v1959 = vunpack.c.l.b16 %v1944
    %v1960 = vpack.c.b16 %v1957, %v1956
    %v1961 = vpack.c.b16 %v1959, %v1958
    %v1965 = vsel %vm269, %v1937, 0
    %v1968 = vsel %vm269, %v1938, 0
    %v1971 = vsel %vm269, %v1939, 0
    %v1974 = vsel %vm269, %v1940, 0
    %1976 = vmatprep.subr.bf16.mxu0 0
    %1977 = vmatpush1.bf16.msra.mxu0 0
    %1978 = vmatprep.subr.bf16.mxu0 0
    %1979 = vmatpush1.bf16.msra.mxu0 0
    %1980 = vmatprep.subr.bf16.mxu0 0
    %1981 = vmatpush1.bf16.msra.mxu0 0
    %1982 = vmatprep.subr.bf16.mxu0 0
    %1983 = vmatpush1.bf16.msra.mxu0 0
    %1984 = vmatprep.subr.bf16.mxu0 0
    %1985 = vmatpush1.bf16.msra.mxu0 0
    %1986 = vmatprep.subr.bf16.mxu0 0
    %1987 = vmatpush1.bf16.msra.mxu0 0
    %1988 = vmatprep.subr.bf16.mxu0 0
    %1989 = vmatpush1.bf16.msra.mxu0 %v1961
    %1990 = vmatprep.subr.bf16.mxu0 0
    %1991 = vmatpush1.bf16.msra.mxu0 %v1960
    %1992 = vmatprep.subr.bf16.mxu0 0
    %1993 = vmatpush2.bf16.msra.mxu0 0
    %1994 = vmatprep.subr.bf16.mxu0 0
    %1995 = vmatpush2.bf16.msra.mxu0 0
    %1996 = vmatprep.subr.bf16.mxu0 0
    %1997 = vmatpush2.bf16.msra.mxu0 0
    %1998 = vmatprep.subr.bf16.mxu0 0
    %1999 = vmatpush2.bf16.msra.mxu0 0
    %2000 = vmatprep.subr.bf16.mxu0 0
    %2001 = vmatpush2.bf16.msra.mxu0 0
    %2002 = vmatprep.subr.bf16.mxu0 0
    %2003 = vmatpush2.bf16.msra.mxu0 0
    %2004 = vmatprep.subr.bf16.mxu0 0
    %2005 = vmatpush2.bf16.msra.mxu0 0
    %2006 = vmatprep.subr.bf16.mxu0 0
    %2007 = vmatpush2.bf16.msra.mxu0 0
    %2008 = vmatprep.mubr.bf16.mxu0 0
    %2009 = vmatmul.mubr.bf16.gmra.mxu0 %v1965
    %v2010 = vpop.f32.mrf.mxu0
    %v2011 = vadd.f32 %v1950, %v2010
    %v2012 = vpop.f32.mrf.mxu0
    %v2013 = vpop.f32.mrf.mxu0
    %v2014 = vadd.f32 %v1950, %v2013
    %v2015 = vpop.f32.mrf.mxu0
    %2016 = vmatprep.mubr.bf16.mxu0 0
    %2017 = vmatmul.mubr.bf16.gmra.mxu0 %v1968
    %v2018 = vpop.f32.mrf.mxu0
    %v2019 = vadd.f32 %v1950, %v2018
    %v2020 = vpop.f32.mrf.mxu0
    %v2021 = vpop.f32.mrf.mxu0
    %v2022 = vadd.f32 %v1950, %v2021
    %v2023 = vpop.f32.mrf.mxu0
    %2024 = vmatprep.mubr.bf16.mxu0 0
    %2025 = vmatmul.mubr.bf16.gmra.mxu0 %v1971
    %v2026 = vpop.f32.mrf.mxu0
    %v2027 = vadd.f32 %v1950, %v2026
    %v2028 = vpop.f32.mrf.mxu0
    %v2029 = vpop.f32.mrf.mxu0
    %v2030 = vadd.f32 %v1950, %v2029
    %v2031 = vpop.f32.mrf.mxu0
    %2032 = vmatprep.mubr.bf16.mxu0 0
    %2033 = vmatmul.mubr.bf16.gmra.mxu0 %v1974
    %v2034 = vpop.f32.mrf.mxu0
    %v2035 = vadd.f32 %v1950, %v2034
    %v2036 = vpop.f32.mrf.mxu0
    %v2037 = vpop.f32.mrf.mxu0
    %v2038 = vadd.f32 %v1950, %v2037
    %v2039 = vpop.f32.mrf.mxu0
    %2040 = vdwg.mxu0
    %v2041 = vld [vmem:[%s13] sm:$0x1]
    %v2042 = vld [vmem:[%s14] sm:$0x1]
    %vm2043 = vcmask 64512
    %v2044 = vsel %vm2043, %v2011, 0.0
    %2045 = vadd.xlane.f32.xlu0 %v2044
    %v2046 = vpop.xlane.xlu0 %2045
    %v2047 = vsel %vm2043, %v2014, 0.0
    %2048 = vadd.xlane.f32.xlu0 %v2047
    %v2049 = vpop.xlane.xlu0 %2048
    %v2050 = vsel %vm2043, %v2019, 0.0
    %2051 = vadd.xlane.f32.xlu0 %v2050
    %v2052 = vpop.xlane.xlu0 %2051
    %v2053 = vsel %vm2043, %v2022, 0.0
    %2054 = vadd.xlane.f32.xlu0 %v2053
    %v2055 = vpop.xlane.xlu0 %2054
    %v2056 = vsel %vm2043, %v2027, 0.0
    %2057 = vadd.xlane.f32.xlu0 %v2056
    %v2058 = vpop.xlane.xlu0 %2057
    %v2059 = vsel %vm2043, %v2030, 0.0
    %2060 = vadd.xlane.f32.xlu0 %v2059
    %v2061 = vpop.xlane.xlu0 %2060
    %v2062 = vsel %vm2043, %v2035, 0.0
    %2063 = vadd.xlane.f32.xlu0 %v2062
    %v2064 = vpop.xlane.xlu0 %2063
    %v2065 = vsel %vm2043, %v2038, 0.0
    %2066 = vadd.xlane.f32.xlu0 %v2065
    %v2067 = vpop.xlane.xlu0 %2066
    %v2068 = vrcp.pop 8.0
    %v2069 = vmul.f32 %v2046, %v2068
    %v2070 = vmul.f32 %v2049, %v2068
    %v2071 = vmul.f32 %v2052, %v2068
    %v2072 = vmul.f32 %v2055, %v2068
    %v2073 = vmul.f32 %v2058, %v2068
    %v2074 = vmul.f32 %v2061, %v2068
    %v2075 = vmul.f32 %v2064, %v2068
    %v2076 = vmul.f32 %v2067, %v2068
    %v2077 = vsub.f32 %v2011, %v2069
    %v2078 = vsub.f32 %v2014, %v2070
    %v2079 = vsub.f32 %v2019, %v2071
    %v2080 = vsub.f32 %v2022, %v2072
    %v2081 = vsub.f32 %v2027, %v2073
    %v2082 = vsub.f32 %v2030, %v2074
    %v2083 = vsub.f32 %v2035, %v2075
    %v2084 = vsub.f32 %v2038, %v2076
    %v2085 = vmul.f32 %v2077, %v2077
    %v2086 = vmul.f32 %v2078, %v2078
    %v2087 = vmul.f32 %v2079, %v2079
    %v2088 = vmul.f32 %v2080, %v2080
    %v2089 = vmul.f32 %v2081, %v2081
    %v2090 = vmul.f32 %v2082, %v2082
    %v2091 = vmul.f32 %v2083, %v2083
    %v2092 = vmul.f32 %v2084, %v2084
    %v2093 = vsel %vm2043, %v2085, 0.0
    %2094 = vadd.xlane.f32.xlu0 %v2093
    %v2095 = vpop.xlane.xlu0 %2094
    %v2096 = vsel %vm2043, %v2086, 0.0
    %2097 = vadd.xlane.f32.xlu0 %v2096
    %v2098 = vpop.xlane.xlu0 %2097
    %v2099 = vsel %vm2043, %v2087, 0.0
    %2100 = vadd.xlane.f32.xlu0 %v2099
    %v2101 = vpop.xlane.xlu0 %2100
    %v2102 = vsel %vm2043, %v2088, 0.0
    %2103 = vadd.xlane.f32.xlu0 %v2102
    %v2104 = vpop.xlane.xlu0 %2103
    %v2105 = vsel %vm2043, %v2089, 0.0
    %2106 = vadd.xlane.f32.xlu0 %v2105
    %v2107 = vpop.xlane.xlu0 %2106
    %v2108 = vsel %vm2043, %v2090, 0.0
    %2109 = vadd.xlane.f32.xlu0 %v2108
    %v2110 = vpop.xlane.xlu0 %2109
    %v2111 = vsel %vm2043, %v2091, 0.0
    %2112 = vadd.xlane.f32.xlu0 %v2111
    %v2113 = vpop.xlane.xlu0 %2112
    %v2114 = vsel %vm2043, %v2092, 0.0
    %2115 = vadd.xlane.f32.xlu0 %v2114
    %v2116 = vpop.xlane.xlu0 %2115
    %v2117 = vmul.f32 %v2095, %v2068
    %v2118 = vmul.f32 %v2098, %v2068
    %v2119 = vmul.f32 %v2101, %v2068
    %v2120 = vmul.f32 %v2104, %v2068
    %v2121 = vmul.f32 %v2107, %v2068
    %v2122 = vmul.f32 %v2110, %v2068
    %v2123 = vmul.f32 %v2113, %v2068
    %v2124 = vmul.f32 %v2116, %v2068
    %v2125 = vadd.f32 %v2117, 1e-05
    %v2126 = vadd.f32 %v2118, 1e-05
    %v2127 = vadd.f32 %v2119, 1e-05
    %v2128 = vadd.f32 %v2120, 1e-05
    %v2129 = vadd.f32 %v2121, 1e-05
    %v2130 = vadd.f32 %v2122, 1e-05
    %v2131 = vadd.f32 %v2123, 1e-05
    %v2132 = vadd.f32 %v2124, 1e-05
    %v2133 = vrsqrt.pop %v2125
    %v2134 = vrsqrt.pop %v2126
    %v2135 = vrsqrt.pop %v2127
    %v2136 = vrsqrt.pop %v2128
    %v2137 = vrsqrt.pop %v2129
    %v2138 = vrsqrt.pop %v2130
    %v2139 = vrsqrt.pop %v2131
    %v2140 = vrsqrt.pop %v2132
    %v2141 = vmul.f32 %v2077, %v2133
    %v2142 = vmul.f32 %v2078, %v2134
    %v2143 = vmul.f32 %v2079, %v2135
    %v2144 = vmul.f32 %v2080, %v2136
    %v2145 = vmul.f32 %v2081, %v2137
    %v2146 = vmul.f32 %v2082, %v2138
    %v2147 = vmul.f32 %v2083, %v2139
    %v2148 = vmul.f32 %v2084, %v2140
    %v2150 = vlaneseq
    %v2151 = vshrl.u32 %v2150, 7
    %v2152 = vsub.s32 0, %v2151
    %v2153 = vrot.slane %v2041, %v2152
    %v2155 = vmul.f32 %v2141, %v2153
    %v2156 = vmul.f32 %v2142, %v2153
    %v2157 = vmul.f32 %v2143, %v2153
    %v2158 = vmul.f32 %v2144, %v2153
    %v2159 = vmul.f32 %v2145, %v2153
    %v2160 = vmul.f32 %v2146, %v2153
    %v2161 = vmul.f32 %v2147, %v2153
    %v2162 = vmul.f32 %v2148, %v2153
    %v2164 = vlaneseq
    %v2165 = vshrl.u32 %v2164, 7
    %v2166 = vsub.s32 0, %v2165
    %v2167 = vrot.slane %v2042, %v2166
    %v2169 = vadd.f32 %v2155, %v2167
    %v2170 = vadd.f32 %v2156, %v2167
    %v2171 = vadd.f32 %v2157, %v2167
    %v2172 = vadd.f32 %v2158, %v2167
    %v2173 = vadd.f32 %v2159, %v2167
    %v2174 = vadd.f32 %v2160, %v2167
    %v2175 = vadd.f32 %v2161, %v2167
    %v2176 = vadd.f32 %v2162, %v2167
    %2179 = vrot.lane.b32.xlu0 %v2171, 8
    %v2180 = vpop.permute.xlu0 %2179
    %2181 = vrot.lane.b32.xlu0 %v2172, 8
    %v2182 = vpop.permute.xlu0 %2181
    %2187 = vrot.lane.b32.xlu0 %v2173, 16
    %v2188 = vpop.permute.xlu0 %2187
    %2189 = vrot.lane.b32.xlu0 %v2174, 16
    %v2190 = vpop.permute.xlu0 %2189
    %2195 = vrot.lane.b32.xlu0 %v2175, 24
    %v2196 = vpop.permute.xlu0 %2195
    %2197 = vrot.lane.b32.xlu0 %v2176, 24
    %v2198 = vpop.permute.xlu0 %2197
    %v2201 = vsel %vm2043, %v2169, %v2180
    %v2202 = vsel %vm2043, %v2170, %v2182
    %v2203 = vsel %vm199, %v2201, %v2188
    %v2204 = vsel %vm199, %v2202, %v2190
    %vm2205 = vcmask 195584
    %v2206 = vsel %vm2205, %v2203, %v2196
    %v2207 = vsel %vm2205, %v2204, %v2198
    %v2208 = vsel %vm269, %v2206, 0.0
    %v2209 = vsel %vm269, %v2207, 0.0
    %2210 = vst [vmem:[#allocation13] sm:$0xff] %v2208
    %2211 = vst [vmem:[#allocation13 + $0x8] sm:$0xff] %v2209
    // Predicated region
    $region86: #{tpu_custom_call.1} parent=1 // pred_check
      _
    $region87: #{tpu_custom_call.1} parent=1 // pred_check_branch
      %2213 = sbr.rel (0) target = $region89
    $region88: #{tpu_custom_call.1} parent=1 // pred_region
      %s2215 = ssub.s32 256, 256
      %2216 = vsyncadd [#allocation4], %s2215
      %s2217 = sshll.u32 [#allocation13], 4
      %s2218 = int_to_ptr.vmem [resolvable:$true] %s2217
      %2223 = dma.vmem_to_hbm [thread:$0]  %s2218, 256, %s15, [#allocation4], 128, 128, 8
    $region89: #{tpu_custom_call.1} parent=1 // pred_fallthru
      _
    // Predicated region
    $region90: #{tpu_custom_call.1} parent=1 // pred_check
      _
    $region91: #{tpu_custom_call.1} parent=1 // pred_check_branch
      %2225 = sbr.rel (0) target = $region93
    $region92: #{tpu_custom_call.1} parent=1 // pred_region
      %2226 = dma.done [#allocation4], 256
    $region93: #{tpu_custom_call.1} parent=1 // pred_fallthru
      _
    %2227 = vsyncpa [#allocation3], 1
    %2228 = vsyncpa [#allocation6], 1
    %2229 = vsyncpa [#allocation9], 1
    %2230 = vsyncpa [#allocation12], 1
    %2231 = vsyncpa [#allocation4], 1

</llo_original>
